<compile_context>
chip_gen: v7x
topology: tpu7x:2x2x1
jax: 0.10.0
libtpu: 0.0.40
codegen_flags: <defaults>
</compile_context>

<pallas_src>
import functools

import jax
import jax.numpy as jnp
from jax import lax
from jax.experimental import pallas as pl
from jax.experimental.pallas import tpu as pltpu


# =============================================================================
# Fused Pallas kernel
# =============================================================================

def _fused_kernel(wals_ref, src_ref, tgt_ref, h0_ref,
                  mlp_w_ref, mlp_b_ref,
                  enc_wih_ref, enc_whh_ref, enc_b_ref,
                  dec_wih_w_ref, dec_wih_f_ref, dec_whh_ref, dec_b_ref,
                  out_wc_ref, out_wr_ref, out_b_ref,
                  out_ref, attn_ref, hT_ref,
                  ctx_scr, dec_scr,
                  *, S, T, B, H, use_external_h0):
    f32 = jnp.float32

    # ---- WALS MLP (MLP_target_or_both): tanh(x @ W + b) ---------------------
    wals = jnp.tanh(
        jnp.dot(wals_ref[...], mlp_w_ref[...], preferred_element_type=f32)
        + mlp_b_ref[...])                                          # (1, Wdim)

    # ---- Encoder RNN (Elman / tanh) -----------------------------------------
    # Hoisted input projection: one (S*B, E) @ (E, H) matmul before the loop.
    enc_xp = (jnp.dot(src_ref[...], enc_wih_ref[...], preferred_element_type=f32)
              + enc_b_ref[...])                                    # (S*B, H)
    enc_whh = enc_whh_ref[...]
    h = jnp.zeros((B, H), f32)
    for t in range(S):                                             # static unroll
        h = jnp.tanh(enc_xp[t * B:(t + 1) * B, :]
                     + jnp.dot(h, enc_whh, preferred_element_type=f32))
        for b in range(B):                                         # batch-major scratch
            r = b * S + t
            ctx_scr[r:r + 1, :] = h[b:b + 1, :]
    enc_hT = h

    # ---- Decoder RNN: input = concat(tgt_emb, wals) via split weights -------
    wals_proj = jnp.dot(wals, dec_wih_f_ref[...], preferred_element_type=f32)  # (1, H)
    dec_xp = (jnp.dot(tgt_ref[...], dec_wih_w_ref[...], preferred_element_type=f32)
              + wals_proj + dec_b_ref[...])                        # (T*B, H)
    dec_whh = dec_whh_ref[...]
    h = h0_ref[...] if use_external_h0 else enc_hT                 # init_decoder_state
    for t in range(T):                                             # static unroll
        h = jnp.tanh(dec_xp[t * B:(t + 1) * B, :]
                     + jnp.dot(h, dec_whh, preferred_element_type=f32))
        for b in range(B):
            r = b * T + t
            dec_scr[r:r + 1, :] = h[b:b + 1, :]
    hT_ref[...] = h

    # ---- Global dot attention + fused output linear -------------------------
    # tanh(concat([c, rnn_out]) @ W_out + b)  ==  tanh(c @ W_c + rnn_out @ W_r + b)
    out_wc = out_wc_ref[...]
    out_wr = out_wr_ref[...]
    out_b = out_b_ref[...]
    for b in range(B):                                             # B is tiny & static
        d = dec_scr[b * T:(b + 1) * T, :]                          # (T, H)
        cx = ctx_scr[b * S:(b + 1) * S, :]                         # (S, H)
        sc = lax.dot_general(d, cx, (((1,), (1,)), ((), ())),
                             preferred_element_type=f32)           # (T, S)
        m = jnp.max(sc, axis=-1, keepdims=True)
        e = jnp.exp(sc - m)
        p = e * pl.reciprocal(jnp.sum(e, axis=-1, keepdims=True), approx=True)
        c = jnp.dot(p, cx, preferred_element_type=f32)             # (T, H)
        o = jnp.tanh(jnp.dot(c, out_wc, preferred_element_type=f32)
                     + jnp.dot(d, out_wr, preferred_element_type=f32)
                     + out_b)
        attn_ref[b * T:(b + 1) * T, :] = p
        out_ref[b * T:(b + 1) * T, :] = o


def fused_forward(wals_feats, src_emb2d, tgt_emb2d, dec_h0,
                  mlp_w, mlp_b, enc_wih, enc_whh, enc_b,
                  dec_wih_word, dec_wih_wals, dec_whh, dec_b,
                  out_wc, out_wr, out_b,
                  *, S, T, B, H, use_external_h0):
    inputs = (wals_feats, src_emb2d, tgt_emb2d, dec_h0,
              mlp_w, mlp_b, enc_wih, enc_whh, enc_b,
              dec_wih_word, dec_wih_wals, dec_whh, dec_b,
              out_wc, out_wr, out_b)

    def full_spec(arr):
        return pl.BlockSpec(tuple(arr.shape),
                            lambda i, _n=arr.ndim: (0,) * _n)

    return pl.pallas_call(
        functools.partial(_fused_kernel, S=S, T=T, B=B, H=H,
                          use_external_h0=use_external_h0),
        out_shape=(jax.ShapeDtypeStruct((B * T, H), jnp.float32),
                   jax.ShapeDtypeStruct((B * T, S), jnp.float32),
                   jax.ShapeDtypeStruct((B, H), jnp.float32)),
        grid=(1,),
        in_specs=[full_spec(a) for a in inputs],
        out_specs=(pl.BlockSpec((B * T, H), lambda i: (0, 0)),
                   pl.BlockSpec((B * T, S), lambda i: (0, 0)),
                   pl.BlockSpec((B, H), lambda i: (0, 0))),
        scratch_shapes=[pltpu.VMEM((B * S, H), jnp.float32),   # encoder context
                        pltpu.VMEM((B * T, H), jnp.float32)],  # decoder rnn_out
        compiler_params=pltpu.CompilerParams(
            dimension_semantics=("arbitrary",)),
    )(*inputs)


# =============================================================================
# Model configuration (synthetic, deterministic)
# =============================================================================

FEATURE_TYPES = [
    ("Phonology", ["81A", "82A"]),
    ("Morphology", ["26A", "27A", "28A"]),
    ("Syntax", ["143A"]),
]
SIM_LANGS = ["eng", "por"]           # [source, target]
FEATURE_VALUES = {
    "eng": {"81A": 1, "82A": 3, "26A": 0, "27A": 5, "28A": 2, "143A": 4},
    "por": {"81A": 2, "82A": 1, "26A": 6, "27A": 0, "28A": 3, "143A": 7},
}
FEAT_VOCAB, FEAT_EMB = 8, 4
TOTAL_FEAT = FEAT_EMB * sum(len(ft[1]) for ft in FEATURE_TYPES)   # 24
WALS_DIM = 16
SRC_VOCAB, TGT_VOCAB = 20, 20
EMB_SRC, EMB_TGT = 16, 16
HID = 32
S_LEN, T_LEN, BATCH = 8, 8, 2


def init_params(key):
    def nrm(k, shape):
        return 0.1 * jax.random.normal(k, shape, dtype=jnp.float32)

    keys = jax.random.split(key, 16)
    p = {}
    # WALS feature embeddings (one table per feature)
    p["feat_emb"] = {}
    all_feats = [f for _, feats in FEATURE_TYPES for f in feats]
    for i, f in enumerate(all_feats):
        p["feat_emb"][f] = nrm(jax.random.fold_in(keys[0], i),
                               (FEAT_VOCAB, FEAT_EMB))
    # MLP_target_or_both: Linear(TOTAL_FEAT -> WALS_DIM) + tanh
    p["mlp_w"] = nrm(keys[1], (TOTAL_FEAT, WALS_DIM))
    p["mlp_b"] = nrm(keys[2], (WALS_DIM,))
    # word embeddings
    p["src_emb"] = nrm(keys[3], (SRC_VOCAB, EMB_SRC))
    p["tgt_emb"] = nrm(keys[4], (TGT_VOCAB, EMB_TGT))
    # encoder RNN
    p["enc_w_ih"] = nrm(keys[5], (EMB_SRC, HID))
    p["enc_w_hh"] = nrm(keys[6], (HID, HID))
    p["enc_b"] = nrm(keys[7], (HID,))
    # decoder RNN (input = tgt emb + WALS features)
    p["dec_w_ih"] = nrm(keys[8], (EMB_TGT + WALS_DIM, HID))
    p["dec_w_hh"] = nrm(keys[9], (HID, HID))
    p["dec_b"] = nrm(keys[10], (HID,))
    # attention output layer: Linear(2H -> H) + tanh   (concat order [c, rnn_out])
    p["out_w"] = nrm(keys[11], (2 * HID, HID))
    p["out_b"] = nrm(keys[12], (HID,))
    return p


# =============================================================================
# Forward pass (mirrors CombineWalsTargetWords.forward)
# =============================================================================

def combine_wals_target_words_forward(params, src, tgt, lengths,
                                      dec_state=None, flipping=False):
    # --- get_local_features (wals_model == 'WalstoTarget_Target') -----------
    lang_feats = {}
    for lang in SIM_LANGS:
        per_lang = []
        for _, feats in FEATURE_TYPES:
            per_type = []
            for f in feats:
                idx = FEATURE_VALUES[lang][f]
                per_type.append(params["feat_emb"][f][idx].reshape(1, FEAT_EMB))
            per_lang.append(jnp.concatenate(per_type, axis=1))
        lang_feats[lang] = jnp.concatenate(per_lang, axis=1)      # (1, TOTAL_FEAT)

    target_lang = SIM_LANGS[1]
    wals_feats = lang_feats[target_lang]                          # (1, TOTAL_FEAT)
    # TODO(synk): stateful SimulationLanguages flipping only mutates module
    #             state for *later* calls; not carried across calls here.

    # --- tgt = tgt[:-1] ------------------------------------------------------
    tgt_in = tgt[:-1]                                             # (T_dec, B)
    T, B = tgt_in.shape
    S = src.shape[0]

    # TODO(synk): source-length masking in encoder/attention omitted
    #             (all lengths assumed == src_len).
    src_emb = jnp.take(params["src_emb"], src, axis=0).reshape(S * B, EMB_SRC)
    tgt_emb = jnp.take(params["tgt_emb"], tgt_in, axis=0).reshape(T * B, EMB_TGT)

    use_external = dec_state is not None
    dec_h0 = dec_state if use_external else jnp.zeros((B, HID), jnp.float32)

    out2d, attn2d, dec_hidden = fused_forward(
        wals_feats, src_emb, tgt_emb, dec_h0,
        params["mlp_w"], params["mlp_b"].reshape(1, WALS_DIM),
        params["enc_w_ih"], params["enc_w_hh"], params["enc_b"].reshape(1, HID),
        params["dec_w_ih"][:EMB_TGT], params["dec_w_ih"][EMB_TGT:],
        params["dec_w_hh"], params["dec_b"].reshape(1, HID),
        params["out_w"][:HID], params["out_w"][HID:],
        params["out_b"].reshape(1, HID),
        S=S, T=T, B=B, H=HID, use_external_h0=use_external)

    # kernel outputs are batch-major (B*T, feat) slabs -> restore (T, B, feat)
    out = jnp.transpose(out2d.reshape(B, T, HID), (1, 0, 2))      # (T, B, H)
    attn = jnp.transpose(attn2d.reshape(B, T, S), (1, 0, 2))      # (T, B, S)

    attns = {"std": attn}
    return out, attns, dec_hidden


# =============================================================================
# Main
# =============================================================================

if __name__ == "__main__":
    key = jax.random.PRNGKey(0)
    k_param, k_src, k_tgt = jax.random.split(key, 3)

    params = init_params(k_param)
    src = jax.random.randint(k_src, (S_LEN, BATCH), 0, SRC_VOCAB, dtype=jnp.int32)
    tgt = jax.random.randint(k_tgt, (T_LEN, BATCH), 0, TGT_VOCAB, dtype=jnp.int32)
    lengths = jnp.full((BATCH,), S_LEN, dtype=jnp.int32)

    out, attns, dec_state = combine_wals_target_words_forward(
        params, src, tgt, lengths, dec_state=None, flipping=False)

    jax.block_until_ready((out, attns["std"], dec_state))
    assert out.shape == (T_LEN - 1, BATCH, HID)
    assert attns["std"].shape == (T_LEN - 1, BATCH, S_LEN)
    assert dec_state.shape == (BATCH, HID)
    print("KERNEL_OK")
</pallas_src>

<mosaic_0001>
module attributes {stable_mosaic.version = 11 : i64} {
  func.func @_fused_kernel(%arg0: i32, %arg1: memref<1x24xf32, #tpu.memory_space<vmem>>, %arg2: memref<16x16xf32, #tpu.memory_space<vmem>>, %arg3: memref<14x16xf32, #tpu.memory_space<vmem>>, %arg4: memref<2x32xf32, #tpu.memory_space<vmem>>, %arg5: memref<24x16xf32, #tpu.memory_space<vmem>>, %arg6: memref<1x16xf32, #tpu.memory_space<vmem>>, %arg7: memref<16x32xf32, #tpu.memory_space<vmem>>, %arg8: memref<32x32xf32, #tpu.memory_space<vmem>>, %arg9: memref<1x32xf32, #tpu.memory_space<vmem>>, %arg10: memref<16x32xf32, #tpu.memory_space<vmem>>, %arg11: memref<16x32xf32, #tpu.memory_space<vmem>>, %arg12: memref<32x32xf32, #tpu.memory_space<vmem>>, %arg13: memref<1x32xf32, #tpu.memory_space<vmem>>, %arg14: memref<32x32xf32, #tpu.memory_space<vmem>>, %arg15: memref<32x32xf32, #tpu.memory_space<vmem>>, %arg16: memref<1x32xf32, #tpu.memory_space<vmem>>, %arg17: memref<14x32xf32, #tpu.memory_space<vmem>>, %arg18: memref<14x8xf32, #tpu.memory_space<vmem>>, %arg19: memref<2x32xf32, #tpu.memory_space<vmem>>, %arg20: memref<16x32xf32, #tpu.memory_space<vmem>>, %arg21: memref<14x32xf32, #tpu.memory_space<vmem>>) attributes {dimension_semantics = [#tpu.dimension_semantics<arbitrary>], iteration_bounds = array<i64: 1>, scalar_prefetch = 0 : i64, scratch_operands = 2 : i64, tpu.core_type = #tpu.core_type<tc>, window_params = [{pipeline_mode = #tpu.pipeline_mode<synchronous>, transform_indices = @transform_0, window_bounds = array<i64: 1, 24>}, {pipeline_mode = #tpu.pipeline_mode<synchronous>, transform_indices = @transform_1, window_bounds = array<i64: 16, 16>}, {pipeline_mode = #tpu.pipeline_mode<synchronous>, transform_indices = @transform_2, window_bounds = array<i64: 14, 16>}, {pipeline_mode = #tpu.pipeline_mode<synchronous>, transform_indices = @transform_3, window_bounds = array<i64: 2, 32>}, {pipeline_mode = #tpu.pipeline_mode<synchronous>, transform_indices = @transform_4, window_bounds = array<i64: 24, 16>}, {pipeline_mode = #tpu.pipeline_mode<synchronous>, transform_indices = @transform_5, window_bounds = array<i64: 1, 16>}, {pipeline_mode = #tpu.pipeline_mode<synchronous>, transform_indices = @transform_6, window_bounds = array<i64: 16, 32>}, {pipeline_mode = #tpu.pipeline_mode<synchronous>, transform_indices = @transform_7, window_bounds = array<i64: 32, 32>}, {pipeline_mode = #tpu.pipeline_mode<synchronous>, transform_indices = @transform_8, window_bounds = array<i64: 1, 32>}, {pipeline_mode = #tpu.pipeline_mode<synchronous>, transform_indices = @transform_9, window_bounds = array<i64: 16, 32>}, {pipeline_mode = #tpu.pipeline_mode<synchronous>, transform_indices = @transform_10, window_bounds = array<i64: 16, 32>}, {pipeline_mode = #tpu.pipeline_mode<synchronous>, transform_indices = @transform_11, window_bounds = array<i64: 32, 32>}, {pipeline_mode = #tpu.pipeline_mode<synchronous>, transform_indices = @transform_12, window_bounds = array<i64: 1, 32>}, {pipeline_mode = #tpu.pipeline_mode<synchronous>, transform_indices = @transform_13, window_bounds = array<i64: 32, 32>}, {pipeline_mode = #tpu.pipeline_mode<synchronous>, transform_indices = @transform_14, window_bounds = array<i64: 32, 32>}, {pipeline_mode = #tpu.pipeline_mode<synchronous>, transform_indices = @transform_15, window_bounds = array<i64: 1, 32>}, {pipeline_mode = #tpu.pipeline_mode<synchronous>, transform_indices = @transform_16, window_bounds = array<i64: 14, 32>}, {pipeline_mode = #tpu.pipeline_mode<synchronous>, transform_indices = @transform_17, window_bounds = array<i64: 14, 8>}, {pipeline_mode = #tpu.pipeline_mode<synchronous>, transform_indices = @transform_18, window_bounds = array<i64: 2, 32>}]} {
    %c0 = arith.constant 0 : index
    %c0_0 = arith.constant 0 : index
    %0 = vector.load %arg1[%c0, %c0_0] : memref<1x24xf32, #tpu.memory_space<vmem>>, vector<1x24xf32>
    %c0_1 = arith.constant 0 : index
    %c0_2 = arith.constant 0 : index
    %1 = vector.load %arg5[%c0_1, %c0_2] : memref<24x16xf32, #tpu.memory_space<vmem>>, vector<24x16xf32>
    %cst = arith.constant dense<0.000000e+00> : vector<1x16xf32>
    %2 = tpu.matmul %0, %1, %cst {dimension_numbers = #tpu.dot_dimension_numbers<[1], [0], [0], [1], [0, 0, 1, 1], [], []>} : vector<1x24xf32>, vector<24x16xf32>, vector<1x16xf32> -> vector<1x16xf32>
    %c0_3 = arith.constant 0 : index
    %c0_4 = arith.constant 0 : index
    %3 = vector.load %arg6[%c0_3, %c0_4] : memref<1x16xf32, #tpu.memory_space<vmem>>, vector<1x16xf32>
    %4 = arith.addf %2, %3 : vector<1x16xf32>
    %5 = math.tanh %4 : vector<1x16xf32>
    %c0_5 = arith.constant 0 : index
    %c0_6 = arith.constant 0 : index
    %6 = vector.load %arg2[%c0_5, %c0_6] : memref<16x16xf32, #tpu.memory_space<vmem>>, vector<16x16xf32>
    %c0_7 = arith.constant 0 : index
    %c0_8 = arith.constant 0 : index
    %7 = vector.load %arg7[%c0_7, %c0_8] : memref<16x32xf32, #tpu.memory_space<vmem>>, vector<16x32xf32>
    %cst_9 = arith.constant dense<0.000000e+00> : vector<16x32xf32>
    %8 = tpu.matmul %6, %7, %cst_9 {dimension_numbers = #tpu.dot_dimension_numbers<[1], [0], [0], [1], [0, 0, 1, 1], [], []>} : vector<16x16xf32>, vector<16x32xf32>, vector<16x32xf32> -> vector<16x32xf32>
    %c0_10 = arith.constant 0 : index
    %c0_11 = arith.constant 0 : index
    %9 = vector.load %arg9[%c0_10, %c0_11] : memref<1x32xf32, #tpu.memory_space<vmem>>, vector<1x32xf32>
    %10 = vector.broadcast %9 : vector<1x32xf32> to vector<16x32xf32>
    %11 = arith.addf %8, %10 : vector<16x32xf32>
    %c0_12 = arith.constant 0 : index
    %c0_13 = arith.constant 0 : index
    %12 = vector.load %arg8[%c0_12, %c0_13] : memref<32x32xf32, #tpu.memory_space<vmem>>, vector<32x32xf32>
    %cst_14 = arith.constant 0.000000e+00 : f32
    %13 = vector.broadcast %cst_14 : f32 to vector<2x32xf32>
    %14 = vector.extract_strided_slice %11 {offsets = [0, 0], sizes = [2, 32], strides = [1, 1]} : vector<16x32xf32> to vector<2x32xf32>
    %cst_15 = arith.constant dense<0.000000e+00> : vector<2x32xf32>
    %15 = tpu.matmul %13, %12, %cst_15 {dimension_numbers = #tpu.dot_dimension_numbers<[1], [0], [0], [1], [0, 0, 1, 1], [], []>} : vector<2x32xf32>, vector<32x32xf32>, vector<2x32xf32> -> vector<2x32xf32>
    %16 = arith.addf %14, %15 : vector<2x32xf32>
    %17 = math.tanh %16 : vector<2x32xf32>
    %18 = vector.extract_strided_slice %17 {offsets = [0, 0], sizes = [1, 32], strides = [1, 1]} : vector<2x32xf32> to vector<1x32xf32>
    %c0_16 = arith.constant 0 : index
    %c0_17 = arith.constant 0 : index
    %19 = vector.load %arg20[%c0_16, %c0_17] : memref<16x32xf32, #tpu.memory_space<vmem>>, vector<1x32xf32>
    tpu.vector_store %arg20[%c0_16, %c0_17], %18 {strides = array<i32>} : memref<16x32xf32, #tpu.memory_space<vmem>>, vector<1x32xf32>,
    %20 = vector.extract_strided_slice %17 {offsets = [1, 0], sizes = [1, 32], strides = [1, 1]} : vector<2x32xf32> to vector<1x32xf32>
    %c8 = arith.constant 8 : index
    %c0_18 = arith.constant 0 : index
    %21 = vector.load %arg20[%c8, %c0_18] : memref<16x32xf32, #tpu.memory_space<vmem>>, vector<1x32xf32>
    tpu.vector_store %arg20[%c8, %c0_18], %20 {strides = array<i32>} : memref<16x32xf32, #tpu.memory_space<vmem>>, vector<1x32xf32>,
    %22 = vector.extract_strided_slice %11 {offsets = [2, 0], sizes = [2, 32], strides = [1, 1]} : vector<16x32xf32> to vector<2x32xf32>
    %cst_19 = arith.constant dense<0.000000e+00> : vector<2x32xf32>
    %23 = tpu.matmul %17, %12, %cst_19 {dimension_numbers = #tpu.dot_dimension_numbers<[1], [0], [0], [1], [0, 0, 1, 1], [], []>} : vector<2x32xf32>, vector<32x32xf32>, vector<2x32xf32> -> vector<2x32xf32>
    %24 = arith.addf %22, %23 : vector<2x32xf32>
    %25 = math.tanh %24 : vector<2x32xf32>
    %26 = vector.extract_strided_slice %25 {offsets = [0, 0], sizes = [1, 32], strides = [1, 1]} : vector<2x32xf32> to vector<1x32xf32>
    %c1 = arith.constant 1 : index
    %c0_20 = arith.constant 0 : index
    %27 = vector.load %arg20[%c1, %c0_20] : memref<16x32xf32, #tpu.memory_space<vmem>>, vector<1x32xf32>
    tpu.vector_store %arg20[%c1, %c0_20], %26 {strides = array<i32>} : memref<16x32xf32, #tpu.memory_space<vmem>>, vector<1x32xf32>,
    %28 = vector.extract_strided_slice %25 {offsets = [1, 0], sizes = [1, 32], strides = [1, 1]} : vector<2x32xf32> to vector<1x32xf32>
    %c9 = arith.constant 9 : index
    %c0_21 = arith.constant 0 : index
    %29 = vector.load %arg20[%c9, %c0_21] : memref<16x32xf32, #tpu.memory_space<vmem>>, vector<1x32xf32>
    tpu.vector_store %arg20[%c9, %c0_21], %28 {strides = array<i32>} : memref<16x32xf32, #tpu.memory_space<vmem>>, vector<1x32xf32>,
    %30 = vector.extract_strided_slice %11 {offsets = [4, 0], sizes = [2, 32], strides = [1, 1]} : vector<16x32xf32> to vector<2x32xf32>
    %cst_22 = arith.constant dense<0.000000e+00> : vector<2x32xf32>
    %31 = tpu.matmul %25, %12, %cst_22 {dimension_numbers = #tpu.dot_dimension_numbers<[1], [0], [0], [1], [0, 0, 1, 1], [], []>} : vector<2x32xf32>, vector<32x32xf32>, vector<2x32xf32> -> vector<2x32xf32>
    %32 = arith.addf %30, %31 : vector<2x32xf32>
    %33 = math.tanh %32 : vector<2x32xf32>
    %34 = vector.extract_strided_slice %33 {offsets = [0, 0], sizes = [1, 32], strides = [1, 1]} : vector<2x32xf32> to vector<1x32xf32>
    %c2 = arith.constant 2 : index
    %c0_23 = arith.constant 0 : index
    %35 = vector.load %arg20[%c2, %c0_23] : memref<16x32xf32, #tpu.memory_space<vmem>>, vector<1x32xf32>
    tpu.vector_store %arg20[%c2, %c0_23], %34 {strides = array<i32>} : memref<16x32xf32, #tpu.memory_space<vmem>>, vector<1x32xf32>,
    %36 = vector.extract_strided_slice %33 {offsets = [1, 0], sizes = [1, 32], strides = [1, 1]} : vector<2x32xf32> to vector<1x32xf32>
    %c10 = arith.constant 10 : index
    %c0_24 = arith.constant 0 : index
    %37 = vector.load %arg20[%c10, %c0_24] : memref<16x32xf32, #tpu.memory_space<vmem>>, vector<1x32xf32>
    tpu.vector_store %arg20[%c10, %c0_24], %36 {strides = array<i32>} : memref<16x32xf32, #tpu.memory_space<vmem>>, vector<1x32xf32>,
    %38 = vector.extract_strided_slice %11 {offsets = [6, 0], sizes = [2, 32], strides = [1, 1]} : vector<16x32xf32> to vector<2x32xf32>
    %cst_25 = arith.constant dense<0.000000e+00> : vector<2x32xf32>
    %39 = tpu.matmul %33, %12, %cst_25 {dimension_numbers = #tpu.dot_dimension_numbers<[1], [0], [0], [1], [0, 0, 1, 1], [], []>} : vector<2x32xf32>, vector<32x32xf32>, vector<2x32xf32> -> vector<2x32xf32>
    %40 = arith.addf %38, %39 : vector<2x32xf32>
    %41 = math.tanh %40 : vector<2x32xf32>
    %42 = vector.extract_strided_slice %41 {offsets = [0, 0], sizes = [1, 32], strides = [1, 1]} : vector<2x32xf32> to vector<1x32xf32>
    %c3 = arith.constant 3 : index
    %c0_26 = arith.constant 0 : index
    %43 = vector.load %arg20[%c3, %c0_26] : memref<16x32xf32, #tpu.memory_space<vmem>>, vector<1x32xf32>
    tpu.vector_store %arg20[%c3, %c0_26], %42 {strides = array<i32>} : memref<16x32xf32, #tpu.memory_space<vmem>>, vector<1x32xf32>,
    %44 = vector.extract_strided_slice %41 {offsets = [1, 0], sizes = [1, 32], strides = [1, 1]} : vector<2x32xf32> to vector<1x32xf32>
    %c11 = arith.constant 11 : index
    %c0_27 = arith.constant 0 : index
    %45 = vector.load %arg20[%c11, %c0_27] : memref<16x32xf32, #tpu.memory_space<vmem>>, vector<1x32xf32>
    tpu.vector_store %arg20[%c11, %c0_27], %44 {strides = array<i32>} : memref<16x32xf32, #tpu.memory_space<vmem>>, vector<1x32xf32>,
    %46 = vector.extract_strided_slice %11 {offsets = [8, 0], sizes = [2, 32], strides = [1, 1]} : vector<16x32xf32> to vector<2x32xf32>
    %cst_28 = arith.constant dense<0.000000e+00> : vector<2x32xf32>
    %47 = tpu.matmul %41, %12, %cst_28 {dimension_numbers = #tpu.dot_dimension_numbers<[1], [0], [0], [1], [0, 0, 1, 1], [], []>} : vector<2x32xf32>, vector<32x32xf32>, vector<2x32xf32> -> vector<2x32xf32>
    %48 = arith.addf %46, %47 : vector<2x32xf32>
    %49 = math.tanh %48 : vector<2x32xf32>
    %50 = vector.extract_strided_slice %49 {offsets = [0, 0], sizes = [1, 32], strides = [1, 1]} : vector<2x32xf32> to vector<1x32xf32>
    %c4 = arith.constant 4 : index
    %c0_29 = arith.constant 0 : index
    %51 = vector.load %arg20[%c4, %c0_29] : memref<16x32xf32, #tpu.memory_space<vmem>>, vector<1x32xf32>
    tpu.vector_store %arg20[%c4, %c0_29], %50 {strides = array<i32>} : memref<16x32xf32, #tpu.memory_space<vmem>>, vector<1x32xf32>,
    %52 = vector.extract_strided_slice %49 {offsets = [1, 0], sizes = [1, 32], strides = [1, 1]} : vector<2x32xf32> to vector<1x32xf32>
    %c12 = arith.constant 12 : index
    %c0_30 = arith.constant 0 : index
    %53 = vector.load %arg20[%c12, %c0_30] : memref<16x32xf32, #tpu.memory_space<vmem>>, vector<1x32xf32>
    tpu.vector_store %arg20[%c12, %c0_30], %52 {strides = array<i32>} : memref<16x32xf32, #tpu.memory_space<vmem>>, vector<1x32xf32>,
    %54 = vector.extract_strided_slice %11 {offsets = [10, 0], sizes = [2, 32], strides = [1, 1]} : vector<16x32xf32> to vector<2x32xf32>
    %cst_31 = arith.constant dense<0.000000e+00> : vector<2x32xf32>
    %55 = tpu.matmul %49, %12, %cst_31 {dimension_numbers = #tpu.dot_dimension_numbers<[1], [0], [0], [1], [0, 0, 1, 1], [], []>} : vector<2x32xf32>, vector<32x32xf32>, vector<2x32xf32> -> vector<2x32xf32>
    %56 = arith.addf %54, %55 : vector<2x32xf32>
    %57 = math.tanh %56 : vector<2x32xf32>
    %58 = vector.extract_strided_slice %57 {offsets = [0, 0], sizes = [1, 32], strides = [1, 1]} : vector<2x32xf32> to vector<1x32xf32>
    %c5 = arith.constant 5 : index
    %c0_32 = arith.constant 0 : index
    %59 = vector.load %arg20[%c5, %c0_32] : memref<16x32xf32, #tpu.memory_space<vmem>>, vector<1x32xf32>
    tpu.vector_store %arg20[%c5, %c0_32], %58 {strides = array<i32>} : memref<16x32xf32, #tpu.memory_space<vmem>>, vector<1x32xf32>,
    %60 = vector.extract_strided_slice %57 {offsets = [1, 0], sizes = [1, 32], strides = [1, 1]} : vector<2x32xf32> to vector<1x32xf32>
    %c13 = arith.constant 13 : index
    %c0_33 = arith.constant 0 : index
    %61 = vector.load %arg20[%c13, %c0_33] : memref<16x32xf32, #tpu.memory_space<vmem>>, vector<1x32xf32>
    tpu.vector_store %arg20[%c13, %c0_33], %60 {strides = array<i32>} : memref<16x32xf32, #tpu.memory_space<vmem>>, vector<1x32xf32>,
    %62 = vector.extract_strided_slice %11 {offsets = [12, 0], sizes = [2, 32], strides = [1, 1]} : vector<16x32xf32> to vector<2x32xf32>
    %cst_34 = arith.constant dense<0.000000e+00> : vector<2x32xf32>
    %63 = tpu.matmul %57, %12, %cst_34 {dimension_numbers = #tpu.dot_dimension_numbers<[1], [0], [0], [1], [0, 0, 1, 1], [], []>} : vector<2x32xf32>, vector<32x32xf32>, vector<2x32xf32> -> vector<2x32xf32>
    %64 = arith.addf %62, %63 : vector<2x32xf32>
    %65 = math.tanh %64 : vector<2x32xf32>
    %66 = vector.extract_strided_slice %65 {offsets = [0, 0], sizes = [1, 32], strides = [1, 1]} : vector<2x32xf32> to vector<1x32xf32>
    %c6 = arith.constant 6 : index
    %c0_35 = arith.constant 0 : index
    %67 = vector.load %arg20[%c6, %c0_35] : memref<16x32xf32, #tpu.memory_space<vmem>>, vector<1x32xf32>
    tpu.vector_store %arg20[%c6, %c0_35], %66 {strides = array<i32>} : memref<16x32xf32, #tpu.memory_space<vmem>>, vector<1x32xf32>,
    %68 = vector.extract_strided_slice %65 {offsets = [1, 0], sizes = [1, 32], strides = [1, 1]} : vector<2x32xf32> to vector<1x32xf32>
    %c14 = arith.constant 14 : index
    %c0_36 = arith.constant 0 : index
    %69 = vector.load %arg20[%c14, %c0_36] : memref<16x32xf32, #tpu.memory_space<vmem>>, vector<1x32xf32>
    tpu.vector_store %arg20[%c14, %c0_36], %68 {strides = array<i32>} : memref<16x32xf32, #tpu.memory_space<vmem>>, vector<1x32xf32>,
    %70 = vector.extract_strided_slice %11 {offsets = [14, 0], sizes = [2, 32], strides = [1, 1]} : vector<16x32xf32> to vector<2x32xf32>
    %cst_37 = arith.constant dense<0.000000e+00> : vector<2x32xf32>
    %71 = tpu.matmul %65, %12, %cst_37 {dimension_numbers = #tpu.dot_dimension_numbers<[1], [0], [0], [1], [0, 0, 1, 1], [], []>} : vector<2x32xf32>, vector<32x32xf32>, vector<2x32xf32> -> vector<2x32xf32>
    %72 = arith.addf %70, %71 : vector<2x32xf32>
    %73 = math.tanh %72 : vector<2x32xf32>
    %74 = vector.extract_strided_slice %73 {offsets = [0, 0], sizes = [1, 32], strides = [1, 1]} : vector<2x32xf32> to vector<1x32xf32>
    %c7 = arith.constant 7 : index
    %c0_38 = arith.constant 0 : index
    %75 = vector.load %arg20[%c7, %c0_38] : memref<16x32xf32, #tpu.memory_space<vmem>>, vector<1x32xf32>
    tpu.vector_store %arg20[%c7, %c0_38], %74 {strides = array<i32>} : memref<16x32xf32, #tpu.memory_space<vmem>>, vector<1x32xf32>,
    %76 = vector.extract_strided_slice %73 {offsets = [1, 0], sizes = [1, 32], strides = [1, 1]} : vector<2x32xf32> to vector<1x32xf32>
    %c15 = arith.constant 15 : index
    %c0_39 = arith.constant 0 : index
    %77 = vector.load %arg20[%c15, %c0_39] : memref<16x32xf32, #tpu.memory_space<vmem>>, vector<1x32xf32>
    tpu.vector_store %arg20[%c15, %c0_39], %76 {strides = array<i32>} : memref<16x32xf32, #tpu.memory_space<vmem>>, vector<1x32xf32>,
    %c0_40 = arith.constant 0 : index
    %c0_41 = arith.constant 0 : index
    %78 = vector.load %arg11[%c0_40, %c0_41] : memref<16x32xf32, #tpu.memory_space<vmem>>, vector<16x32xf32>
    %cst_42 = arith.constant dense<0.000000e+00> : vector<1x32xf32>
    %79 = tpu.matmul %5, %78, %cst_42 {dimension_numbers = #tpu.dot_dimension_numbers<[1], [0], [0], [1], [0, 0, 1, 1], [], []>} : vector<1x16xf32>, vector<16x32xf32>, vector<1x32xf32> -> vector<1x32xf32>
    %c0_43 = arith.constant 0 : index
    %c0_44 = arith.constant 0 : index
    %80 = vector.load %arg3[%c0_43, %c0_44] : memref<14x16xf32, #tpu.memory_space<vmem>>, vector<14x16xf32>
    %c0_45 = arith.constant 0 : index
    %c0_46 = arith.constant 0 : index
    %81 = vector.load %arg10[%c0_45, %c0_46] : memref<16x32xf32, #tpu.memory_space<vmem>>, vector<16x32xf32>
    %cst_47 = arith.constant dense<0.000000e+00> : vector<14x32xf32>
    %82 = tpu.matmul %80, %81, %cst_47 {dimension_numbers = #tpu.dot_dimension_numbers<[1], [0], [0], [1], [0, 0, 1, 1], [], []>} : vector<14x16xf32>, vector<16x32xf32>, vector<14x32xf32> -> vector<14x32xf32>
    %83 = vector.broadcast %79 : vector<1x32xf32> to vector<14x32xf32>
    %84 = arith.addf %82, %83 : vector<14x32xf32>
    %c0_48 = arith.constant 0 : index
    %c0_49 = arith.constant 0 : index
    %85 = vector.load %arg13[%c0_48, %c0_49] : memref<1x32xf32, #tpu.memory_space<vmem>>, vector<1x32xf32>
    %86 = vector.broadcast %85 : vector<1x32xf32> to vector<14x32xf32>
    %87 = arith.addf %84, %86 : vector<14x32xf32>
    %c0_50 = arith.constant 0 : index
    %c0_51 = arith.constant 0 : index
    %88 = vector.load %arg12[%c0_50, %c0_51] : memref<32x32xf32, #tpu.memory_space<vmem>>, vector<32x32xf32>
    %89 = vector.extract_strided_slice %87 {offsets = [0, 0], sizes = [2, 32], strides = [1, 1]} : vector<14x32xf32> to vector<2x32xf32>
    %cst_52 = arith.constant dense<0.000000e+00> : vector<2x32xf32>
    %90 = tpu.matmul %73, %88, %cst_52 {dimension_numbers = #tpu.dot_dimension_numbers<[1], [0], [0], [1], [0, 0, 1, 1], [], []>} : vector<2x32xf32>, vector<32x32xf32>, vector<2x32xf32> -> vector<2x32xf32>
    %91 = arith.addf %89, %90 : vector<2x32xf32>
    %92 = math.tanh %91 : vector<2x32xf32>
    %93 = vector.extract_strided_slice %92 {offsets = [0, 0], sizes = [1, 32], strides = [1, 1]} : vector<2x32xf32> to vector<1x32xf32>
    %c0_53 = arith.constant 0 : index
    %c0_54 = arith.constant 0 : index
    %94 = vector.load %arg21[%c0_53, %c0_54] : memref<14x32xf32, #tpu.memory_space<vmem>>, vector<1x32xf32>
    tpu.vector_store %arg21[%c0_53, %c0_54], %93 {strides = array<i32>} : memref<14x32xf32, #tpu.memory_space<vmem>>, vector<1x32xf32>,
    %95 = vector.extract_strided_slice %92 {offsets = [1, 0], sizes = [1, 32], strides = [1, 1]} : vector<2x32xf32> to vector<1x32xf32>
    %c7_55 = arith.constant 7 : index
    %c0_56 = arith.constant 0 : index
    %96 = vector.load %arg21[%c7_55, %c0_56] : memref<14x32xf32, #tpu.memory_space<vmem>>, vector<1x32xf32>
    tpu.vector_store %arg21[%c7_55, %c0_56], %95 {strides = array<i32>} : memref<14x32xf32, #tpu.memory_space<vmem>>, vector<1x32xf32>,
    %97 = vector.extract_strided_slice %87 {offsets = [2, 0], sizes = [2, 32], strides = [1, 1]} : vector<14x32xf32> to vector<2x32xf32>
    %cst_57 = arith.constant dense<0.000000e+00> : vector<2x32xf32>
    %98 = tpu.matmul %92, %88, %cst_57 {dimension_numbers = #tpu.dot_dimension_numbers<[1], [0], [0], [1], [0, 0, 1, 1], [], []>} : vector<2x32xf32>, vector<32x32xf32>, vector<2x32xf32> -> vector<2x32xf32>
    %99 = arith.addf %97, %98 : vector<2x32xf32>
    %100 = math.tanh %99 : vector<2x32xf32>
    %101 = vector.extract_strided_slice %100 {offsets = [0, 0], sizes = [1, 32], strides = [1, 1]} : vector<2x32xf32> to vector<1x32xf32>
    %c1_58 = arith.constant 1 : index
    %c0_59 = arith.constant 0 : index
    %102 = vector.load %arg21[%c1_58, %c0_59] : memref<14x32xf32, #tpu.memory_space<vmem>>, vector<1x32xf32>
    tpu.vector_store %arg21[%c1_58, %c0_59], %101 {strides = array<i32>} : memref<14x32xf32, #tpu.memory_space<vmem>>, vector<1x32xf32>,
    %103 = vector.extract_strided_slice %100 {offsets = [1, 0], sizes = [1, 32], strides = [1, 1]} : vector<2x32xf32> to vector<1x32xf32>
    %c8_60 = arith.constant 8 : index
    %c0_61 = arith.constant 0 : index
    %104 = vector.load %arg21[%c8_60, %c0_61] : memref<14x32xf32, #tpu.memory_space<vmem>>, vector<1x32xf32>
    tpu.vector_store %arg21[%c8_60, %c0_61], %103 {strides = array<i32>} : memref<14x32xf32, #tpu.memory_space<vmem>>, vector<1x32xf32>,
    %105 = vector.extract_strided_slice %87 {offsets = [4, 0], sizes = [2, 32], strides = [1, 1]} : vector<14x32xf32> to vector<2x32xf32>
    %cst_62 = arith.constant dense<0.000000e+00> : vector<2x32xf32>
    %106 = tpu.matmul %100, %88, %cst_62 {dimension_numbers = #tpu.dot_dimension_numbers<[1], [0], [0], [1], [0, 0, 1, 1], [], []>} : vector<2x32xf32>, vector<32x32xf32>, vector<2x32xf32> -> vector<2x32xf32>
    %107 = arith.addf %105, %106 : vector<2x32xf32>
    %108 = math.tanh %107 : vector<2x32xf32>
    %109 = vector.extract_strided_slice %108 {offsets = [0, 0], sizes = [1, 32], strides = [1, 1]} : vector<2x32xf32> to vector<1x32xf32>
    %c2_63 = arith.constant 2 : index
    %c0_64 = arith.constant 0 : index
    %110 = vector.load %arg21[%c2_63, %c0_64] : memref<14x32xf32, #tpu.memory_space<vmem>>, vector<1x32xf32>
    tpu.vector_store %arg21[%c2_63, %c0_64], %109 {strides = array<i32>} : memref<14x32xf32, #tpu.memory_space<vmem>>, vector<1x32xf32>,
    %111 = vector.extract_strided_slice %108 {offsets = [1, 0], sizes = [1, 32], strides = [1, 1]} : vector<2x32xf32> to vector<1x32xf32>
    %c9_65 = arith.constant 9 : index
    %c0_66 = arith.constant 0 : index
    %112 = vector.load %arg21[%c9_65, %c0_66] : memref<14x32xf32, #tpu.memory_space<vmem>>, vector<1x32xf32>
    tpu.vector_store %arg21[%c9_65, %c0_66], %111 {strides = array<i32>} : memref<14x32xf32, #tpu.memory_space<vmem>>, vector<1x32xf32>,
    %113 = vector.extract_strided_slice %87 {offsets = [6, 0], sizes = [2, 32], strides = [1, 1]} : vector<14x32xf32> to vector<2x32xf32>
    %cst_67 = arith.constant dense<0.000000e+00> : vector<2x32xf32>
    %114 = tpu.matmul %108, %88, %cst_67 {dimension_numbers = #tpu.dot_dimension_numbers<[1], [0], [0], [1], [0, 0, 1, 1], [], []>} : vector<2x32xf32>, vector<32x32xf32>, vector<2x32xf32> -> vector<2x32xf32>
    %115 = arith.addf %113, %114 : vector<2x32xf32>
    %116 = math.tanh %115 : vector<2x32xf32>
    %117 = vector.extract_strided_slice %116 {offsets = [0, 0], sizes = [1, 32], strides = [1, 1]} : vector<2x32xf32> to vector<1x32xf32>
    %c3_68 = arith.constant 3 : index
    %c0_69 = arith.constant 0 : index
    %118 = vector.load %arg21[%c3_68, %c0_69] : memref<14x32xf32, #tpu.memory_space<vmem>>, vector<1x32xf32>
    tpu.vector_store %arg21[%c3_68, %c0_69], %117 {strides = array<i32>} : memref<14x32xf32, #tpu.memory_space<vmem>>, vector<1x32xf32>,
    %119 = vector.extract_strided_slice %116 {offsets = [1, 0], sizes = [1, 32], strides = [1, 1]} : vector<2x32xf32> to vector<1x32xf32>
    %c10_70 = arith.constant 10 : index
    %c0_71 = arith.constant 0 : index
    %120 = vector.load %arg21[%c10_70, %c0_71] : memref<14x32xf32, #tpu.memory_space<vmem>>, vector<1x32xf32>
    tpu.vector_store %arg21[%c10_70, %c0_71], %119 {strides = array<i32>} : memref<14x32xf32, #tpu.memory_space<vmem>>, vector<1x32xf32>,
    %121 = vector.extract_strided_slice %87 {offsets = [8, 0], sizes = [2, 32], strides = [1, 1]} : vector<14x32xf32> to vector<2x32xf32>
    %cst_72 = arith.constant dense<0.000000e+00> : vector<2x32xf32>
    %122 = tpu.matmul %116, %88, %cst_72 {dimension_numbers = #tpu.dot_dimension_numbers<[1], [0], [0], [1], [0, 0, 1, 1], [], []>} : vector<2x32xf32>, vector<32x32xf32>, vector<2x32xf32> -> vector<2x32xf32>
    %123 = arith.addf %121, %122 : vector<2x32xf32>
    %124 = math.tanh %123 : vector<2x32xf32>
    %125 = vector.extract_strided_slice %124 {offsets = [0, 0], sizes = [1, 32], strides = [1, 1]} : vector<2x32xf32> to vector<1x32xf32>
    %c4_73 = arith.constant 4 : index
    %c0_74 = arith.constant 0 : index
    %126 = vector.load %arg21[%c4_73, %c0_74] : memref<14x32xf32, #tpu.memory_space<vmem>>, vector<1x32xf32>
    tpu.vector_store %arg21[%c4_73, %c0_74], %125 {strides = array<i32>} : memref<14x32xf32, #tpu.memory_space<vmem>>, vector<1x32xf32>,
    %127 = vector.extract_strided_slice %124 {offsets = [1, 0], sizes = [1, 32], strides = [1, 1]} : vector<2x32xf32> to vector<1x32xf32>
    %c11_75 = arith.constant 11 : index
    %c0_76 = arith.constant 0 : index
    %128 = vector.load %arg21[%c11_75, %c0_76] : memref<14x32xf32, #tpu.memory_space<vmem>>, vector<1x32xf32>
    tpu.vector_store %arg21[%c11_75, %c0_76], %127 {strides = array<i32>} : memref<14x32xf32, #tpu.memory_space<vmem>>, vector<1x32xf32>,
    %129 = vector.extract_strided_slice %87 {offsets = [10, 0], sizes = [2, 32], strides = [1, 1]} : vector<14x32xf32> to vector<2x32xf32>
    %cst_77 = arith.constant dense<0.000000e+00> : vector<2x32xf32>
    %130 = tpu.matmul %124, %88, %cst_77 {dimension_numbers = #tpu.dot_dimension_numbers<[1], [0], [0], [1], [0, 0, 1, 1], [], []>} : vector<2x32xf32>, vector<32x32xf32>, vector<2x32xf32> -> vector<2x32xf32>
    %131 = arith.addf %129, %130 : vector<2x32xf32>
    %132 = math.tanh %131 : vector<2x32xf32>
    %133 = vector.extract_strided_slice %132 {offsets = [0, 0], sizes = [1, 32], strides = [1, 1]} : vector<2x32xf32> to vector<1x32xf32>
    %c5_78 = arith.constant 5 : index
    %c0_79 = arith.constant 0 : index
    %134 = vector.load %arg21[%c5_78, %c0_79] : memref<14x32xf32, #tpu.memory_space<vmem>>, vector<1x32xf32>
    tpu.vector_store %arg21[%c5_78, %c0_79], %133 {strides = array<i32>} : memref<14x32xf32, #tpu.memory_space<vmem>>, vector<1x32xf32>,
    %135 = vector.extract_strided_slice %132 {offsets = [1, 0], sizes = [1, 32], strides = [1, 1]} : vector<2x32xf32> to vector<1x32xf32>
    %c12_80 = arith.constant 12 : index
    %c0_81 = arith.constant 0 : index
    %136 = vector.load %arg21[%c12_80, %c0_81] : memref<14x32xf32, #tpu.memory_space<vmem>>, vector<1x32xf32>
    tpu.vector_store %arg21[%c12_80, %c0_81], %135 {strides = array<i32>} : memref<14x32xf32, #tpu.memory_space<vmem>>, vector<1x32xf32>,
    %137 = vector.extract_strided_slice %87 {offsets = [12, 0], sizes = [2, 32], strides = [1, 1]} : vector<14x32xf32> to vector<2x32xf32>
    %cst_82 = arith.constant dense<0.000000e+00> : vector<2x32xf32>
    %138 = tpu.matmul %132, %88, %cst_82 {dimension_numbers = #tpu.dot_dimension_numbers<[1], [0], [0], [1], [0, 0, 1, 1], [], []>} : vector<2x32xf32>, vector<32x32xf32>, vector<2x32xf32> -> vector<2x32xf32>
    %139 = arith.addf %137, %138 : vector<2x32xf32>
    %140 = math.tanh %139 : vector<2x32xf32>
    %141 = vector.extract_strided_slice %140 {offsets = [0, 0], sizes = [1, 32], strides = [1, 1]} : vector<2x32xf32> to vector<1x32xf32>
    %c6_83 = arith.constant 6 : index
    %c0_84 = arith.constant 0 : index
    %142 = vector.load %arg21[%c6_83, %c0_84] : memref<14x32xf32, #tpu.memory_space<vmem>>, vector<1x32xf32>
    tpu.vector_store %arg21[%c6_83, %c0_84], %141 {strides = array<i32>} : memref<14x32xf32, #tpu.memory_space<vmem>>, vector<1x32xf32>,
    %143 = vector.extract_strided_slice %140 {offsets = [1, 0], sizes = [1, 32], strides = [1, 1]} : vector<2x32xf32> to vector<1x32xf32>
    %c13_85 = arith.constant 13 : index
    %c0_86 = arith.constant 0 : index
    %144 = vector.load %arg21[%c13_85, %c0_86] : memref<14x32xf32, #tpu.memory_space<vmem>>, vector<1x32xf32>
    tpu.vector_store %arg21[%c13_85, %c0_86], %143 {strides = array<i32>} : memref<14x32xf32, #tpu.memory_space<vmem>>, vector<1x32xf32>,
    %c0_87 = arith.constant 0 : index
    %c0_88 = arith.constant 0 : index
    %145 = vector.load %arg19[%c0_87, %c0_88] : memref<2x32xf32, #tpu.memory_space<vmem>>, vector<2x32xf32>
    tpu.vector_store %arg19[%c0_87, %c0_88], %140 {strides = array<i32>} : memref<2x32xf32, #tpu.memory_space<vmem>>, vector<2x32xf32>,
    %c0_89 = arith.constant 0 : index
    %c0_90 = arith.constant 0 : index
    %146 = vector.load %arg14[%c0_89, %c0_90] : memref<32x32xf32, #tpu.memory_space<vmem>>, vector<32x32xf32>
    %c0_91 = arith.constant 0 : index
    %c0_92 = arith.constant 0 : index
    %147 = vector.load %arg15[%c0_91, %c0_92] : memref<32x32xf32, #tpu.memory_space<vmem>>, vector<32x32xf32>
    %c0_93 = arith.constant 0 : index
    %c0_94 = arith.constant 0 : index
    %148 = vector.load %arg16[%c0_93, %c0_94] : memref<1x32xf32, #tpu.memory_space<vmem>>, vector<1x32xf32>
    %c0_95 = arith.constant 0 : index
    %c0_96 = arith.constant 0 : index
    %149 = vector.load %arg21[%c0_95, %c0_96] : memref<14x32xf32, #tpu.memory_space<vmem>>, vector<7x32xf32>
    %c0_97 = arith.constant 0 : index
    %c0_98 = arith.constant 0 : index
    %150 = vector.load %arg20[%c0_97, %c0_98] : memref<16x32xf32, #tpu.memory_space<vmem>>, vector<8x32xf32>
    %cst_99 = arith.constant dense<0.000000e+00> : vector<7x8xf32>
    %151 = tpu.matmul %149, %150, %cst_99 {dimension_numbers = #tpu.dot_dimension_numbers<[1], [1], [0], [0], [0, 0, 1, 0], [], []>} : vector<7x32xf32>, vector<8x32xf32>, vector<7x8xf32> -> vector<7x8xf32>
    %cst_100 = arith.constant dense<0xFF800000> : vector<7xf32>
    %152 = vector.multi_reduction <maximumf>, %151, %cst_100 [1] : vector<7x8xf32> to vector<7xf32>
    %153 = vector.shape_cast %152 : vector<7xf32> to vector<7x1xf32>
    %154 = vector.broadcast %153 : vector<7x1xf32> to vector<7x8xf32>
    %155 = arith.subf %151, %154 : vector<7x8xf32>
    %156 = math.exp %155 : vector<7x8xf32>
    %cst_101 = arith.constant dense<0.000000e+00> : vector<7xf32>
    %157 = vector.multi_reduction <add>, %156, %cst_101 [1] : vector<7x8xf32> to vector<7xf32>
    %158 = vector.shape_cast %157 : vector<7xf32> to vector<7x1xf32>
    %159 = tpu.reciprocal %158 {approx = true} : vector<7x1xf32> -> vector<7x1xf32>
    %160 = vector.broadcast %159 : vector<7x1xf32> to vector<7x8xf32>
    %161 = arith.mulf %156, %160 : vector<7x8xf32>
    %cst_102 = arith.constant dense<0.000000e+00> : vector<7x32xf32>
    %162 = tpu.matmul %161, %150, %cst_102 {dimension_numbers = #tpu.dot_dimension_numbers<[1], [0], [0], [1], [0, 0, 1, 1], [], []>} : vector<7x8xf32>, vector<8x32xf32>, vector<7x32xf32> -> vector<7x32xf32>
    %cst_103 = arith.constant dense<0.000000e+00> : vector<7x32xf32>
    %163 = tpu.matmul %162, %146, %cst_103 {dimension_numbers = #tpu.dot_dimension_numbers<[1], [0], [0], [1], [0, 0, 1, 1], [], []>} : vector<7x32xf32>, vector<32x32xf32>, vector<7x32xf32> -> vector<7x32xf32>
    %cst_104 = arith.constant dense<0.000000e+00> : vector<7x32xf32>
    %164 = tpu.matmul %149, %147, %cst_104 {dimension_numbers = #tpu.dot_dimension_numbers<[1], [0], [0], [1], [0, 0, 1, 1], [], []>} : vector<7x32xf32>, vector<32x32xf32>, vector<7x32xf32> -> vector<7x32xf32>
    %165 = arith.addf %163, %164 : vector<7x32xf32>
    %166 = vector.broadcast %148 : vector<1x32xf32> to vector<7x32xf32>
    %167 = arith.addf %165, %166 : vector<7x32xf32>
    %168 = math.tanh %167 : vector<7x32xf32>
    %c0_105 = arith.constant 0 : index
    %c0_106 = arith.constant 0 : index
    %169 = vector.load %arg18[%c0_105, %c0_106] : memref<14x8xf32, #tpu.memory_space<vmem>>, vector<7x8xf32>
    tpu.vector_store %arg18[%c0_105, %c0_106], %161 {strides = array<i32>} : memref<14x8xf32, #tpu.memory_space<vmem>>, vector<7x8xf32>,
    %c0_107 = arith.constant 0 : index
    %c0_108 = arith.constant 0 : index
    %170 = vector.load %arg17[%c0_107, %c0_108] : memref<14x32xf32, #tpu.memory_space<vmem>>, vector<7x32xf32>
    tpu.vector_store %arg17[%c0_107, %c0_108], %168 {strides = array<i32>} : memref<14x32xf32, #tpu.memory_space<vmem>>, vector<7x32xf32>,
    %c7_109 = arith.constant 7 : index
    %c0_110 = arith.constant 0 : index
    %171 = vector.load %arg21[%c7_109, %c0_110] : memref<14x32xf32, #tpu.memory_space<vmem>>, vector<7x32xf32>
    %c8_111 = arith.constant 8 : index
    %c0_112 = arith.constant 0 : index
    %172 = vector.load %arg20[%c8_111, %c0_112] : memref<16x32xf32, #tpu.memory_space<vmem>>, vector<8x32xf32>
    %cst_113 = arith.constant dense<0.000000e+00> : vector<7x8xf32>
    %173 = tpu.matmul %171, %172, %cst_113 {dimension_numbers = #tpu.dot_dimension_numbers<[1], [1], [0], [0], [0, 0, 1, 0], [], []>} : vector<7x32xf32>, vector<8x32xf32>, vector<7x8xf32> -> vector<7x8xf32>
    %cst_114 = arith.constant dense<0xFF800000> : vector<7xf32>
    %174 = vector.multi_reduction <maximumf>, %173, %cst_114 [1] : vector<7x8xf32> to vector<7xf32>
    %175 = vector.shape_cast %174 : vector<7xf32> to vector<7x1xf32>
    %176 = vector.broadcast %175 : vector<7x1xf32> to vector<7x8xf32>
    %177 = arith.subf %173, %176 : vector<7x8xf32>
    %178 = math.exp %177 : vector<7x8xf32>
    %cst_115 = arith.constant dense<0.000000e+00> : vector<7xf32>
    %179 = vector.multi_reduction <add>, %178, %cst_115 [1] : vector<7x8xf32> to vector<7xf32>
    %180 = vector.shape_cast %179 : vector<7xf32> to vector<7x1xf32>
    %181 = tpu.reciprocal %180 {approx = true} : vector<7x1xf32> -> vector<7x1xf32>
    %182 = vector.broadcast %181 : vector<7x1xf32> to vector<7x8xf32>
    %183 = arith.mulf %178, %182 : vector<7x8xf32>
    %cst_116 = arith.constant dense<0.000000e+00> : vector<7x32xf32>
    %184 = tpu.matmul %183, %172, %cst_116 {dimension_numbers = #tpu.dot_dimension_numbers<[1], [0], [0], [1], [0, 0, 1, 1], [], []>} : vector<7x8xf32>, vector<8x32xf32>, vector<7x32xf32> -> vector<7x32xf32>
    %cst_117 = arith.constant dense<0.000000e+00> : vector<7x32xf32>
    %185 = tpu.matmul %184, %146, %cst_117 {dimension_numbers = #tpu.dot_dimension_numbers<[1], [0], [0], [1], [0, 0, 1, 1], [], []>} : vector<7x32xf32>, vector<32x32xf32>, vector<7x32xf32> -> vector<7x32xf32>
    %cst_118 = arith.constant dense<0.000000e+00> : vector<7x32xf32>
    %186 = tpu.matmul %171, %147, %cst_118 {dimension_numbers = #tpu.dot_dimension_numbers<[1], [0], [0], [1], [0, 0, 1, 1], [], []>} : vector<7x32xf32>, vector<32x32xf32>, vector<7x32xf32> -> vector<7x32xf32>
    %187 = arith.addf %185, %186 : vector<7x32xf32>
    %188 = vector.broadcast %148 : vector<1x32xf32> to vector<7x32xf32>
    %189 = arith.addf %187, %188 : vector<7x32xf32>
    %190 = math.tanh %189 : vector<7x32xf32>
    %c7_119 = arith.constant 7 : index
    %c0_120 = arith.constant 0 : index
    %191 = vector.load %arg18[%c7_119, %c0_120] : memref<14x8xf32, #tpu.memory_space<vmem>>, vector<7x8xf32>
    tpu.vector_store %arg18[%c7_119, %c0_120], %183 {strides = array<i32>} : memref<14x8xf32, #tpu.memory_space<vmem>>, vector<7x8xf32>,
    %c7_121 = arith.constant 7 : index
    %c0_122 = arith.constant 0 : index
    %192 = vector.load %arg17[%c7_121, %c0_122] : memref<14x32xf32, #tpu.memory_space<vmem>>, vector<7x32xf32>
    tpu.vector_store %arg17[%c7_121, %c0_122], %190 {strides = array<i32>} : memref<14x32xf32, #tpu.memory_space<vmem>>, vector<7x32xf32>,
    return
  }
  func.func @transform_0(%arg0: i32) -> (i32, i32) {
    %c0_i32 = arith.constant 0 : i32
    %c0_i32_0 = arith.constant 0 : i32
    %c0_i32_1 = arith.constant 0 : i32
    return %c0_i32, %c0_i32_0 : i32, i32
  }
  func.func @transform_1(%arg0: i32) -> (i32, i32) {
    %c0_i32 = arith.constant 0 : i32
    %c0_i32_0 = arith.constant 0 : i32
    %c0_i32_1 = arith.constant 0 : i32
    return %c0_i32, %c0_i32_0 : i32, i32
  }
  func.func @transform_2(%arg0: i32) -> (i32, i32) {
    %c0_i32 = arith.constant 0 : i32
    %c0_i32_0 = arith.constant 0 : i32
    %c0_i32_1 = arith.constant 0 : i32
    return %c0_i32, %c0_i32_0 : i32, i32
  }
  func.func @transform_3(%arg0: i32) -> (i32, i32) {
    %c0_i32 = arith.constant 0 : i32
    %c0_i32_0 = arith.constant 0 : i32
    %c0_i32_1 = arith.constant 0 : i32
    return %c0_i32, %c0_i32_0 : i32, i32
  }
  func.func @transform_4(%arg0: i32) -> (i32, i32) {
    %c0_i32 = arith.constant 0 : i32
    %c0_i32_0 = arith.constant 0 : i32
    %c0_i32_1 = arith.constant 0 : i32
    return %c0_i32, %c0_i32_0 : i32, i32
  }
  func.func @transform_5(%arg0: i32) -> (i32, i32) {
    %c0_i32 = arith.constant 0 : i32
    %c0_i32_0 = arith.constant 0 : i32
    %c0_i32_1 = arith.constant 0 : i32
    return %c0_i32, %c0_i32_0 : i32, i32
  }
  func.func @transform_6(%arg0: i32) -> (i32, i32) {
    %c0_i32 = arith.constant 0 : i32
    %c0_i32_0 = arith.constant 0 : i32
    %c0_i32_1 = arith.constant 0 : i32
    return %c0_i32, %c0_i32_0 : i32, i32
  }
  func.func @transform_7(%arg0: i32) -> (i32, i32) {
    %c0_i32 = arith.constant 0 : i32
    %c0_i32_0 = arith.constant 0 : i32
    %c0_i32_1 = arith.constant 0 : i32
    return %c0_i32, %c0_i32_0 : i32, i32
  }
  func.func @transform_8(%arg0: i32) -> (i32, i32) {
    %c0_i32 = arith.constant 0 : i32
    %c0_i32_0 = arith.constant 0 : i32
    %c0_i32_1 = arith.constant 0 : i32
    return %c0_i32, %c0_i32_0 : i32, i32
  }
  func.func @transform_9(%arg0: i32) -> (i32, i32) {
    %c0_i32 = arith.constant 0 : i32
    %c0_i32_0 = arith.constant 0 : i32
    %c0_i32_1 = arith.constant 0 : i32
    return %c0_i32, %c0_i32_0 : i32, i32
  }
  func.func @transform_10(%arg0: i32) -> (i32, i32) {
    %c0_i32 = arith.constant 0 : i32
    %c0_i32_0 = arith.constant 0 : i32
    %c0_i32_1 = arith.constant 0 : i32
    return %c0_i32, %c0_i32_0 : i32, i32
  }
  func.func @transform_11(%arg0: i32) -> (i32, i32) {
    %c0_i32 = arith.constant 0 : i32
    %c0_i32_0 = arith.constant 0 : i32
    %c0_i32_1 = arith.constant 0 : i32
    return %c0_i32, %c0_i32_0 : i32, i32
  }
  func.func @transform_12(%arg0: i32) -> (i32, i32) {
    %c0_i32 = arith.constant 0 : i32
    %c0_i32_0 = arith.constant 0 : i32
    %c0_i32_1 = arith.constant 0 : i32
    return %c0_i32, %c0_i32_0 : i32, i32
  }
  func.func @transform_13(%arg0: i32) -> (i32, i32) {
    %c0_i32 = arith.constant 0 : i32
    %c0_i32_0 = arith.constant 0 : i32
    %c0_i32_1 = arith.constant 0 : i32
    return %c0_i32, %c0_i32_0 : i32, i32
  }
  func.func @transform_14(%arg0: i32) -> (i32, i32) {
    %c0_i32 = arith.constant 0 : i32
    %c0_i32_0 = arith.constant 0 : i32
    %c0_i32_1 = arith.constant 0 : i32
    return %c0_i32, %c0_i32_0 : i32, i32
  }
  func.func @transform_15(%arg0: i32) -> (i32, i32) {
    %c0_i32 = arith.constant 0 : i32
    %c0_i32_0 = arith.constant 0 : i32
    %c0_i32_1 = arith.constant 0 : i32
    return %c0_i32, %c0_i32_0 : i32, i32
  }
  func.func @transform_16(%arg0: i32) -> (i32, i32) {
    %c0_i32 = arith.constant 0 : i32
    %c0_i32_0 = arith.constant 0 : i32
    %c0_i32_1 = arith.constant 0 : i32
    return %c0_i32, %c0_i32_0 : i32, i32
  }
  func.func @transform_17(%arg0: i32) -> (i32, i32) {
    %c0_i32 = arith.constant 0 : i32
    %c0_i32_0 = arith.constant 0 : i32
    %c0_i32_1 = arith.constant 0 : i32
    return %c0_i32, %c0_i32_0 : i32, i32
  }
  func.func @transform_18(%arg0: i32) -> (i32, i32) {
    %c0_i32 = arith.constant 0 : i32
    %c0_i32_0 = arith.constant 0 : i32
    %c0_i32_1 = arith.constant 0 : i32
    return %c0_i32, %c0_i32_0 : i32, i32
  }
}

</mosaic_0001>

<llo_original>
// kernel: tpu_custom_call.1
$region0: #{tpu_custom_call.1}
  #allocation0 [shape = 'u32[]', space=smem, size = 0x4, offset = 0x4, fixed_abs, tag = 'smem constant byte address 0x4 - core index']
  #allocation1 [shape = 'u32[144,128]{1,0:T(1,128)}', space=vmem, size = 0x12000, scoped, tag = 'internal scratch']
  #allocation2 [shape = 'f32[16,32]{1,0:T(8,128)}', space=vmem, size = 0x2000, scoped, tag = 'scratch operand']
  #allocation3 [shape = 'f32[14,32]{1,0:T(8,128)}', space=vmem, size = 0x2000, scoped, tag = 'scratch operand']
  %s0 = inlined_call_operand.hbm [shape: f32[1,24], index: 0, kind: input, shape index: {}]
  %s1 = inlined_call_operand.hbm [shape: f32[16,16], index: 1, kind: input, shape index: {}]
  %s2 = inlined_call_operand.hbm [shape: f32[14,16], index: 2, kind: input, shape index: {}]
  %s3 = inlined_call_operand.vmem [shape: f32[2,32], index: 3, kind: input, shape index: {}]
  %s4 = inlined_call_operand.vmem [shape: f32[24,16], index: 4, kind: input, shape index: {}]
  %s5 = inlined_call_operand.hbm [shape: f32[1,16], index: 5, kind: input, shape index: {}]
  %s6 = inlined_call_operand.hbm [shape: f32[16,32], index: 6, kind: input, shape index: {}]
  %s7 = inlined_call_operand.vmem [shape: f32[32,32], index: 7, kind: input, shape index: {}]
  %s8 = inlined_call_operand.vmem [shape: f32[1,32], index: 8, kind: input, shape index: {}]
  %s9 = inlined_call_operand.hbm [shape: f32[16,32], index: 9, kind: input, shape index: {}]
  %s10 = inlined_call_operand.hbm [shape: f32[16,32], index: 10, kind: input, shape index: {}]
  %s11 = inlined_call_operand.vmem [shape: f32[32,32], index: 11, kind: input, shape index: {}]
  %s12 = inlined_call_operand.vmem [shape: f32[1,32], index: 12, kind: input, shape index: {}]
  %s13 = inlined_call_operand.hbm [shape: f32[32,32], index: 13, kind: input, shape index: {}]
  %s14 = inlined_call_operand.hbm [shape: f32[32,32], index: 14, kind: input, shape index: {}]
  %s15 = inlined_call_operand.vmem [shape: f32[1,32], index: 15, kind: input, shape index: {}]
  %s16 = inlined_call_operand.hbm [shape: f32[14,32], index: 16, kind: output, shape index: {0}]
  %s17 = inlined_call_operand.vmem [shape: f32[14,8], index: 17, kind: output, shape index: {1}]
  %s18 = inlined_call_operand.hbm [shape: f32[2,32], index: 18, kind: output, shape index: {2}]
  %19 = xla_tuple %s16, %s17, %s18
  %s20 = sld [smem:[#allocation0]]
  $region126: #{tpu_custom_call.1} parent=0
    _
  %s22 = ssub.s32 1, %s20
  %s23 = scalar_select 0, %s22, %s20
  $region1: #{tpu_custom_call.1} parent=0
    #allocation4 [shape = 'u8[512]{0}', space=vmem, size = 0x400, scoped, tag = 'input window, operand 0, single buffered']
    #allocation5 [shape = 's32[1]{0}', space=sflag, size = 0x4, scoped, tag = 'scoped memory for tpu_custom_call.1']
    #allocation6 [shape = 's32[1]{0}', space=sflag, size = 0x4, scoped, tag = 'scoped memory for tpu_custom_call.1']
    #allocation7 [shape = 'u8[8192]{0}', space=vmem, size = 0x2000, scoped, tag = 'input window, operand 1, single buffered']
    #allocation8 [shape = 's32[1]{0}', space=sflag, size = 0x4, scoped, tag = 'scoped memory for tpu_custom_call.1']
    #allocation9 [shape = 'u8[8192]{0}', space=vmem, size = 0x2000, scoped, tag = 'input window, operand 2, single buffered']
    #allocation10 [shape = 'u8[512]{0}', space=vmem, size = 0x400, scoped, tag = 'input window, operand 5, single buffered']
    #allocation11 [shape = 's32[1]{0}', space=sflag, size = 0x4, scoped, tag = 'scoped memory for tpu_custom_call.1']
    #allocation12 [shape = 'u8[8192]{0}', space=vmem, size = 0x2000, scoped, tag = 'input window, operand 6, single buffered']
    #allocation13 [shape = 'u8[8192]{0}', space=vmem, size = 0x2000, scoped, tag = 'input window, operand 9, single buffered']
    #allocation14 [shape = 's32[1]{0}', space=sflag, size = 0x4, scoped, tag = 'scoped memory for tpu_custom_call.1']
    #allocation15 [shape = 'u8[8192]{0}', space=vmem, size = 0x2000, scoped, tag = 'input window, operand 10, single buffered']
    #allocation16 [shape = 'u8[16384]{0}', space=vmem, size = 0x4000, scoped, tag = 'input window, operand 13, single buffered']
    #allocation17 [shape = 's32[1]{0}', space=sflag, size = 0x4, scoped, tag = 'scoped memory for tpu_custom_call.1']
    #allocation18 [shape = 'u8[16384]{0}', space=vmem, size = 0x4000, scoped, tag = 'input window, operand 14, single buffered']
    #allocation19 [shape = 'u8[8192]{0}', space=vmem, size = 0x2000, scoped, tag = 'output window, operand 0, single buffered']
    #allocation20 [shape = 'u8[1024]{0}', space=vmem, size = 0x400, scoped, tag = 'output window, operand 2, single buffered']
    #allocation21 [shape = 's32[1]{0}', space=sflag, size = 0x4, scoped, tag = 'scoped memory for tpu_custom_call.1']
    %24 = vsyncpa [#allocation5], 0
    %25 = vsyncpa [#allocation8], 0
    %26 = vsyncpa [#allocation11], 0
    %27 = vsyncpa [#allocation14], 0
    %28 = vsyncpa [#allocation17], 0
    %29 = vsyncpa [#allocation6], 0
    %30 = vsyncpa [#allocation21], 0
    // Predicated region
    $region2: #{tpu_custom_call.1} parent=1 // pred_check
      _
    $region3: #{tpu_custom_call.1} parent=1 // pred_check_branch
      %32 = sbr.rel (0) target = $region5
    $region4: #{tpu_custom_call.1} parent=1 // pred_region
      %s34 = ssub.s32 16, 16
      %35 = vsyncadd [#allocation5], %s34
      %s37 = sshll.u32 [#allocation4], 4
      %s38 = int_to_ptr.vmem [resolvable:$true] %s37
      %40 = dma.hbm_to_vmem [thread:$0]  %s0, 16, %s38, [#allocation5]
    $region5: #{tpu_custom_call.1} parent=1 // pred_fallthru
      _
    // Predicated region
    $region6: #{tpu_custom_call.1} parent=1 // pred_check
      _
    $region7: #{tpu_custom_call.1} parent=1 // pred_check_branch
      %42 = sbr.rel (0) target = $region9
    $region8: #{tpu_custom_call.1} parent=1 // pred_region
      %s44 = ssub.s32 256, 256
      %45 = vsyncadd [#allocation8], %s44
      %s46 = sshll.u32 [#allocation7], 4
      %s47 = int_to_ptr.vmem [resolvable:$true] %s46
      %52 = dma.hbm_to_vmem [thread:$0]  %s1, 256, %s47, [#allocation8], 128, 128, 8
    $region9: #{tpu_custom_call.1} parent=1 // pred_fallthru
      _
    // Predicated region
    $region10: #{tpu_custom_call.1} parent=1 // pred_check
      _
    $region11: #{tpu_custom_call.1} parent=1 // pred_check_branch
      %54 = sbr.rel (0) target = $region13
    $region12: #{tpu_custom_call.1} parent=1 // pred_region
      %s56 = ssub.s32 256, 256
      %57 = vsyncadd [#allocation8], %s56
      %s58 = sshll.u32 [#allocation9], 4
      %s59 = int_to_ptr.vmem [resolvable:$true] %s58
      %64 = dma.hbm_to_vmem [thread:$0]  %s2, 256, %s59, [#allocation8], 128, 128, 8
    $region13: #{tpu_custom_call.1} parent=1 // pred_fallthru
      _
    // Predicated region
    $region14: #{tpu_custom_call.1} parent=1 // pred_check
      _
    $region15: #{tpu_custom_call.1} parent=1 // pred_check_branch
      %66 = sbr.rel (0) target = $region17
    $region16: #{tpu_custom_call.1} parent=1 // pred_region
      _
    $region17: #{tpu_custom_call.1} parent=1 // pred_fallthru
      _
    // Predicated region
    $region18: #{tpu_custom_call.1} parent=1 // pred_check
      _
    $region19: #{tpu_custom_call.1} parent=1 // pred_check_branch
      %68 = sbr.rel (0) target = $region21
    $region20: #{tpu_custom_call.1} parent=1 // pred_region
      _
    $region21: #{tpu_custom_call.1} parent=1 // pred_fallthru
      _
    // Predicated region
    $region22: #{tpu_custom_call.1} parent=1 // pred_check
      _
    $region23: #{tpu_custom_call.1} parent=1 // pred_check_branch
      %70 = sbr.rel (0) target = $region25
    $region24: #{tpu_custom_call.1} parent=1 // pred_region
      %s72 = ssub.s32 16, 16
      %73 = vsyncadd [#allocation11], %s72
      %s75 = sshll.u32 [#allocation10], 4
      %s76 = int_to_ptr.vmem [resolvable:$true] %s75
      %78 = dma.hbm_to_vmem [thread:$0]  %s5, 16, %s76, [#allocation11]
    $region25: #{tpu_custom_call.1} parent=1 // pred_fallthru
      _
    // Predicated region
    $region26: #{tpu_custom_call.1} parent=1 // pred_check
      _
    $region27: #{tpu_custom_call.1} parent=1 // pred_check_branch
      %80 = sbr.rel (0) target = $region29
    $region28: #{tpu_custom_call.1} parent=1 // pred_region
      %s82 = ssub.s32 256, 256
      %83 = vsyncadd [#allocation11], %s82
      %s84 = sshll.u32 [#allocation12], 4
      %s85 = int_to_ptr.vmem [resolvable:$true] %s84
      %90 = dma.hbm_to_vmem [thread:$0]  %s6, 256, %s85, [#allocation11], 128, 128, 8
    $region29: #{tpu_custom_call.1} parent=1 // pred_fallthru
      _
    // Predicated region
    $region30: #{tpu_custom_call.1} parent=1 // pred_check
      _
    $region31: #{tpu_custom_call.1} parent=1 // pred_check_branch
      %92 = sbr.rel (0) target = $region33
    $region32: #{tpu_custom_call.1} parent=1 // pred_region
      _
    $region33: #{tpu_custom_call.1} parent=1 // pred_fallthru
      _
    // Predicated region
    $region34: #{tpu_custom_call.1} parent=1 // pred_check
      _
    $region35: #{tpu_custom_call.1} parent=1 // pred_check_branch
      %94 = sbr.rel (0) target = $region37
    $region36: #{tpu_custom_call.1} parent=1 // pred_region
      _
    $region37: #{tpu_custom_call.1} parent=1 // pred_fallthru
      _
    // Predicated region
    $region38: #{tpu_custom_call.1} parent=1 // pred_check
      _
    $region39: #{tpu_custom_call.1} parent=1 // pred_check_branch
      %96 = sbr.rel (0) target = $region41
    $region40: #{tpu_custom_call.1} parent=1 // pred_region
      %s98 = ssub.s32 256, 256
      %99 = vsyncadd [#allocation14], %s98
      %s100 = sshll.u32 [#allocation13], 4
      %s101 = int_to_ptr.vmem [resolvable:$true] %s100
      %106 = dma.hbm_to_vmem [thread:$0]  %s9, 256, %s101, [#allocation14], 128, 128, 8
    $region41: #{tpu_custom_call.1} parent=1 // pred_fallthru
      _
    // Predicated region
    $region42: #{tpu_custom_call.1} parent=1 // pred_check
      _
    $region43: #{tpu_custom_call.1} parent=1 // pred_check_branch
      %108 = sbr.rel (0) target = $region45
    $region44: #{tpu_custom_call.1} parent=1 // pred_region
      %s110 = ssub.s32 256, 256
      %111 = vsyncadd [#allocation14], %s110
      %s112 = sshll.u32 [#allocation15], 4
      %s113 = int_to_ptr.vmem [resolvable:$true] %s112
      %118 = dma.hbm_to_vmem [thread:$0]  %s10, 256, %s113, [#allocation14], 128, 128, 8
    $region45: #{tpu_custom_call.1} parent=1 // pred_fallthru
      _
    // Predicated region
    $region46: #{tpu_custom_call.1} parent=1 // pred_check
      _
    $region47: #{tpu_custom_call.1} parent=1 // pred_check_branch
      %120 = sbr.rel (0) target = $region49
    $region48: #{tpu_custom_call.1} parent=1 // pred_region
      _
    $region49: #{tpu_custom_call.1} parent=1 // pred_fallthru
      _
    // Predicated region
    $region50: #{tpu_custom_call.1} parent=1 // pred_check
      _
    $region51: #{tpu_custom_call.1} parent=1 // pred_check_branch
      %122 = sbr.rel (0) target = $region53
    $region52: #{tpu_custom_call.1} parent=1 // pred_region
      _
    $region53: #{tpu_custom_call.1} parent=1 // pred_fallthru
      _
    // Predicated region
    $region54: #{tpu_custom_call.1} parent=1 // pred_check
      _
    $region55: #{tpu_custom_call.1} parent=1 // pred_check_branch
      %124 = sbr.rel (0) target = $region57
    $region56: #{tpu_custom_call.1} parent=1 // pred_region
      %s126 = ssub.s32 512, 512
      %127 = vsyncadd [#allocation17], %s126
      %s128 = sshll.u32 [#allocation16], 4
      %s129 = int_to_ptr.vmem [resolvable:$true] %s128
      %134 = dma.hbm_to_vmem [thread:$0]  %s13, 512, %s129, [#allocation17], 128, 128, 8
    $region57: #{tpu_custom_call.1} parent=1 // pred_fallthru
      _
    // Predicated region
    $region58: #{tpu_custom_call.1} parent=1 // pred_check
      _
    $region59: #{tpu_custom_call.1} parent=1 // pred_check_branch
      %136 = sbr.rel (0) target = $region61
    $region60: #{tpu_custom_call.1} parent=1 // pred_region
      %s138 = ssub.s32 512, 512
      %139 = vsyncadd [#allocation17], %s138
      %s140 = sshll.u32 [#allocation18], 4
      %s141 = int_to_ptr.vmem [resolvable:$true] %s140
      %146 = dma.hbm_to_vmem [thread:$0]  %s14, 512, %s141, [#allocation17], 128, 128, 8
    $region61: #{tpu_custom_call.1} parent=1 // pred_fallthru
      _
    // Predicated region
    $region62: #{tpu_custom_call.1} parent=1 // pred_check
      _
    $region63: #{tpu_custom_call.1} parent=1 // pred_check_branch
      %148 = sbr.rel (0) target = $region65
    $region64: #{tpu_custom_call.1} parent=1 // pred_region
      _
    $region65: #{tpu_custom_call.1} parent=1 // pred_fallthru
      _
    // Predicated region
    $region66: #{tpu_custom_call.1} parent=1 // pred_check
      _
    $region67: #{tpu_custom_call.1} parent=1 // pred_check_branch
      %150 = sbr.rel (0) target = $region69
    $region68: #{tpu_custom_call.1} parent=1 // pred_region
      %151 = dma.done [#allocation5], 16
    $region69: #{tpu_custom_call.1} parent=1 // pred_fallthru
      _
    // Predicated region
    $region70: #{tpu_custom_call.1} parent=1 // pred_check
      _
    $region71: #{tpu_custom_call.1} parent=1 // pred_check_branch
      %153 = sbr.rel (0) target = $region73
    $region72: #{tpu_custom_call.1} parent=1 // pred_region
      %154 = dma.done [#allocation8], 256
    $region73: #{tpu_custom_call.1} parent=1 // pred_fallthru
      _
    // Predicated region
    $region74: #{tpu_custom_call.1} parent=1 // pred_check
      _
    $region75: #{tpu_custom_call.1} parent=1 // pred_check_branch
      %156 = sbr.rel (0) target = $region77
    $region76: #{tpu_custom_call.1} parent=1 // pred_region
      %157 = dma.done [#allocation8], 256
    $region77: #{tpu_custom_call.1} parent=1 // pred_fallthru
      _
    // Predicated region
    $region78: #{tpu_custom_call.1} parent=1 // pred_check
      _
    $region79: #{tpu_custom_call.1} parent=1 // pred_check_branch
      %159 = sbr.rel (0) target = $region81
    $region80: #{tpu_custom_call.1} parent=1 // pred_region
      %160 = dma.done [#allocation11], 16
    $region81: #{tpu_custom_call.1} parent=1 // pred_fallthru
      _
    // Predicated region
    $region82: #{tpu_custom_call.1} parent=1 // pred_check
      _
    $region83: #{tpu_custom_call.1} parent=1 // pred_check_branch
      %162 = sbr.rel (0) target = $region85
    $region84: #{tpu_custom_call.1} parent=1 // pred_region
      %163 = dma.done [#allocation11], 256
    $region85: #{tpu_custom_call.1} parent=1 // pred_fallthru
      _
    // Predicated region
    $region86: #{tpu_custom_call.1} parent=1 // pred_check
      _
    $region87: #{tpu_custom_call.1} parent=1 // pred_check_branch
      %165 = sbr.rel (0) target = $region89
    $region88: #{tpu_custom_call.1} parent=1 // pred_region
      %166 = dma.done [#allocation14], 256
    $region89: #{tpu_custom_call.1} parent=1 // pred_fallthru
      _
    // Predicated region
    $region90: #{tpu_custom_call.1} parent=1 // pred_check
      _
    $region91: #{tpu_custom_call.1} parent=1 // pred_check_branch
      %168 = sbr.rel (0) target = $region93
    $region92: #{tpu_custom_call.1} parent=1 // pred_region
      %169 = dma.done [#allocation14], 256
    $region93: #{tpu_custom_call.1} parent=1 // pred_fallthru
      _
    // Predicated region
    $region94: #{tpu_custom_call.1} parent=1 // pred_check
      _
    $region95: #{tpu_custom_call.1} parent=1 // pred_check_branch
      %171 = sbr.rel (0) target = $region97
    $region96: #{tpu_custom_call.1} parent=1 // pred_region
      %172 = dma.done [#allocation17], 512
    $region97: #{tpu_custom_call.1} parent=1 // pred_fallthru
      _
    // Predicated region
    $region98: #{tpu_custom_call.1} parent=1 // pred_check
      _
    $region99: #{tpu_custom_call.1} parent=1 // pred_check_branch
      %174 = sbr.rel (0) target = $region101
    $region100: #{tpu_custom_call.1} parent=1 // pred_region
      %175 = dma.done [#allocation17], 512
    $region101: #{tpu_custom_call.1} parent=1 // pred_fallthru
      _
    %v176 = vld [vmem:[#allocation4] sm:$0x1]
    %v177 = vld [vmem:[%s4] sm:$0xff]
    %v178 = vld [vmem:[%s4 + $0x8] sm:$0xff]
    %v179 = vld [vmem:[%s4 + $0x10] sm:$0xff]
    %v180 = vld [vmem:[#allocation10] sm:$0x1]
    %vm181 = vcmask 195584
    %v183 = vsel %vm181, %v176, 0
    %185 = vmatprep.subr.mxu0 0.0
    %186 = vmatpush1.msra.mxu0 %v177
    %187 = vmatprep.subr.mxu0 0.0
    %188 = vmatpush1.msra.mxu0 %v178
    %189 = vmatprep.subr.mxu0 0.0
    %190 = vmatpush1.msra.mxu0 %v179
    %191 = vmatprep.subr.mxu0 0.0
    %192 = vmatpush1.msra.mxu0 0.0
    %193 = vmatprep.subr.mxu0 0.0
    %194 = vmatpush1.msra.mxu0 0.0
    %195 = vmatprep.subr.mxu0 0.0
    %196 = vmatpush1.msra.mxu0 0.0
    %197 = vmatprep.subr.mxu0 0.0
    %198 = vmatpush1.msra.mxu0 0.0
    %199 = vmatprep.subr.mxu0 0.0
    %200 = vmatpush1.msra.mxu0 0.0
    %201 = vmatprep.subr.mxu0 0.0
    %202 = vmatpush1.msra.mxu0 0.0
    %203 = vmatprep.subr.mxu0 0.0
    %204 = vmatpush1.msra.mxu0 0.0
    %205 = vmatprep.subr.mxu0 0.0
    %206 = vmatpush1.msra.mxu0 0.0
    %207 = vmatprep.subr.mxu0 0.0
    %208 = vmatpush1.msra.mxu0 0.0
    %209 = vmatprep.subr.mxu0 0.0
    %210 = vmatpush1.msra.mxu0 0.0
    %211 = vmatprep.subr.mxu0 0.0
    %212 = vmatpush1.msra.mxu0 0.0
    %213 = vmatprep.subr.mxu0 0.0
    %214 = vmatpush1.msra.mxu0 0.0
    %215 = vmatprep.subr.mxu0 0.0
    %216 = vmatpush1.msra.mxu0 0.0
    %217 = vmatprep.subr.mxu0 0.0
    %218 = vmatpush1.msra.mxu0 0.0
    %219 = vmatprep.subr.mxu0 0.0
    %220 = vmatpush1.msra.mxu0 0.0
    %221 = vmatprep.subr.mxu0 0.0
    %222 = vmatpush1.msra.mxu0 0.0
    %223 = vmatprep.subr.mxu0 0.0
    %224 = vmatpush1.msra.mxu0 0.0
    %225 = vmatprep.subr.mxu0 0.0
    %226 = vmatpush1.msra.mxu0 0.0
    %227 = vmatprep.subr.mxu0 0.0
    %228 = vmatpush1.msra.mxu0 0.0
    %229 = vmatprep.subr.mxu0 0.0
    %230 = vmatpush1.msra.mxu0 0.0
    %231 = vmatprep.subr.mxu0 0.0
    %232 = vmatpush1.msra.mxu0 0.0
    %233 = vmatprep.subr.mxu0 0.0
    %234 = vmatpush1.msra.mxu0 0.0
    %235 = vmatprep.subr.mxu0 0.0
    %236 = vmatpush1.msra.mxu0 0.0
    %237 = vmatprep.subr.mxu0 0.0
    %238 = vmatpush1.msra.mxu0 0.0
    %239 = vmatprep.subr.mxu0 0.0
    %240 = vmatpush1.msra.mxu0 0.0
    %241 = vmatprep.subr.mxu0 0.0
    %242 = vmatpush1.msra.mxu0 0.0
    %243 = vmatprep.subr.mxu0 0.0
    %244 = vmatpush1.msra.mxu0 0.0
    %245 = vmatprep.subr.mxu0 0.0
    %246 = vmatpush1.msra.mxu0 0.0
    %247 = vmatprep.subr.mxu0 0.0
    %248 = vmatpush1.msra.mxu0 0.0
    %249 = vmatprep.mubr.f32.mxu0 0.0
    %250 = vmatmul.mubr.f32.gmra.mrb[0].mxu0 %v183
    %v251 = vpop.f32.mrb[0].mxu0
    %v252 = vadd.f32 %v180, %v251
    %v253 = vpop.f32.mrb[0].mxu0
    %254 = vdwg.mxu0
    %v255 = vtanh.pop %v252
    %v256 = vld [vmem:[#allocation7] sm:$0xff]
    %v257 = vld [vmem:[#allocation7 + $0x8] sm:$0xff]
    %v258 = vld [vmem:[#allocation12] sm:$0xff]
    %v259 = vld [vmem:[#allocation12 + $0x8] sm:$0xff]
    %v260 = vld [vmem:[%s8] sm:$0x1]
    %v262 = vlaneseq
    %v263 = vshrl.u32 %v262, 7
    %v264 = vsub.s32 0, %v263
    %v265 = vrot.slane %v260, %v264
    %vm267 = vcmask 130048
    %v269 = vsel %vm267, %v256, 0
    %v272 = vsel %vm267, %v257, 0
    %274 = vmatprep.subr.mxu0 0.0
    %275 = vmatpush1.msra.mxu0 %v258
    %276 = vmatprep.subr.mxu0 0.0
    %277 = vmatpush1.msra.mxu0 %v259
    %278 = vmatprep.subr.mxu0 0.0
    %279 = vmatpush1.msra.mxu0 0.0
    %280 = vmatprep.subr.mxu0 0.0
    %281 = vmatpush1.msra.mxu0 0.0
    %282 = vmatprep.subr.mxu0 0.0
    %283 = vmatpush1.msra.mxu0 0.0
    %284 = vmatprep.subr.mxu0 0.0
    %285 = vmatpush1.msra.mxu0 0.0
    %286 = vmatprep.subr.mxu0 0.0
    %287 = vmatpush1.msra.mxu0 0.0
    %288 = vmatprep.subr.mxu0 0.0
    %289 = vmatpush1.msra.mxu0 0.0
    %290 = vmatprep.subr.mxu0 0.0
    %291 = vmatpush1.msra.mxu0 0.0
    %292 = vmatprep.subr.mxu0 0.0
    %293 = vmatpush1.msra.mxu0 0.0
    %294 = vmatprep.subr.mxu0 0.0
    %295 = vmatpush1.msra.mxu0 0.0
    %296 = vmatprep.subr.mxu0 0.0
    %297 = vmatpush1.msra.mxu0 0.0
    %298 = vmatprep.subr.mxu0 0.0
    %299 = vmatpush1.msra.mxu0 0.0
    %300 = vmatprep.subr.mxu0 0.0
    %301 = vmatpush1.msra.mxu0 0.0
    %302 = vmatprep.subr.mxu0 0.0
    %303 = vmatpush1.msra.mxu0 0.0
    %304 = vmatprep.subr.mxu0 0.0
    %305 = vmatpush1.msra.mxu0 0.0
    %306 = vmatprep.subr.mxu0 0.0
    %307 = vmatpush1.msra.mxu0 0.0
    %308 = vmatprep.subr.mxu0 0.0
    %309 = vmatpush1.msra.mxu0 0.0
    %310 = vmatprep.subr.mxu0 0.0
    %311 = vmatpush1.msra.mxu0 0.0
    %312 = vmatprep.subr.mxu0 0.0
    %313 = vmatpush1.msra.mxu0 0.0
    %314 = vmatprep.subr.mxu0 0.0
    %315 = vmatpush1.msra.mxu0 0.0
    %316 = vmatprep.subr.mxu0 0.0
    %317 = vmatpush1.msra.mxu0 0.0
    %318 = vmatprep.subr.mxu0 0.0
    %319 = vmatpush1.msra.mxu0 0.0
    %320 = vmatprep.subr.mxu0 0.0
    %321 = vmatpush1.msra.mxu0 0.0
    %322 = vmatprep.subr.mxu0 0.0
    %323 = vmatpush1.msra.mxu0 0.0
    %324 = vmatprep.subr.mxu0 0.0
    %325 = vmatpush1.msra.mxu0 0.0
    %326 = vmatprep.subr.mxu0 0.0
    %327 = vmatpush1.msra.mxu0 0.0
    %328 = vmatprep.subr.mxu0 0.0
    %329 = vmatpush1.msra.mxu0 0.0
    %330 = vmatprep.subr.mxu0 0.0
    %331 = vmatpush1.msra.mxu0 0.0
    %332 = vmatprep.subr.mxu0 0.0
    %333 = vmatpush1.msra.mxu0 0.0
    %334 = vmatprep.subr.mxu0 0.0
    %335 = vmatpush1.msra.mxu0 0.0
    %336 = vmatprep.subr.mxu0 0.0
    %337 = vmatpush1.msra.mxu0 0.0
    %338 = vmatprep.mubr.f32.mxu0 0.0
    %339 = vmatmul.mubr.f32.gmra.mrb[0].mxu0 %v269
    %v340 = vpop.f32.mrb[0].mxu0
    %v341 = vadd.f32 %v265, %v340
    %v342 = vpop.f32.mrb[0].mxu0
    %343 = vmatprep.mubr.f32.mxu0 0.0
    %344 = vmatmul.mubr.f32.gmra.mrb[0].mxu0 %v272
    %v345 = vpop.f32.mrb[0].mxu0
    %v346 = vadd.f32 %v265, %v345
    %v347 = vpop.f32.mrb[0].mxu0
    %348 = vdwg.mxu0
    %v349 = vld [vmem:[%s7] sm:$0xff]
    %v350 = vld [vmem:[%s7 + $0x8] sm:$0xff]
    %v351 = vld [vmem:[%s7 + $0x10] sm:$0xff]
    %v352 = vld [vmem:[%s7 + $0x18] sm:$0xff]
    %vm353 = vcmask 261120
    %v355 = vsel %vm353, 0.0, 0
    %357 = vmatprep.subr.mxu0 0.0
    %358 = vmatpush1.msra.mxu0 %v349
    %359 = vmatprep.subr.mxu0 0.0
    %360 = vmatpush1.msra.mxu0 %v350
    %361 = vmatprep.subr.mxu0 0.0
    %362 = vmatpush1.msra.mxu0 %v351
    %363 = vmatprep.subr.mxu0 0.0
    %364 = vmatpush1.msra.mxu0 %v352
    %365 = vmatprep.subr.mxu0 0.0
    %366 = vmatpush1.msra.mxu0 0.0
    %367 = vmatprep.subr.mxu0 0.0
    %368 = vmatpush1.msra.mxu0 0.0
    %369 = vmatprep.subr.mxu0 0.0
    %370 = vmatpush1.msra.mxu0 0.0
    %371 = vmatprep.subr.mxu0 0.0
    %372 = vmatpush1.msra.mxu0 0.0
    %373 = vmatprep.subr.mxu0 0.0
    %374 = vmatpush1.msra.mxu0 0.0
    %375 = vmatprep.subr.mxu0 0.0
    %376 = vmatpush1.msra.mxu0 0.0
    %377 = vmatprep.subr.mxu0 0.0
    %378 = vmatpush1.msra.mxu0 0.0
    %379 = vmatprep.subr.mxu0 0.0
    %380 = vmatpush1.msra.mxu0 0.0
    %381 = vmatprep.subr.mxu0 0.0
    %382 = vmatpush1.msra.mxu0 0.0
    %383 = vmatprep.subr.mxu0 0.0
    %384 = vmatpush1.msra.mxu0 0.0
    %385 = vmatprep.subr.mxu0 0.0
    %386 = vmatpush1.msra.mxu0 0.0
    %387 = vmatprep.subr.mxu0 0.0
    %388 = vmatpush1.msra.mxu0 0.0
    %389 = vmatprep.subr.mxu0 0.0
    %390 = vmatpush1.msra.mxu0 0.0
    %391 = vmatprep.subr.mxu0 0.0
    %392 = vmatpush1.msra.mxu0 0.0
    %393 = vmatprep.subr.mxu0 0.0
    %394 = vmatpush1.msra.mxu0 0.0
    %395 = vmatprep.subr.mxu0 0.0
    %396 = vmatpush1.msra.mxu0 0.0
    %397 = vmatprep.subr.mxu0 0.0
    %398 = vmatpush1.msra.mxu0 0.0
    %399 = vmatprep.subr.mxu0 0.0
    %400 = vmatpush1.msra.mxu0 0.0
    %401 = vmatprep.subr.mxu0 0.0
    %402 = vmatpush1.msra.mxu0 0.0
    %403 = vmatprep.subr.mxu0 0.0
    %404 = vmatpush1.msra.mxu0 0.0
    %405 = vmatprep.subr.mxu0 0.0
    %406 = vmatpush1.msra.mxu0 0.0
    %407 = vmatprep.subr.mxu0 0.0
    %408 = vmatpush1.msra.mxu0 0.0
    %409 = vmatprep.subr.mxu0 0.0
    %410 = vmatpush1.msra.mxu0 0.0
    %411 = vmatprep.subr.mxu0 0.0
    %412 = vmatpush1.msra.mxu0 0.0
    %413 = vmatprep.subr.mxu0 0.0
    %414 = vmatpush1.msra.mxu0 0.0
    %415 = vmatprep.subr.mxu0 0.0
    %416 = vmatpush1.msra.mxu0 0.0
    %417 = vmatprep.subr.mxu0 0.0
    %418 = vmatpush1.msra.mxu0 0.0
    %419 = vmatprep.subr.mxu0 0.0
    %420 = vmatpush1.msra.mxu0 0.0
    %421 = vmatprep.mubr.f32.mxu0 0.0
    %422 = vmatmul.mubr.f32.gmra.mrb[0].mxu0 %v355
    %v423 = vpop.f32.mrb[0].mxu0
    %v424 = vadd.f32 0.0, %v423
    %v425 = vpop.f32.mrb[0].mxu0
    %426 = vdwg.mxu0
    %v427 = vadd.f32 %v341, %v424
    %v428 = vtanh.pop %v427
    %vm429 = vcmask 253952
    %430 = vst.msk [vmem:[#allocation2] sm:$0x1] %vm429, %v428
    %vm431 = vcmask 254977
    %432 = vst.msk [vmem:[#allocation2 + $0x7] sm:$0x2] %vm431, %v428
    %v434 = vsel %vm353, %v428, 0
    %436 = vmatprep.subr.mxu0 0.0
    %437 = vmatpush1.msra.mxu0 %v349
    %438 = vmatprep.subr.mxu0 0.0
    %439 = vmatpush1.msra.mxu0 %v350
    %440 = vmatprep.subr.mxu0 0.0
    %441 = vmatpush1.msra.mxu0 %v351
    %442 = vmatprep.subr.mxu0 0.0
    %443 = vmatpush1.msra.mxu0 %v352
    %444 = vmatprep.subr.mxu0 0.0
    %445 = vmatpush1.msra.mxu0 0.0
    %446 = vmatprep.subr.mxu0 0.0
    %447 = vmatpush1.msra.mxu0 0.0
    %448 = vmatprep.subr.mxu0 0.0
    %449 = vmatpush1.msra.mxu0 0.0
    %450 = vmatprep.subr.mxu0 0.0
    %451 = vmatpush1.msra.mxu0 0.0
    %452 = vmatprep.subr.mxu0 0.0
    %453 = vmatpush1.msra.mxu0 0.0
    %454 = vmatprep.subr.mxu0 0.0
    %455 = vmatpush1.msra.mxu0 0.0
    %456 = vmatprep.subr.mxu0 0.0
    %457 = vmatpush1.msra.mxu0 0.0
    %458 = vmatprep.subr.mxu0 0.0
    %459 = vmatpush1.msra.mxu0 0.0
    %460 = vmatprep.subr.mxu0 0.0
    %461 = vmatpush1.msra.mxu0 0.0
    %462 = vmatprep.subr.mxu0 0.0
    %463 = vmatpush1.msra.mxu0 0.0
    %464 = vmatprep.subr.mxu0 0.0
    %465 = vmatpush1.msra.mxu0 0.0
    %466 = vmatprep.subr.mxu0 0.0
    %467 = vmatpush1.msra.mxu0 0.0
    %468 = vmatprep.subr.mxu0 0.0
    %469 = vmatpush1.msra.mxu0 0.0
    %470 = vmatprep.subr.mxu0 0.0
    %471 = vmatpush1.msra.mxu0 0.0
    %472 = vmatprep.subr.mxu0 0.0
    %473 = vmatpush1.msra.mxu0 0.0
    %474 = vmatprep.subr.mxu0 0.0
    %475 = vmatpush1.msra.mxu0 0.0
    %476 = vmatprep.subr.mxu0 0.0
    %477 = vmatpush1.msra.mxu0 0.0
    %478 = vmatprep.subr.mxu0 0.0
    %479 = vmatpush1.msra.mxu0 0.0
    %480 = vmatprep.subr.mxu0 0.0
    %481 = vmatpush1.msra.mxu0 0.0
    %482 = vmatprep.subr.mxu0 0.0
    %483 = vmatpush1.msra.mxu0 0.0
    %484 = vmatprep.subr.mxu0 0.0
    %485 = vmatpush1.msra.mxu0 0.0
    %486 = vmatprep.subr.mxu0 0.0
    %487 = vmatpush1.msra.mxu0 0.0
    %488 = vmatprep.subr.mxu0 0.0
    %489 = vmatpush1.msra.mxu0 0.0
    %490 = vmatprep.subr.mxu0 0.0
    %491 = vmatpush1.msra.mxu0 0.0
    %492 = vmatprep.subr.mxu0 0.0
    %493 = vmatpush1.msra.mxu0 0.0
    %494 = vmatprep.subr.mxu0 0.0
    %495 = vmatpush1.msra.mxu0 0.0
    %496 = vmatprep.subr.mxu0 0.0
    %497 = vmatpush1.msra.mxu0 0.0
    %498 = vmatprep.subr.mxu0 0.0
    %499 = vmatpush1.msra.mxu0 0.0
    %500 = vmatprep.mubr.f32.mxu0 0.0
    %501 = vmatmul.mubr.f32.gmra.mrb[0].mxu0 %v434
    %v502 = vpop.f32.mrb[0].mxu0
    %v503 = vadd.f32 0.0, %v502
    %v504 = vpop.f32.mrb[0].mxu0
    %505 = vdwg.mxu0
    %v507 = vrot.slane %v503, 6
    %v509 = vadd.f32 %v341, %v507
    %v510 = vtanh.pop %v509
    %vm511 = vcmask 256002
    %512 = vst.msk [vmem:[#allocation2 - $0x1] sm:$0x4] %vm511, %v510
    %vm513 = vcmask 257027
    %514 = vst.msk [vmem:[#allocation2 + $0x6] sm:$0x8] %vm513, %v510
    %v516 = vrot.slane %v510, 2
    %v517 = vsel %vm353, %v516, 0
    %519 = vmatprep.subr.mxu0 0.0
    %520 = vmatpush1.msra.mxu0 %v349
    %521 = vmatprep.subr.mxu0 0.0
    %522 = vmatpush1.msra.mxu0 %v350
    %523 = vmatprep.subr.mxu0 0.0
    %524 = vmatpush1.msra.mxu0 %v351
    %525 = vmatprep.subr.mxu0 0.0
    %526 = vmatpush1.msra.mxu0 %v352
    %527 = vmatprep.subr.mxu0 0.0
    %528 = vmatpush1.msra.mxu0 0.0
    %529 = vmatprep.subr.mxu0 0.0
    %530 = vmatpush1.msra.mxu0 0.0
    %531 = vmatprep.subr.mxu0 0.0
    %532 = vmatpush1.msra.mxu0 0.0
    %533 = vmatprep.subr.mxu0 0.0
    %534 = vmatpush1.msra.mxu0 0.0
    %535 = vmatprep.subr.mxu0 0.0
    %536 = vmatpush1.msra.mxu0 0.0
    %537 = vmatprep.subr.mxu0 0.0
    %538 = vmatpush1.msra.mxu0 0.0
    %539 = vmatprep.subr.mxu0 0.0
    %540 = vmatpush1.msra.mxu0 0.0
    %541 = vmatprep.subr.mxu0 0.0
    %542 = vmatpush1.msra.mxu0 0.0
    %543 = vmatprep.subr.mxu0 0.0
    %544 = vmatpush1.msra.mxu0 0.0
    %545 = vmatprep.subr.mxu0 0.0
    %546 = vmatpush1.msra.mxu0 0.0
    %547 = vmatprep.subr.mxu0 0.0
    %548 = vmatpush1.msra.mxu0 0.0
    %549 = vmatprep.subr.mxu0 0.0
    %550 = vmatpush1.msra.mxu0 0.0
    %551 = vmatprep.subr.mxu0 0.0
    %552 = vmatpush1.msra.mxu0 0.0
    %553 = vmatprep.subr.mxu0 0.0
    %554 = vmatpush1.msra.mxu0 0.0
    %555 = vmatprep.subr.mxu0 0.0
    %556 = vmatpush1.msra.mxu0 0.0
    %557 = vmatprep.subr.mxu0 0.0
    %558 = vmatpush1.msra.mxu0 0.0
    %559 = vmatprep.subr.mxu0 0.0
    %560 = vmatpush1.msra.mxu0 0.0
    %561 = vmatprep.subr.mxu0 0.0
    %562 = vmatpush1.msra.mxu0 0.0
    %563 = vmatprep.subr.mxu0 0.0
    %564 = vmatpush1.msra.mxu0 0.0
    %565 = vmatprep.subr.mxu0 0.0
    %566 = vmatpush1.msra.mxu0 0.0
    %567 = vmatprep.subr.mxu0 0.0
    %568 = vmatpush1.msra.mxu0 0.0
    %569 = vmatprep.subr.mxu0 0.0
    %570 = vmatpush1.msra.mxu0 0.0
    %571 = vmatprep.subr.mxu0 0.0
    %572 = vmatpush1.msra.mxu0 0.0
    %573 = vmatprep.subr.mxu0 0.0
    %574 = vmatpush1.msra.mxu0 0.0
    %575 = vmatprep.subr.mxu0 0.0
    %576 = vmatpush1.msra.mxu0 0.0
    %577 = vmatprep.subr.mxu0 0.0
    %578 = vmatpush1.msra.mxu0 0.0
    %579 = vmatprep.subr.mxu0 0.0
    %580 = vmatpush1.msra.mxu0 0.0
    %581 = vmatprep.subr.mxu0 0.0
    %582 = vmatpush1.msra.mxu0 0.0
    %583 = vmatprep.mubr.f32.mxu0 0.0
    %584 = vmatmul.mubr.f32.gmra.mrb[0].mxu0 %v517
    %v585 = vpop.f32.mrb[0].mxu0
    %v586 = vadd.f32 0.0, %v585
    %v587 = vpop.f32.mrb[0].mxu0
    %588 = vdwg.mxu0
    %v590 = vrot.slane %v586, 4
    %v592 = vadd.f32 %v341, %v590
    %v593 = vtanh.pop %v592
    %vm594 = vcmask 258052
    %595 = vst.msk [vmem:[#allocation2 - $0x2] sm:$0x10] %vm594, %v593
    %vm596 = vcmask 259077
    %597 = vst.msk [vmem:[#allocation2 + $0x5] sm:$0x20] %vm596, %v593
    %v599 = vrot.slane %v593, 4
    %v600 = vsel %vm353, %v599, 0
    %602 = vmatprep.subr.mxu0 0.0
    %603 = vmatpush1.msra.mxu0 %v349
    %604 = vmatprep.subr.mxu0 0.0
    %605 = vmatpush1.msra.mxu0 %v350
    %606 = vmatprep.subr.mxu0 0.0
    %607 = vmatpush1.msra.mxu0 %v351
    %608 = vmatprep.subr.mxu0 0.0
    %609 = vmatpush1.msra.mxu0 %v352
    %610 = vmatprep.subr.mxu0 0.0
    %611 = vmatpush1.msra.mxu0 0.0
    %612 = vmatprep.subr.mxu0 0.0
    %613 = vmatpush1.msra.mxu0 0.0
    %614 = vmatprep.subr.mxu0 0.0
    %615 = vmatpush1.msra.mxu0 0.0
    %616 = vmatprep.subr.mxu0 0.0
    %617 = vmatpush1.msra.mxu0 0.0
    %618 = vmatprep.subr.mxu0 0.0
    %619 = vmatpush1.msra.mxu0 0.0
    %620 = vmatprep.subr.mxu0 0.0
    %621 = vmatpush1.msra.mxu0 0.0
    %622 = vmatprep.subr.mxu0 0.0
    %623 = vmatpush1.msra.mxu0 0.0
    %624 = vmatprep.subr.mxu0 0.0
    %625 = vmatpush1.msra.mxu0 0.0
    %626 = vmatprep.subr.mxu0 0.0
    %627 = vmatpush1.msra.mxu0 0.0
    %628 = vmatprep.subr.mxu0 0.0
    %629 = vmatpush1.msra.mxu0 0.0
    %630 = vmatprep.subr.mxu0 0.0
    %631 = vmatpush1.msra.mxu0 0.0
    %632 = vmatprep.subr.mxu0 0.0
    %633 = vmatpush1.msra.mxu0 0.0
    %634 = vmatprep.subr.mxu0 0.0
    %635 = vmatpush1.msra.mxu0 0.0
    %636 = vmatprep.subr.mxu0 0.0
    %637 = vmatpush1.msra.mxu0 0.0
    %638 = vmatprep.subr.mxu0 0.0
    %639 = vmatpush1.msra.mxu0 0.0
    %640 = vmatprep.subr.mxu0 0.0
    %641 = vmatpush1.msra.mxu0 0.0
    %642 = vmatprep.subr.mxu0 0.0
    %643 = vmatpush1.msra.mxu0 0.0
    %644 = vmatprep.subr.mxu0 0.0
    %645 = vmatpush1.msra.mxu0 0.0
    %646 = vmatprep.subr.mxu0 0.0
    %647 = vmatpush1.msra.mxu0 0.0
    %648 = vmatprep.subr.mxu0 0.0
    %649 = vmatpush1.msra.mxu0 0.0
    %650 = vmatprep.subr.mxu0 0.0
    %651 = vmatpush1.msra.mxu0 0.0
    %652 = vmatprep.subr.mxu0 0.0
    %653 = vmatpush1.msra.mxu0 0.0
    %654 = vmatprep.subr.mxu0 0.0
    %655 = vmatpush1.msra.mxu0 0.0
    %656 = vmatprep.subr.mxu0 0.0
    %657 = vmatpush1.msra.mxu0 0.0
    %658 = vmatprep.subr.mxu0 0.0
    %659 = vmatpush1.msra.mxu0 0.0
    %660 = vmatprep.subr.mxu0 0.0
    %661 = vmatpush1.msra.mxu0 0.0
    %662 = vmatprep.subr.mxu0 0.0
    %663 = vmatpush1.msra.mxu0 0.0
    %664 = vmatprep.subr.mxu0 0.0
    %665 = vmatpush1.msra.mxu0 0.0
    %666 = vmatprep.mubr.f32.mxu0 0.0
    %667 = vmatmul.mubr.f32.gmra.mrb[0].mxu0 %v600
    %v668 = vpop.f32.mrb[0].mxu0
    %v669 = vadd.f32 0.0, %v668
    %v670 = vpop.f32.mrb[0].mxu0
    %671 = vdwg.mxu0
    %v673 = vrot.slane %v669, 2
    %v675 = vadd.f32 %v341, %v673
    %v676 = vtanh.pop %v675
    %vm677 = vcmask 260102
    %678 = vst.msk [vmem:[#allocation2 - $0x3] sm:$0x40] %vm677, %v676
    %vm679 = vcmask 261127
    %680 = vst.msk [vmem:[#allocation2 + $0x4] sm:$0x80] %vm679, %v676
    %v682 = vrot.slane %v676, 6
    %v683 = vsel %vm353, %v682, 0
    %685 = vmatprep.subr.mxu0 0.0
    %686 = vmatpush1.msra.mxu0 %v349
    %687 = vmatprep.subr.mxu0 0.0
    %688 = vmatpush1.msra.mxu0 %v350
    %689 = vmatprep.subr.mxu0 0.0
    %690 = vmatpush1.msra.mxu0 %v351
    %691 = vmatprep.subr.mxu0 0.0
    %692 = vmatpush1.msra.mxu0 %v352
    %693 = vmatprep.subr.mxu0 0.0
    %694 = vmatpush1.msra.mxu0 0.0
    %695 = vmatprep.subr.mxu0 0.0
    %696 = vmatpush1.msra.mxu0 0.0
    %697 = vmatprep.subr.mxu0 0.0
    %698 = vmatpush1.msra.mxu0 0.0
    %699 = vmatprep.subr.mxu0 0.0
    %700 = vmatpush1.msra.mxu0 0.0
    %701 = vmatprep.subr.mxu0 0.0
    %702 = vmatpush1.msra.mxu0 0.0
    %703 = vmatprep.subr.mxu0 0.0
    %704 = vmatpush1.msra.mxu0 0.0
    %705 = vmatprep.subr.mxu0 0.0
    %706 = vmatpush1.msra.mxu0 0.0
    %707 = vmatprep.subr.mxu0 0.0
    %708 = vmatpush1.msra.mxu0 0.0
    %709 = vmatprep.subr.mxu0 0.0
    %710 = vmatpush1.msra.mxu0 0.0
    %711 = vmatprep.subr.mxu0 0.0
    %712 = vmatpush1.msra.mxu0 0.0
    %713 = vmatprep.subr.mxu0 0.0
    %714 = vmatpush1.msra.mxu0 0.0
    %715 = vmatprep.subr.mxu0 0.0
    %716 = vmatpush1.msra.mxu0 0.0
    %717 = vmatprep.subr.mxu0 0.0
    %718 = vmatpush1.msra.mxu0 0.0
    %719 = vmatprep.subr.mxu0 0.0
    %720 = vmatpush1.msra.mxu0 0.0
    %721 = vmatprep.subr.mxu0 0.0
    %722 = vmatpush1.msra.mxu0 0.0
    %723 = vmatprep.subr.mxu0 0.0
    %724 = vmatpush1.msra.mxu0 0.0
    %725 = vmatprep.subr.mxu0 0.0
    %726 = vmatpush1.msra.mxu0 0.0
    %727 = vmatprep.subr.mxu0 0.0
    %728 = vmatpush1.msra.mxu0 0.0
    %729 = vmatprep.subr.mxu0 0.0
    %730 = vmatpush1.msra.mxu0 0.0
    %731 = vmatprep.subr.mxu0 0.0
    %732 = vmatpush1.msra.mxu0 0.0
    %733 = vmatprep.subr.mxu0 0.0
    %734 = vmatpush1.msra.mxu0 0.0
    %735 = vmatprep.subr.mxu0 0.0
    %736 = vmatpush1.msra.mxu0 0.0
    %737 = vmatprep.subr.mxu0 0.0
    %738 = vmatpush1.msra.mxu0 0.0
    %739 = vmatprep.subr.mxu0 0.0
    %740 = vmatpush1.msra.mxu0 0.0
    %741 = vmatprep.subr.mxu0 0.0
    %742 = vmatpush1.msra.mxu0 0.0
    %743 = vmatprep.subr.mxu0 0.0
    %744 = vmatpush1.msra.mxu0 0.0
    %745 = vmatprep.subr.mxu0 0.0
    %746 = vmatpush1.msra.mxu0 0.0
    %747 = vmatprep.subr.mxu0 0.0
    %748 = vmatpush1.msra.mxu0 0.0
    %749 = vmatprep.mubr.f32.mxu0 0.0
    %750 = vmatmul.mubr.f32.gmra.mrb[0].mxu0 %v683
    %v751 = vpop.f32.mrb[0].mxu0
    %v752 = vadd.f32 0.0, %v751
    %v753 = vpop.f32.mrb[0].mxu0
    %754 = vdwg.mxu0
    %v755 = vadd.f32 %v346, %v752
    %v756 = vtanh.pop %v755
    %757 = vst.msk [vmem:[#allocation2 + $0x4] sm:$0x1] %vm429, %v756
    %758 = vst.msk [vmem:[#allocation2 + $0xb] sm:$0x2] %vm431, %v756
    %v760 = vsel %vm353, %v756, 0
    %762 = vmatprep.subr.mxu0 0.0
    %763 = vmatpush1.msra.mxu0 %v349
    %764 = vmatprep.subr.mxu0 0.0
    %765 = vmatpush1.msra.mxu0 %v350
    %766 = vmatprep.subr.mxu0 0.0
    %767 = vmatpush1.msra.mxu0 %v351
    %768 = vmatprep.subr.mxu0 0.0
    %769 = vmatpush1.msra.mxu0 %v352
    %770 = vmatprep.subr.mxu0 0.0
    %771 = vmatpush1.msra.mxu0 0.0
    %772 = vmatprep.subr.mxu0 0.0
    %773 = vmatpush1.msra.mxu0 0.0
    %774 = vmatprep.subr.mxu0 0.0
    %775 = vmatpush1.msra.mxu0 0.0
    %776 = vmatprep.subr.mxu0 0.0
    %777 = vmatpush1.msra.mxu0 0.0
    %778 = vmatprep.subr.mxu0 0.0
    %779 = vmatpush1.msra.mxu0 0.0
    %780 = vmatprep.subr.mxu0 0.0
    %781 = vmatpush1.msra.mxu0 0.0
    %782 = vmatprep.subr.mxu0 0.0
    %783 = vmatpush1.msra.mxu0 0.0
    %784 = vmatprep.subr.mxu0 0.0
    %785 = vmatpush1.msra.mxu0 0.0
    %786 = vmatprep.subr.mxu0 0.0
    %787 = vmatpush1.msra.mxu0 0.0
    %788 = vmatprep.subr.mxu0 0.0
    %789 = vmatpush1.msra.mxu0 0.0
    %790 = vmatprep.subr.mxu0 0.0
    %791 = vmatpush1.msra.mxu0 0.0
    %792 = vmatprep.subr.mxu0 0.0
    %793 = vmatpush1.msra.mxu0 0.0
    %794 = vmatprep.subr.mxu0 0.0
    %795 = vmatpush1.msra.mxu0 0.0
    %796 = vmatprep.subr.mxu0 0.0
    %797 = vmatpush1.msra.mxu0 0.0
    %798 = vmatprep.subr.mxu0 0.0
    %799 = vmatpush1.msra.mxu0 0.0
    %800 = vmatprep.subr.mxu0 0.0
    %801 = vmatpush1.msra.mxu0 0.0
    %802 = vmatprep.subr.mxu0 0.0
    %803 = vmatpush1.msra.mxu0 0.0
    %804 = vmatprep.subr.mxu0 0.0
    %805 = vmatpush1.msra.mxu0 0.0
    %806 = vmatprep.subr.mxu0 0.0
    %807 = vmatpush1.msra.mxu0 0.0
    %808 = vmatprep.subr.mxu0 0.0
    %809 = vmatpush1.msra.mxu0 0.0
    %810 = vmatprep.subr.mxu0 0.0
    %811 = vmatpush1.msra.mxu0 0.0
    %812 = vmatprep.subr.mxu0 0.0
    %813 = vmatpush1.msra.mxu0 0.0
    %814 = vmatprep.subr.mxu0 0.0
    %815 = vmatpush1.msra.mxu0 0.0
    %816 = vmatprep.subr.mxu0 0.0
    %817 = vmatpush1.msra.mxu0 0.0
    %818 = vmatprep.subr.mxu0 0.0
    %819 = vmatpush1.msra.mxu0 0.0
    %820 = vmatprep.subr.mxu0 0.0
    %821 = vmatpush1.msra.mxu0 0.0
    %822 = vmatprep.subr.mxu0 0.0
    %823 = vmatpush1.msra.mxu0 0.0
    %824 = vmatprep.subr.mxu0 0.0
    %825 = vmatpush1.msra.mxu0 0.0
    %826 = vmatprep.mubr.f32.mxu0 0.0
    %827 = vmatmul.mubr.f32.gmra.mrb[0].mxu0 %v760
    %v828 = vpop.f32.mrb[0].mxu0
    %v829 = vadd.f32 0.0, %v828
    %v830 = vpop.f32.mrb[0].mxu0
    %831 = vdwg.mxu0
    %v833 = vrot.slane %v829, 6
    %v835 = vadd.f32 %v346, %v833
    %v836 = vtanh.pop %v835
    %837 = vst.msk [vmem:[#allocation2 + $0x3] sm:$0x4] %vm511, %v836
    %838 = vst.msk [vmem:[#allocation2 + $0xa] sm:$0x8] %vm513, %v836
    %v840 = vrot.slane %v836, 2
    %v841 = vsel %vm353, %v840, 0
    %843 = vmatprep.subr.mxu0 0.0
    %844 = vmatpush1.msra.mxu0 %v349
    %845 = vmatprep.subr.mxu0 0.0
    %846 = vmatpush1.msra.mxu0 %v350
    %847 = vmatprep.subr.mxu0 0.0
    %848 = vmatpush1.msra.mxu0 %v351
    %849 = vmatprep.subr.mxu0 0.0
    %850 = vmatpush1.msra.mxu0 %v352
    %851 = vmatprep.subr.mxu0 0.0
    %852 = vmatpush1.msra.mxu0 0.0
    %853 = vmatprep.subr.mxu0 0.0
    %854 = vmatpush1.msra.mxu0 0.0
    %855 = vmatprep.subr.mxu0 0.0
    %856 = vmatpush1.msra.mxu0 0.0
    %857 = vmatprep.subr.mxu0 0.0
    %858 = vmatpush1.msra.mxu0 0.0
    %859 = vmatprep.subr.mxu0 0.0
    %860 = vmatpush1.msra.mxu0 0.0
    %861 = vmatprep.subr.mxu0 0.0
    %862 = vmatpush1.msra.mxu0 0.0
    %863 = vmatprep.subr.mxu0 0.0
    %864 = vmatpush1.msra.mxu0 0.0
    %865 = vmatprep.subr.mxu0 0.0
    %866 = vmatpush1.msra.mxu0 0.0
    %867 = vmatprep.subr.mxu0 0.0
    %868 = vmatpush1.msra.mxu0 0.0
    %869 = vmatprep.subr.mxu0 0.0
    %870 = vmatpush1.msra.mxu0 0.0
    %871 = vmatprep.subr.mxu0 0.0
    %872 = vmatpush1.msra.mxu0 0.0
    %873 = vmatprep.subr.mxu0 0.0
    %874 = vmatpush1.msra.mxu0 0.0
    %875 = vmatprep.subr.mxu0 0.0
    %876 = vmatpush1.msra.mxu0 0.0
    %877 = vmatprep.subr.mxu0 0.0
    %878 = vmatpush1.msra.mxu0 0.0
    %879 = vmatprep.subr.mxu0 0.0
    %880 = vmatpush1.msra.mxu0 0.0
    %881 = vmatprep.subr.mxu0 0.0
    %882 = vmatpush1.msra.mxu0 0.0
    %883 = vmatprep.subr.mxu0 0.0
    %884 = vmatpush1.msra.mxu0 0.0
    %885 = vmatprep.subr.mxu0 0.0
    %886 = vmatpush1.msra.mxu0 0.0
    %887 = vmatprep.subr.mxu0 0.0
    %888 = vmatpush1.msra.mxu0 0.0
    %889 = vmatprep.subr.mxu0 0.0
    %890 = vmatpush1.msra.mxu0 0.0
    %891 = vmatprep.subr.mxu0 0.0
    %892 = vmatpush1.msra.mxu0 0.0
    %893 = vmatprep.subr.mxu0 0.0
    %894 = vmatpush1.msra.mxu0 0.0
    %895 = vmatprep.subr.mxu0 0.0
    %896 = vmatpush1.msra.mxu0 0.0
    %897 = vmatprep.subr.mxu0 0.0
    %898 = vmatpush1.msra.mxu0 0.0
    %899 = vmatprep.subr.mxu0 0.0
    %900 = vmatpush1.msra.mxu0 0.0
    %901 = vmatprep.subr.mxu0 0.0
    %902 = vmatpush1.msra.mxu0 0.0
    %903 = vmatprep.subr.mxu0 0.0
    %904 = vmatpush1.msra.mxu0 0.0
    %905 = vmatprep.subr.mxu0 0.0
    %906 = vmatpush1.msra.mxu0 0.0
    %907 = vmatprep.mubr.f32.mxu0 0.0
    %908 = vmatmul.mubr.f32.gmra.mrb[0].mxu0 %v841
    %v909 = vpop.f32.mrb[0].mxu0
    %v910 = vadd.f32 0.0, %v909
    %v911 = vpop.f32.mrb[0].mxu0
    %912 = vdwg.mxu0
    %v914 = vrot.slane %v910, 4
    %v916 = vadd.f32 %v346, %v914
    %v917 = vtanh.pop %v916
    %918 = vst.msk [vmem:[#allocation2 + $0x2] sm:$0x10] %vm594, %v917
    %919 = vst.msk [vmem:[#allocation2 + $0x9] sm:$0x20] %vm596, %v917
    %v921 = vrot.slane %v917, 4
    %v922 = vsel %vm353, %v921, 0
    %924 = vmatprep.subr.mxu0 0.0
    %925 = vmatpush1.msra.mxu0 %v349
    %926 = vmatprep.subr.mxu0 0.0
    %927 = vmatpush1.msra.mxu0 %v350
    %928 = vmatprep.subr.mxu0 0.0
    %929 = vmatpush1.msra.mxu0 %v351
    %930 = vmatprep.subr.mxu0 0.0
    %931 = vmatpush1.msra.mxu0 %v352
    %932 = vmatprep.subr.mxu0 0.0
    %933 = vmatpush1.msra.mxu0 0.0
    %934 = vmatprep.subr.mxu0 0.0
    %935 = vmatpush1.msra.mxu0 0.0
    %936 = vmatprep.subr.mxu0 0.0
    %937 = vmatpush1.msra.mxu0 0.0
    %938 = vmatprep.subr.mxu0 0.0
    %939 = vmatpush1.msra.mxu0 0.0
    %940 = vmatprep.subr.mxu0 0.0
    %941 = vmatpush1.msra.mxu0 0.0
    %942 = vmatprep.subr.mxu0 0.0
    %943 = vmatpush1.msra.mxu0 0.0
    %944 = vmatprep.subr.mxu0 0.0
    %945 = vmatpush1.msra.mxu0 0.0
    %946 = vmatprep.subr.mxu0 0.0
    %947 = vmatpush1.msra.mxu0 0.0
    %948 = vmatprep.subr.mxu0 0.0
    %949 = vmatpush1.msra.mxu0 0.0
    %950 = vmatprep.subr.mxu0 0.0
    %951 = vmatpush1.msra.mxu0 0.0
    %952 = vmatprep.subr.mxu0 0.0
    %953 = vmatpush1.msra.mxu0 0.0
    %954 = vmatprep.subr.mxu0 0.0
    %955 = vmatpush1.msra.mxu0 0.0
    %956 = vmatprep.subr.mxu0 0.0
    %957 = vmatpush1.msra.mxu0 0.0
    %958 = vmatprep.subr.mxu0 0.0
    %959 = vmatpush1.msra.mxu0 0.0
    %960 = vmatprep.subr.mxu0 0.0
    %961 = vmatpush1.msra.mxu0 0.0
    %962 = vmatprep.subr.mxu0 0.0
    %963 = vmatpush1.msra.mxu0 0.0
    %964 = vmatprep.subr.mxu0 0.0
    %965 = vmatpush1.msra.mxu0 0.0
    %966 = vmatprep.subr.mxu0 0.0
    %967 = vmatpush1.msra.mxu0 0.0
    %968 = vmatprep.subr.mxu0 0.0
    %969 = vmatpush1.msra.mxu0 0.0
    %970 = vmatprep.subr.mxu0 0.0
    %971 = vmatpush1.msra.mxu0 0.0
    %972 = vmatprep.subr.mxu0 0.0
    %973 = vmatpush1.msra.mxu0 0.0
    %974 = vmatprep.subr.mxu0 0.0
    %975 = vmatpush1.msra.mxu0 0.0
    %976 = vmatprep.subr.mxu0 0.0
    %977 = vmatpush1.msra.mxu0 0.0
    %978 = vmatprep.subr.mxu0 0.0
    %979 = vmatpush1.msra.mxu0 0.0
    %980 = vmatprep.subr.mxu0 0.0
    %981 = vmatpush1.msra.mxu0 0.0
    %982 = vmatprep.subr.mxu0 0.0
    %983 = vmatpush1.msra.mxu0 0.0
    %984 = vmatprep.subr.mxu0 0.0
    %985 = vmatpush1.msra.mxu0 0.0
    %986 = vmatprep.subr.mxu0 0.0
    %987 = vmatpush1.msra.mxu0 0.0
    %988 = vmatprep.mubr.f32.mxu0 0.0
    %989 = vmatmul.mubr.f32.gmra.mrb[0].mxu0 %v922
    %v990 = vpop.f32.mrb[0].mxu0
    %v991 = vadd.f32 0.0, %v990
    %v992 = vpop.f32.mrb[0].mxu0
    %993 = vdwg.mxu0
    %v995 = vrot.slane %v991, 2
    %v997 = vadd.f32 %v346, %v995
    %v998 = vtanh.pop %v997
    %999 = vst.msk [vmem:[#allocation2 + $0x1] sm:$0x40] %vm677, %v998
    %1000 = vst.msk [vmem:[#allocation2 + $0x8] sm:$0x80] %vm679, %v998
    %v1001 = vld [vmem:[#allocation15] sm:$0xff]
    %v1002 = vld [vmem:[#allocation15 + $0x8] sm:$0xff]
    %v1004 = vsel %vm267, %v255, 0
    %1006 = vmatprep.subr.mxu0 0.0
    %1007 = vmatpush1.msra.mxu0 %v1001
    %1008 = vmatprep.subr.mxu0 0.0
    %1009 = vmatpush1.msra.mxu0 %v1002
    %1010 = vmatprep.subr.mxu0 0.0
    %1011 = vmatpush1.msra.mxu0 0.0
    %1012 = vmatprep.subr.mxu0 0.0
    %1013 = vmatpush1.msra.mxu0 0.0
    %1014 = vmatprep.subr.mxu0 0.0
    %1015 = vmatpush1.msra.mxu0 0.0
    %1016 = vmatprep.subr.mxu0 0.0
    %1017 = vmatpush1.msra.mxu0 0.0
    %1018 = vmatprep.subr.mxu0 0.0
    %1019 = vmatpush1.msra.mxu0 0.0
    %1020 = vmatprep.subr.mxu0 0.0
    %1021 = vmatpush1.msra.mxu0 0.0
    %1022 = vmatprep.subr.mxu0 0.0
    %1023 = vmatpush1.msra.mxu0 0.0
    %1024 = vmatprep.subr.mxu0 0.0
    %1025 = vmatpush1.msra.mxu0 0.0
    %1026 = vmatprep.subr.mxu0 0.0
    %1027 = vmatpush1.msra.mxu0 0.0
    %1028 = vmatprep.subr.mxu0 0.0
    %1029 = vmatpush1.msra.mxu0 0.0
    %1030 = vmatprep.subr.mxu0 0.0
    %1031 = vmatpush1.msra.mxu0 0.0
    %1032 = vmatprep.subr.mxu0 0.0
    %1033 = vmatpush1.msra.mxu0 0.0
    %1034 = vmatprep.subr.mxu0 0.0
    %1035 = vmatpush1.msra.mxu0 0.0
    %1036 = vmatprep.subr.mxu0 0.0
    %1037 = vmatpush1.msra.mxu0 0.0
    %1038 = vmatprep.subr.mxu0 0.0
    %1039 = vmatpush1.msra.mxu0 0.0
    %1040 = vmatprep.subr.mxu0 0.0
    %1041 = vmatpush1.msra.mxu0 0.0
    %1042 = vmatprep.subr.mxu0 0.0
    %1043 = vmatpush1.msra.mxu0 0.0
    %1044 = vmatprep.subr.mxu0 0.0
    %1045 = vmatpush1.msra.mxu0 0.0
    %1046 = vmatprep.subr.mxu0 0.0
    %1047 = vmatpush1.msra.mxu0 0.0
    %1048 = vmatprep.subr.mxu0 0.0
    %1049 = vmatpush1.msra.mxu0 0.0
    %1050 = vmatprep.subr.mxu0 0.0
    %1051 = vmatpush1.msra.mxu0 0.0
    %1052 = vmatprep.subr.mxu0 0.0
    %1053 = vmatpush1.msra.mxu0 0.0
    %1054 = vmatprep.subr.mxu0 0.0
    %1055 = vmatpush1.msra.mxu0 0.0
    %1056 = vmatprep.subr.mxu0 0.0
    %1057 = vmatpush1.msra.mxu0 0.0
    %1058 = vmatprep.subr.mxu0 0.0
    %1059 = vmatpush1.msra.mxu0 0.0
    %1060 = vmatprep.subr.mxu0 0.0
    %1061 = vmatpush1.msra.mxu0 0.0
    %1062 = vmatprep.subr.mxu0 0.0
    %1063 = vmatpush1.msra.mxu0 0.0
    %1064 = vmatprep.subr.mxu0 0.0
    %1065 = vmatpush1.msra.mxu0 0.0
    %1066 = vmatprep.subr.mxu0 0.0
    %1067 = vmatpush1.msra.mxu0 0.0
    %1068 = vmatprep.subr.mxu0 0.0
    %1069 = vmatpush1.msra.mxu0 0.0
    %1070 = vmatprep.mubr.f32.mxu0 0.0
    %1071 = vmatmul.mubr.f32.gmra.mrb[0].mxu0 %v1004
    %v1072 = vpop.f32.mrb[0].mxu0
    %v1073 = vadd.f32 0.0, %v1072
    %v1074 = vpop.f32.mrb[0].mxu0
    %1075 = vdwg.mxu0
    %v1076 = vld [vmem:[#allocation9] sm:$0xff]
    %v1077 = vld [vmem:[#allocation9 + $0x8] sm:$0x3f]
    %v1078 = vld [vmem:[#allocation13] sm:$0xff]
    %v1079 = vld [vmem:[#allocation13 + $0x8] sm:$0xff]
    %v1080 = vlaneseq
    %v1081 = vshrl.u32 %v1080, 7
    %v1082 = vsub.s32 0, %v1081
    %v1083 = vrot.slane %v1073, %v1082
    %v1085 = vsel %vm267, %v1076, 0
    %v1088 = vsel %vm267, %v1077, 0
    %1090 = vmatprep.subr.mxu0 0.0
    %1091 = vmatpush1.msra.mxu0 %v1078
    %1092 = vmatprep.subr.mxu0 0.0
    %1093 = vmatpush1.msra.mxu0 %v1079
    %1094 = vmatprep.subr.mxu0 0.0
    %1095 = vmatpush1.msra.mxu0 0.0
    %1096 = vmatprep.subr.mxu0 0.0
    %1097 = vmatpush1.msra.mxu0 0.0
    %1098 = vmatprep.subr.mxu0 0.0
    %1099 = vmatpush1.msra.mxu0 0.0
    %1100 = vmatprep.subr.mxu0 0.0
    %1101 = vmatpush1.msra.mxu0 0.0
    %1102 = vmatprep.subr.mxu0 0.0
    %1103 = vmatpush1.msra.mxu0 0.0
    %1104 = vmatprep.subr.mxu0 0.0
    %1105 = vmatpush1.msra.mxu0 0.0
    %1106 = vmatprep.subr.mxu0 0.0
    %1107 = vmatpush1.msra.mxu0 0.0
    %1108 = vmatprep.subr.mxu0 0.0
    %1109 = vmatpush1.msra.mxu0 0.0
    %1110 = vmatprep.subr.mxu0 0.0
    %1111 = vmatpush1.msra.mxu0 0.0
    %1112 = vmatprep.subr.mxu0 0.0
    %1113 = vmatpush1.msra.mxu0 0.0
    %1114 = vmatprep.subr.mxu0 0.0
    %1115 = vmatpush1.msra.mxu0 0.0
    %1116 = vmatprep.subr.mxu0 0.0
    %1117 = vmatpush1.msra.mxu0 0.0
    %1118 = vmatprep.subr.mxu0 0.0
    %1119 = vmatpush1.msra.mxu0 0.0
    %1120 = vmatprep.subr.mxu0 0.0
    %1121 = vmatpush1.msra.mxu0 0.0
    %1122 = vmatprep.subr.mxu0 0.0
    %1123 = vmatpush1.msra.mxu0 0.0
    %1124 = vmatprep.subr.mxu0 0.0
    %1125 = vmatpush1.msra.mxu0 0.0
    %1126 = vmatprep.subr.mxu0 0.0
    %1127 = vmatpush1.msra.mxu0 0.0
    %1128 = vmatprep.subr.mxu0 0.0
    %1129 = vmatpush1.msra.mxu0 0.0
    %1130 = vmatprep.subr.mxu0 0.0
    %1131 = vmatpush1.msra.mxu0 0.0
    %1132 = vmatprep.subr.mxu0 0.0
    %1133 = vmatpush1.msra.mxu0 0.0
    %1134 = vmatprep.subr.mxu0 0.0
    %1135 = vmatpush1.msra.mxu0 0.0
    %1136 = vmatprep.subr.mxu0 0.0
    %1137 = vmatpush1.msra.mxu0 0.0
    %1138 = vmatprep.subr.mxu0 0.0
    %1139 = vmatpush1.msra.mxu0 0.0
    %1140 = vmatprep.subr.mxu0 0.0
    %1141 = vmatpush1.msra.mxu0 0.0
    %1142 = vmatprep.subr.mxu0 0.0
    %1143 = vmatpush1.msra.mxu0 0.0
    %1144 = vmatprep.subr.mxu0 0.0
    %1145 = vmatpush1.msra.mxu0 0.0
    %1146 = vmatprep.subr.mxu0 0.0
    %1147 = vmatpush1.msra.mxu0 0.0
    %1148 = vmatprep.subr.mxu0 0.0
    %1149 = vmatpush1.msra.mxu0 0.0
    %1150 = vmatprep.subr.mxu0 0.0
    %1151 = vmatpush1.msra.mxu0 0.0
    %1152 = vmatprep.subr.mxu0 0.0
    %1153 = vmatpush1.msra.mxu0 0.0
    %1154 = vmatprep.mubr.f32.mxu0 0.0
    %1155 = vmatmul.mubr.f32.gmra.mrb[0].mxu0 %v1085
    %v1156 = vpop.f32.mrb[0].mxu0
    %v1157 = vadd.f32 %v1083, %v1156
    %v1158 = vpop.f32.mrb[0].mxu0
    %1159 = vmatprep.mubr.f32.mxu0 0.0
    %1160 = vmatmul.mubr.f32.gmra.mrb[0].mxu0 %v1088
    %v1161 = vpop.f32.mrb[0].mxu0
    %v1162 = vadd.f32 %v1083, %v1161
    %v1163 = vpop.f32.mrb[0].mxu0
    %1164 = vdwg.mxu0
    %v1165 = vld [vmem:[%s12] sm:$0x1]
    %v1167 = vlaneseq
    %v1168 = vshrl.u32 %v1167, 7
    %v1169 = vsub.s32 0, %v1168
    %v1170 = vrot.slane %v1165, %v1169
    %v1172 = vadd.f32 %v1157, %v1170
    %v1173 = vadd.f32 %v1162, %v1170
    %v1174 = vld [vmem:[%s11] sm:$0xff]
    %v1175 = vld [vmem:[%s11 + $0x8] sm:$0xff]
    %v1176 = vld [vmem:[%s11 + $0x10] sm:$0xff]
    %v1177 = vld [vmem:[%s11 + $0x18] sm:$0xff]
    %v1179 = vrot.slane %v998, 6
    %v1180 = vsel %vm353, %v1179, 0
    %1182 = vmatprep.subr.mxu0 0.0
    %1183 = vmatpush1.msra.mxu0 %v1174
    %1184 = vmatprep.subr.mxu0 0.0
    %1185 = vmatpush1.msra.mxu0 %v1175
    %1186 = vmatprep.subr.mxu0 0.0
    %1187 = vmatpush1.msra.mxu0 %v1176
    %1188 = vmatprep.subr.mxu0 0.0
    %1189 = vmatpush1.msra.mxu0 %v1177
    %1190 = vmatprep.subr.mxu0 0.0
    %1191 = vmatpush1.msra.mxu0 0.0
    %1192 = vmatprep.subr.mxu0 0.0
    %1193 = vmatpush1.msra.mxu0 0.0
    %1194 = vmatprep.subr.mxu0 0.0
    %1195 = vmatpush1.msra.mxu0 0.0
    %1196 = vmatprep.subr.mxu0 0.0
    %1197 = vmatpush1.msra.mxu0 0.0
    %1198 = vmatprep.subr.mxu0 0.0
    %1199 = vmatpush1.msra.mxu0 0.0
    %1200 = vmatprep.subr.mxu0 0.0
    %1201 = vmatpush1.msra.mxu0 0.0
    %1202 = vmatprep.subr.mxu0 0.0
    %1203 = vmatpush1.msra.mxu0 0.0
    %1204 = vmatprep.subr.mxu0 0.0
    %1205 = vmatpush1.msra.mxu0 0.0
    %1206 = vmatprep.subr.mxu0 0.0
    %1207 = vmatpush1.msra.mxu0 0.0
    %1208 = vmatprep.subr.mxu0 0.0
    %1209 = vmatpush1.msra.mxu0 0.0
    %1210 = vmatprep.subr.mxu0 0.0
    %1211 = vmatpush1.msra.mxu0 0.0
    %1212 = vmatprep.subr.mxu0 0.0
    %1213 = vmatpush1.msra.mxu0 0.0
    %1214 = vmatprep.subr.mxu0 0.0
    %1215 = vmatpush1.msra.mxu0 0.0
    %1216 = vmatprep.subr.mxu0 0.0
    %1217 = vmatpush1.msra.mxu0 0.0
    %1218 = vmatprep.subr.mxu0 0.0
    %1219 = vmatpush1.msra.mxu0 0.0
    %1220 = vmatprep.subr.mxu0 0.0
    %1221 = vmatpush1.msra.mxu0 0.0
    %1222 = vmatprep.subr.mxu0 0.0
    %1223 = vmatpush1.msra.mxu0 0.0
    %1224 = vmatprep.subr.mxu0 0.0
    %1225 = vmatpush1.msra.mxu0 0.0
    %1226 = vmatprep.subr.mxu0 0.0
    %1227 = vmatpush1.msra.mxu0 0.0
    %1228 = vmatprep.subr.mxu0 0.0
    %1229 = vmatpush1.msra.mxu0 0.0
    %1230 = vmatprep.subr.mxu0 0.0
    %1231 = vmatpush1.msra.mxu0 0.0
    %1232 = vmatprep.subr.mxu0 0.0
    %1233 = vmatpush1.msra.mxu0 0.0
    %1234 = vmatprep.subr.mxu0 0.0
    %1235 = vmatpush1.msra.mxu0 0.0
    %1236 = vmatprep.subr.mxu0 0.0
    %1237 = vmatpush1.msra.mxu0 0.0
    %1238 = vmatprep.subr.mxu0 0.0
    %1239 = vmatpush1.msra.mxu0 0.0
    %1240 = vmatprep.subr.mxu0 0.0
    %1241 = vmatpush1.msra.mxu0 0.0
    %1242 = vmatprep.subr.mxu0 0.0
    %1243 = vmatpush1.msra.mxu0 0.0
    %1244 = vmatprep.subr.mxu0 0.0
    %1245 = vmatpush1.msra.mxu0 0.0
    %1246 = vmatprep.mubr.f32.mxu0 0.0
    %1247 = vmatmul.mubr.f32.gmra.mrb[0].mxu0 %v1180
    %v1248 = vpop.f32.mrb[0].mxu0
    %v1249 = vadd.f32 0.0, %v1248
    %v1250 = vpop.f32.mrb[0].mxu0
    %1251 = vdwg.mxu0
    %v1252 = vadd.f32 %v1172, %v1249
    %v1253 = vtanh.pop %v1252
    %1254 = vst.msk [vmem:[#allocation3] sm:$0x1] %vm429, %v1253
    %1255 = vst.msk [vmem:[#allocation3 + $0x6] sm:$0x2] %vm431, %v1253
    %v1257 = vsel %vm353, %v1253, 0
    %1259 = vmatprep.subr.mxu0 0.0
    %1260 = vmatpush1.msra.mxu0 %v1174
    %1261 = vmatprep.subr.mxu0 0.0
    %1262 = vmatpush1.msra.mxu0 %v1175
    %1263 = vmatprep.subr.mxu0 0.0
    %1264 = vmatpush1.msra.mxu0 %v1176
    %1265 = vmatprep.subr.mxu0 0.0
    %1266 = vmatpush1.msra.mxu0 %v1177
    %1267 = vmatprep.subr.mxu0 0.0
    %1268 = vmatpush1.msra.mxu0 0.0
    %1269 = vmatprep.subr.mxu0 0.0
    %1270 = vmatpush1.msra.mxu0 0.0
    %1271 = vmatprep.subr.mxu0 0.0
    %1272 = vmatpush1.msra.mxu0 0.0
    %1273 = vmatprep.subr.mxu0 0.0
    %1274 = vmatpush1.msra.mxu0 0.0
    %1275 = vmatprep.subr.mxu0 0.0
    %1276 = vmatpush1.msra.mxu0 0.0
    %1277 = vmatprep.subr.mxu0 0.0
    %1278 = vmatpush1.msra.mxu0 0.0
    %1279 = vmatprep.subr.mxu0 0.0
    %1280 = vmatpush1.msra.mxu0 0.0
    %1281 = vmatprep.subr.mxu0 0.0
    %1282 = vmatpush1.msra.mxu0 0.0
    %1283 = vmatprep.subr.mxu0 0.0
    %1284 = vmatpush1.msra.mxu0 0.0
    %1285 = vmatprep.subr.mxu0 0.0
    %1286 = vmatpush1.msra.mxu0 0.0
    %1287 = vmatprep.subr.mxu0 0.0
    %1288 = vmatpush1.msra.mxu0 0.0
    %1289 = vmatprep.subr.mxu0 0.0
    %1290 = vmatpush1.msra.mxu0 0.0
    %1291 = vmatprep.subr.mxu0 0.0
    %1292 = vmatpush1.msra.mxu0 0.0
    %1293 = vmatprep.subr.mxu0 0.0
    %1294 = vmatpush1.msra.mxu0 0.0
    %1295 = vmatprep.subr.mxu0 0.0
    %1296 = vmatpush1.msra.mxu0 0.0
    %1297 = vmatprep.subr.mxu0 0.0
    %1298 = vmatpush1.msra.mxu0 0.0
    %1299 = vmatprep.subr.mxu0 0.0
    %1300 = vmatpush1.msra.mxu0 0.0
    %1301 = vmatprep.subr.mxu0 0.0
    %1302 = vmatpush1.msra.mxu0 0.0
    %1303 = vmatprep.subr.mxu0 0.0
    %1304 = vmatpush1.msra.mxu0 0.0
    %1305 = vmatprep.subr.mxu0 0.0
    %1306 = vmatpush1.msra.mxu0 0.0
    %1307 = vmatprep.subr.mxu0 0.0
    %1308 = vmatpush1.msra.mxu0 0.0
    %1309 = vmatprep.subr.mxu0 0.0
    %1310 = vmatpush1.msra.mxu0 0.0
    %1311 = vmatprep.subr.mxu0 0.0
    %1312 = vmatpush1.msra.mxu0 0.0
    %1313 = vmatprep.subr.mxu0 0.0
    %1314 = vmatpush1.msra.mxu0 0.0
    %1315 = vmatprep.subr.mxu0 0.0
    %1316 = vmatpush1.msra.mxu0 0.0
    %1317 = vmatprep.subr.mxu0 0.0
    %1318 = vmatpush1.msra.mxu0 0.0
    %1319 = vmatprep.subr.mxu0 0.0
    %1320 = vmatpush1.msra.mxu0 0.0
    %1321 = vmatprep.subr.mxu0 0.0
    %1322 = vmatpush1.msra.mxu0 0.0
    %1323 = vmatprep.mubr.f32.mxu0 0.0
    %1324 = vmatmul.mubr.f32.gmra.mrb[0].mxu0 %v1257
    %v1325 = vpop.f32.mrb[0].mxu0
    %v1326 = vadd.f32 0.0, %v1325
    %v1327 = vpop.f32.mrb[0].mxu0
    %1328 = vdwg.mxu0
    %v1330 = vrot.slane %v1326, 6
    %v1332 = vadd.f32 %v1172, %v1330
    %v1333 = vtanh.pop %v1332
    %1334 = vst.msk [vmem:[#allocation3 - $0x1] sm:$0x4] %vm511, %v1333
    %1335 = vst.msk [vmem:[#allocation3 + $0x5] sm:$0x8] %vm513, %v1333
    %v1337 = vrot.slane %v1333, 2
    %v1338 = vsel %vm353, %v1337, 0
    %1340 = vmatprep.subr.mxu0 0.0
    %1341 = vmatpush1.msra.mxu0 %v1174
    %1342 = vmatprep.subr.mxu0 0.0
    %1343 = vmatpush1.msra.mxu0 %v1175
    %1344 = vmatprep.subr.mxu0 0.0
    %1345 = vmatpush1.msra.mxu0 %v1176
    %1346 = vmatprep.subr.mxu0 0.0
    %1347 = vmatpush1.msra.mxu0 %v1177
    %1348 = vmatprep.subr.mxu0 0.0
    %1349 = vmatpush1.msra.mxu0 0.0
    %1350 = vmatprep.subr.mxu0 0.0
    %1351 = vmatpush1.msra.mxu0 0.0
    %1352 = vmatprep.subr.mxu0 0.0
    %1353 = vmatpush1.msra.mxu0 0.0
    %1354 = vmatprep.subr.mxu0 0.0
    %1355 = vmatpush1.msra.mxu0 0.0
    %1356 = vmatprep.subr.mxu0 0.0
    %1357 = vmatpush1.msra.mxu0 0.0
    %1358 = vmatprep.subr.mxu0 0.0
    %1359 = vmatpush1.msra.mxu0 0.0
    %1360 = vmatprep.subr.mxu0 0.0
    %1361 = vmatpush1.msra.mxu0 0.0
    %1362 = vmatprep.subr.mxu0 0.0
    %1363 = vmatpush1.msra.mxu0 0.0
    %1364 = vmatprep.subr.mxu0 0.0
    %1365 = vmatpush1.msra.mxu0 0.0
    %1366 = vmatprep.subr.mxu0 0.0
    %1367 = vmatpush1.msra.mxu0 0.0
    %1368 = vmatprep.subr.mxu0 0.0
    %1369 = vmatpush1.msra.mxu0 0.0
    %1370 = vmatprep.subr.mxu0 0.0
    %1371 = vmatpush1.msra.mxu0 0.0
    %1372 = vmatprep.subr.mxu0 0.0
    %1373 = vmatpush1.msra.mxu0 0.0
    %1374 = vmatprep.subr.mxu0 0.0
    %1375 = vmatpush1.msra.mxu0 0.0
    %1376 = vmatprep.subr.mxu0 0.0
    %1377 = vmatpush1.msra.mxu0 0.0
    %1378 = vmatprep.subr.mxu0 0.0
    %1379 = vmatpush1.msra.mxu0 0.0
    %1380 = vmatprep.subr.mxu0 0.0
    %1381 = vmatpush1.msra.mxu0 0.0
    %1382 = vmatprep.subr.mxu0 0.0
    %1383 = vmatpush1.msra.mxu0 0.0
    %1384 = vmatprep.subr.mxu0 0.0
    %1385 = vmatpush1.msra.mxu0 0.0
    %1386 = vmatprep.subr.mxu0 0.0
    %1387 = vmatpush1.msra.mxu0 0.0
    %1388 = vmatprep.subr.mxu0 0.0
    %1389 = vmatpush1.msra.mxu0 0.0
    %1390 = vmatprep.subr.mxu0 0.0
    %1391 = vmatpush1.msra.mxu0 0.0
    %1392 = vmatprep.subr.mxu0 0.0
    %1393 = vmatpush1.msra.mxu0 0.0
    %1394 = vmatprep.subr.mxu0 0.0
    %1395 = vmatpush1.msra.mxu0 0.0
    %1396 = vmatprep.subr.mxu0 0.0
    %1397 = vmatpush1.msra.mxu0 0.0
    %1398 = vmatprep.subr.mxu0 0.0
    %1399 = vmatpush1.msra.mxu0 0.0
    %1400 = vmatprep.subr.mxu0 0.0
    %1401 = vmatpush1.msra.mxu0 0.0
    %1402 = vmatprep.subr.mxu0 0.0
    %1403 = vmatpush1.msra.mxu0 0.0
    %1404 = vmatprep.mubr.f32.mxu0 0.0
    %1405 = vmatmul.mubr.f32.gmra.mrb[0].mxu0 %v1338
    %v1406 = vpop.f32.mrb[0].mxu0
    %v1407 = vadd.f32 0.0, %v1406
    %v1408 = vpop.f32.mrb[0].mxu0
    %1409 = vdwg.mxu0
    %v1411 = vrot.slane %v1407, 4
    %v1413 = vadd.f32 %v1172, %v1411
    %v1414 = vtanh.pop %v1413
    %1415 = vst.msk [vmem:[#allocation3 - $0x2] sm:$0x10] %vm594, %v1414
    %1416 = vst.msk [vmem:[#allocation3 + $0x4] sm:$0x20] %vm596, %v1414
    %v1418 = vrot.slane %v1414, 4
    %v1419 = vsel %vm353, %v1418, 0
    %1421 = vmatprep.subr.mxu0 0.0
    %1422 = vmatpush1.msra.mxu0 %v1174
    %1423 = vmatprep.subr.mxu0 0.0
    %1424 = vmatpush1.msra.mxu0 %v1175
    %1425 = vmatprep.subr.mxu0 0.0
    %1426 = vmatpush1.msra.mxu0 %v1176
    %1427 = vmatprep.subr.mxu0 0.0
    %1428 = vmatpush1.msra.mxu0 %v1177
    %1429 = vmatprep.subr.mxu0 0.0
    %1430 = vmatpush1.msra.mxu0 0.0
    %1431 = vmatprep.subr.mxu0 0.0
    %1432 = vmatpush1.msra.mxu0 0.0
    %1433 = vmatprep.subr.mxu0 0.0
    %1434 = vmatpush1.msra.mxu0 0.0
    %1435 = vmatprep.subr.mxu0 0.0
    %1436 = vmatpush1.msra.mxu0 0.0
    %1437 = vmatprep.subr.mxu0 0.0
    %1438 = vmatpush1.msra.mxu0 0.0
    %1439 = vmatprep.subr.mxu0 0.0
    %1440 = vmatpush1.msra.mxu0 0.0
    %1441 = vmatprep.subr.mxu0 0.0
    %1442 = vmatpush1.msra.mxu0 0.0
    %1443 = vmatprep.subr.mxu0 0.0
    %1444 = vmatpush1.msra.mxu0 0.0
    %1445 = vmatprep.subr.mxu0 0.0
    %1446 = vmatpush1.msra.mxu0 0.0
    %1447 = vmatprep.subr.mxu0 0.0
    %1448 = vmatpush1.msra.mxu0 0.0
    %1449 = vmatprep.subr.mxu0 0.0
    %1450 = vmatpush1.msra.mxu0 0.0
    %1451 = vmatprep.subr.mxu0 0.0
    %1452 = vmatpush1.msra.mxu0 0.0
    %1453 = vmatprep.subr.mxu0 0.0
    %1454 = vmatpush1.msra.mxu0 0.0
    %1455 = vmatprep.subr.mxu0 0.0
    %1456 = vmatpush1.msra.mxu0 0.0
    %1457 = vmatprep.subr.mxu0 0.0
    %1458 = vmatpush1.msra.mxu0 0.0
    %1459 = vmatprep.subr.mxu0 0.0
    %1460 = vmatpush1.msra.mxu0 0.0
    %1461 = vmatprep.subr.mxu0 0.0
    %1462 = vmatpush1.msra.mxu0 0.0
    %1463 = vmatprep.subr.mxu0 0.0
    %1464 = vmatpush1.msra.mxu0 0.0
    %1465 = vmatprep.subr.mxu0 0.0
    %1466 = vmatpush1.msra.mxu0 0.0
    %1467 = vmatprep.subr.mxu0 0.0
    %1468 = vmatpush1.msra.mxu0 0.0
    %1469 = vmatprep.subr.mxu0 0.0
    %1470 = vmatpush1.msra.mxu0 0.0
    %1471 = vmatprep.subr.mxu0 0.0
    %1472 = vmatpush1.msra.mxu0 0.0
    %1473 = vmatprep.subr.mxu0 0.0
    %1474 = vmatpush1.msra.mxu0 0.0
    %1475 = vmatprep.subr.mxu0 0.0
    %1476 = vmatpush1.msra.mxu0 0.0
    %1477 = vmatprep.subr.mxu0 0.0
    %1478 = vmatpush1.msra.mxu0 0.0
    %1479 = vmatprep.subr.mxu0 0.0
    %1480 = vmatpush1.msra.mxu0 0.0
    %1481 = vmatprep.subr.mxu0 0.0
    %1482 = vmatpush1.msra.mxu0 0.0
    %1483 = vmatprep.subr.mxu0 0.0
    %1484 = vmatpush1.msra.mxu0 0.0
    %1485 = vmatprep.mubr.f32.mxu0 0.0
    %1486 = vmatmul.mubr.f32.gmra.mrb[0].mxu0 %v1419
    %v1487 = vpop.f32.mrb[0].mxu0
    %v1488 = vadd.f32 0.0, %v1487
    %v1489 = vpop.f32.mrb[0].mxu0
    %1490 = vdwg.mxu0
    %v1492 = vrot.slane %v1488, 2
    %v1494 = vadd.f32 %v1172, %v1492
    %v1495 = vtanh.pop %v1494
    %1496 = vst.msk [vmem:[#allocation3 - $0x3] sm:$0x40] %vm677, %v1495
    %1497 = vst.msk [vmem:[#allocation3 + $0x3] sm:$0x80] %vm679, %v1495
    %v1499 = vrot.slane %v1495, 6
    %v1500 = vsel %vm353, %v1499, 0
    %1502 = vmatprep.subr.mxu0 0.0
    %1503 = vmatpush1.msra.mxu0 %v1174
    %1504 = vmatprep.subr.mxu0 0.0
    %1505 = vmatpush1.msra.mxu0 %v1175
    %1506 = vmatprep.subr.mxu0 0.0
    %1507 = vmatpush1.msra.mxu0 %v1176
    %1508 = vmatprep.subr.mxu0 0.0
    %1509 = vmatpush1.msra.mxu0 %v1177
    %1510 = vmatprep.subr.mxu0 0.0
    %1511 = vmatpush1.msra.mxu0 0.0
    %1512 = vmatprep.subr.mxu0 0.0
    %1513 = vmatpush1.msra.mxu0 0.0
    %1514 = vmatprep.subr.mxu0 0.0
    %1515 = vmatpush1.msra.mxu0 0.0
    %1516 = vmatprep.subr.mxu0 0.0
    %1517 = vmatpush1.msra.mxu0 0.0
    %1518 = vmatprep.subr.mxu0 0.0
    %1519 = vmatpush1.msra.mxu0 0.0
    %1520 = vmatprep.subr.mxu0 0.0
    %1521 = vmatpush1.msra.mxu0 0.0
    %1522 = vmatprep.subr.mxu0 0.0
    %1523 = vmatpush1.msra.mxu0 0.0
    %1524 = vmatprep.subr.mxu0 0.0
    %1525 = vmatpush1.msra.mxu0 0.0
    %1526 = vmatprep.subr.mxu0 0.0
    %1527 = vmatpush1.msra.mxu0 0.0
    %1528 = vmatprep.subr.mxu0 0.0
    %1529 = vmatpush1.msra.mxu0 0.0
    %1530 = vmatprep.subr.mxu0 0.0
    %1531 = vmatpush1.msra.mxu0 0.0
    %1532 = vmatprep.subr.mxu0 0.0
    %1533 = vmatpush1.msra.mxu0 0.0
    %1534 = vmatprep.subr.mxu0 0.0
    %1535 = vmatpush1.msra.mxu0 0.0
    %1536 = vmatprep.subr.mxu0 0.0
    %1537 = vmatpush1.msra.mxu0 0.0
    %1538 = vmatprep.subr.mxu0 0.0
    %1539 = vmatpush1.msra.mxu0 0.0
    %1540 = vmatprep.subr.mxu0 0.0
    %1541 = vmatpush1.msra.mxu0 0.0
    %1542 = vmatprep.subr.mxu0 0.0
    %1543 = vmatpush1.msra.mxu0 0.0
    %1544 = vmatprep.subr.mxu0 0.0
    %1545 = vmatpush1.msra.mxu0 0.0
    %1546 = vmatprep.subr.mxu0 0.0
    %1547 = vmatpush1.msra.mxu0 0.0
    %1548 = vmatprep.subr.mxu0 0.0
    %1549 = vmatpush1.msra.mxu0 0.0
    %1550 = vmatprep.subr.mxu0 0.0
    %1551 = vmatpush1.msra.mxu0 0.0
    %1552 = vmatprep.subr.mxu0 0.0
    %1553 = vmatpush1.msra.mxu0 0.0
    %1554 = vmatprep.subr.mxu0 0.0
    %1555 = vmatpush1.msra.mxu0 0.0
    %1556 = vmatprep.subr.mxu0 0.0
    %1557 = vmatpush1.msra.mxu0 0.0
    %1558 = vmatprep.subr.mxu0 0.0
    %1559 = vmatpush1.msra.mxu0 0.0
    %1560 = vmatprep.subr.mxu0 0.0
    %1561 = vmatpush1.msra.mxu0 0.0
    %1562 = vmatprep.subr.mxu0 0.0
    %1563 = vmatpush1.msra.mxu0 0.0
    %1564 = vmatprep.subr.mxu0 0.0
    %1565 = vmatpush1.msra.mxu0 0.0
    %1566 = vmatprep.mubr.f32.mxu0 0.0
    %1567 = vmatmul.mubr.f32.gmra.mrb[0].mxu0 %v1500
    %v1568 = vpop.f32.mrb[0].mxu0
    %v1569 = vadd.f32 0.0, %v1568
    %v1570 = vpop.f32.mrb[0].mxu0
    %1571 = vdwg.mxu0
    %v1572 = vadd.f32 %v1173, %v1569
    %v1573 = vtanh.pop %v1572
    %1574 = vst.msk [vmem:[#allocation3 + $0x4] sm:$0x1] %vm429, %v1573
    %1575 = vst.msk [vmem:[#allocation3 + $0xa] sm:$0x2] %vm431, %v1573
    %v1577 = vsel %vm353, %v1573, 0
    %1579 = vmatprep.subr.mxu0 0.0
    %1580 = vmatpush1.msra.mxu0 %v1174
    %1581 = vmatprep.subr.mxu0 0.0
    %1582 = vmatpush1.msra.mxu0 %v1175
    %1583 = vmatprep.subr.mxu0 0.0
    %1584 = vmatpush1.msra.mxu0 %v1176
    %1585 = vmatprep.subr.mxu0 0.0
    %1586 = vmatpush1.msra.mxu0 %v1177
    %1587 = vmatprep.subr.mxu0 0.0
    %1588 = vmatpush1.msra.mxu0 0.0
    %1589 = vmatprep.subr.mxu0 0.0
    %1590 = vmatpush1.msra.mxu0 0.0
    %1591 = vmatprep.subr.mxu0 0.0
    %1592 = vmatpush1.msra.mxu0 0.0
    %1593 = vmatprep.subr.mxu0 0.0
    %1594 = vmatpush1.msra.mxu0 0.0
    %1595 = vmatprep.subr.mxu0 0.0
    %1596 = vmatpush1.msra.mxu0 0.0
    %1597 = vmatprep.subr.mxu0 0.0
    %1598 = vmatpush1.msra.mxu0 0.0
    %1599 = vmatprep.subr.mxu0 0.0
    %1600 = vmatpush1.msra.mxu0 0.0
    %1601 = vmatprep.subr.mxu0 0.0
    %1602 = vmatpush1.msra.mxu0 0.0
    %1603 = vmatprep.subr.mxu0 0.0
    %1604 = vmatpush1.msra.mxu0 0.0
    %1605 = vmatprep.subr.mxu0 0.0
    %1606 = vmatpush1.msra.mxu0 0.0
    %1607 = vmatprep.subr.mxu0 0.0
    %1608 = vmatpush1.msra.mxu0 0.0
    %1609 = vmatprep.subr.mxu0 0.0
    %1610 = vmatpush1.msra.mxu0 0.0
    %1611 = vmatprep.subr.mxu0 0.0
    %1612 = vmatpush1.msra.mxu0 0.0
    %1613 = vmatprep.subr.mxu0 0.0
    %1614 = vmatpush1.msra.mxu0 0.0
    %1615 = vmatprep.subr.mxu0 0.0
    %1616 = vmatpush1.msra.mxu0 0.0
    %1617 = vmatprep.subr.mxu0 0.0
    %1618 = vmatpush1.msra.mxu0 0.0
    %1619 = vmatprep.subr.mxu0 0.0
    %1620 = vmatpush1.msra.mxu0 0.0
    %1621 = vmatprep.subr.mxu0 0.0
    %1622 = vmatpush1.msra.mxu0 0.0
    %1623 = vmatprep.subr.mxu0 0.0
    %1624 = vmatpush1.msra.mxu0 0.0
    %1625 = vmatprep.subr.mxu0 0.0
    %1626 = vmatpush1.msra.mxu0 0.0
    %1627 = vmatprep.subr.mxu0 0.0
    %1628 = vmatpush1.msra.mxu0 0.0
    %1629 = vmatprep.subr.mxu0 0.0
    %1630 = vmatpush1.msra.mxu0 0.0
    %1631 = vmatprep.subr.mxu0 0.0
    %1632 = vmatpush1.msra.mxu0 0.0
    %1633 = vmatprep.subr.mxu0 0.0
    %1634 = vmatpush1.msra.mxu0 0.0
    %1635 = vmatprep.subr.mxu0 0.0
    %1636 = vmatpush1.msra.mxu0 0.0
    %1637 = vmatprep.subr.mxu0 0.0
    %1638 = vmatpush1.msra.mxu0 0.0
    %1639 = vmatprep.subr.mxu0 0.0
    %1640 = vmatpush1.msra.mxu0 0.0
    %1641 = vmatprep.subr.mxu0 0.0
    %1642 = vmatpush1.msra.mxu0 0.0
    %1643 = vmatprep.mubr.f32.mxu0 0.0
    %1644 = vmatmul.mubr.f32.gmra.mrb[0].mxu0 %v1577
    %v1645 = vpop.f32.mrb[0].mxu0
    %v1646 = vadd.f32 0.0, %v1645
    %v1647 = vpop.f32.mrb[0].mxu0
    %1648 = vdwg.mxu0
    %v1650 = vrot.slane %v1646, 6
    %v1652 = vadd.f32 %v1173, %v1650
    %v1653 = vtanh.pop %v1652
    %1654 = vst.msk [vmem:[#allocation3 + $0x3] sm:$0x4] %vm511, %v1653
    %1655 = vst.msk [vmem:[#allocation3 + $0x9] sm:$0x8] %vm513, %v1653
    %v1657 = vrot.slane %v1653, 2
    %v1658 = vsel %vm353, %v1657, 0
    %1660 = vmatprep.subr.mxu0 0.0
    %1661 = vmatpush1.msra.mxu0 %v1174
    %1662 = vmatprep.subr.mxu0 0.0
    %1663 = vmatpush1.msra.mxu0 %v1175
    %1664 = vmatprep.subr.mxu0 0.0
    %1665 = vmatpush1.msra.mxu0 %v1176
    %1666 = vmatprep.subr.mxu0 0.0
    %1667 = vmatpush1.msra.mxu0 %v1177
    %1668 = vmatprep.subr.mxu0 0.0
    %1669 = vmatpush1.msra.mxu0 0.0
    %1670 = vmatprep.subr.mxu0 0.0
    %1671 = vmatpush1.msra.mxu0 0.0
    %1672 = vmatprep.subr.mxu0 0.0
    %1673 = vmatpush1.msra.mxu0 0.0
    %1674 = vmatprep.subr.mxu0 0.0
    %1675 = vmatpush1.msra.mxu0 0.0
    %1676 = vmatprep.subr.mxu0 0.0
    %1677 = vmatpush1.msra.mxu0 0.0
    %1678 = vmatprep.subr.mxu0 0.0
    %1679 = vmatpush1.msra.mxu0 0.0
    %1680 = vmatprep.subr.mxu0 0.0
    %1681 = vmatpush1.msra.mxu0 0.0
    %1682 = vmatprep.subr.mxu0 0.0
    %1683 = vmatpush1.msra.mxu0 0.0
    %1684 = vmatprep.subr.mxu0 0.0
    %1685 = vmatpush1.msra.mxu0 0.0
    %1686 = vmatprep.subr.mxu0 0.0
    %1687 = vmatpush1.msra.mxu0 0.0
    %1688 = vmatprep.subr.mxu0 0.0
    %1689 = vmatpush1.msra.mxu0 0.0
    %1690 = vmatprep.subr.mxu0 0.0
    %1691 = vmatpush1.msra.mxu0 0.0
    %1692 = vmatprep.subr.mxu0 0.0
    %1693 = vmatpush1.msra.mxu0 0.0
    %1694 = vmatprep.subr.mxu0 0.0
    %1695 = vmatpush1.msra.mxu0 0.0
    %1696 = vmatprep.subr.mxu0 0.0
    %1697 = vmatpush1.msra.mxu0 0.0
    %1698 = vmatprep.subr.mxu0 0.0
    %1699 = vmatpush1.msra.mxu0 0.0
    %1700 = vmatprep.subr.mxu0 0.0
    %1701 = vmatpush1.msra.mxu0 0.0
    %1702 = vmatprep.subr.mxu0 0.0
    %1703 = vmatpush1.msra.mxu0 0.0
    %1704 = vmatprep.subr.mxu0 0.0
    %1705 = vmatpush1.msra.mxu0 0.0
    %1706 = vmatprep.subr.mxu0 0.0
    %1707 = vmatpush1.msra.mxu0 0.0
    %1708 = vmatprep.subr.mxu0 0.0
    %1709 = vmatpush1.msra.mxu0 0.0
    %1710 = vmatprep.subr.mxu0 0.0
    %1711 = vmatpush1.msra.mxu0 0.0
    %1712 = vmatprep.subr.mxu0 0.0
    %1713 = vmatpush1.msra.mxu0 0.0
    %1714 = vmatprep.subr.mxu0 0.0
    %1715 = vmatpush1.msra.mxu0 0.0
    %1716 = vmatprep.subr.mxu0 0.0
    %1717 = vmatpush1.msra.mxu0 0.0
    %1718 = vmatprep.subr.mxu0 0.0
    %1719 = vmatpush1.msra.mxu0 0.0
    %1720 = vmatprep.subr.mxu0 0.0
    %1721 = vmatpush1.msra.mxu0 0.0
    %1722 = vmatprep.subr.mxu0 0.0
    %1723 = vmatpush1.msra.mxu0 0.0
    %1724 = vmatprep.mubr.f32.mxu0 0.0
    %1725 = vmatmul.mubr.f32.gmra.mrb[0].mxu0 %v1658
    %v1726 = vpop.f32.mrb[0].mxu0
    %v1727 = vadd.f32 0.0, %v1726
    %v1728 = vpop.f32.mrb[0].mxu0
    %1729 = vdwg.mxu0
    %v1731 = vrot.slane %v1727, 4
    %v1733 = vadd.f32 %v1173, %v1731
    %v1734 = vtanh.pop %v1733
    %1735 = vst.msk [vmem:[#allocation3 + $0x2] sm:$0x10] %vm594, %v1734
    %1736 = vst.msk [vmem:[#allocation3 + $0x8] sm:$0x20] %vm596, %v1734
    %vm1737 = vcmask 259076
    %1738 = vst.msk [vmem:[#allocation20 - $0x4] sm:$0x30] %vm1737, %v1734
    %v1739 = vld [vmem:[#allocation16] sm:$0xff]
    %v1740 = vld [vmem:[#allocation16 + $0x8] sm:$0xff]
    %v1741 = vld [vmem:[#allocation16 + $0x10] sm:$0xff]
    %v1742 = vld [vmem:[#allocation16 + $0x18] sm:$0xff]
    %v1743 = vld [vmem:[#allocation18] sm:$0xff]
    %v1744 = vld [vmem:[#allocation18 + $0x8] sm:$0xff]
    %v1745 = vld [vmem:[#allocation18 + $0x10] sm:$0xff]
    %v1746 = vld [vmem:[#allocation18 + $0x18] sm:$0xff]
    %v1747 = vld [vmem:[%s15] sm:$0x1]
    %v1748 = vld [vmem:[#allocation3] sm:$0x7f]
    %v1749 = vld [vmem:[#allocation2] sm:$0xff]
    %v1751 = vsel %vm353, %v1748, 0
    %v1754 = vsel %vm353, %v1749, 0
    %1756 = vmatprep.subr.mxu0 0.0
    %1757 = vmatpush1.xpose.msra.mxu0 %v1754
    %1758 = vmatprep.subr.mxu0 0.0
    %1759 = vmatpush1.xpose.msra.mxu0 0.0
    %1760 = vmatprep.subr.mxu0 0.0
    %1761 = vmatpush1.xpose.msra.mxu0 0.0
    %1762 = vmatprep.subr.mxu0 0.0
    %1763 = vmatpush1.xpose.msra.mxu0 0.0
    %1764 = vmatprep.subr.mxu0 0.0
    %1765 = vmatpush1.xpose.msra.mxu0 0.0
    %1766 = vmatprep.subr.mxu0 0.0
    %1767 = vmatpush1.xpose.msra.mxu0 0.0
    %1768 = vmatprep.subr.mxu0 0.0
    %1769 = vmatpush1.xpose.msra.mxu0 0.0
    %1770 = vmatprep.subr.mxu0 0.0
    %1771 = vmatpush1.xpose.msra.mxu0 0.0
    %1772 = vmatprep.subr.mxu0 0.0
    %1773 = vmatpush1.xpose.msra.mxu0 0.0
    %1774 = vmatprep.subr.mxu0 0.0
    %1775 = vmatpush1.xpose.msra.mxu0 0.0
    %1776 = vmatprep.subr.mxu0 0.0
    %1777 = vmatpush1.xpose.msra.mxu0 0.0
    %1778 = vmatprep.subr.mxu0 0.0
    %1779 = vmatpush1.xpose.msra.mxu0 0.0
    %1780 = vmatprep.subr.mxu0 0.0
    %1781 = vmatpush1.xpose.msra.mxu0 0.0
    %1782 = vmatprep.subr.mxu0 0.0
    %1783 = vmatpush1.xpose.msra.mxu0 0.0
    %1784 = vmatprep.subr.mxu0 0.0
    %1785 = vmatpush1.xpose.msra.mxu0 0.0
    %1786 = vmatprep.subr.mxu0 0.0
    %1787 = vmatpush1.xpose.msra.mxu0 0.0
    %1788 = vmatprep.subr.mxu0 0.0
    %1789 = vmatpush1.xpose.msra.mxu0 0.0
    %1790 = vmatprep.subr.mxu0 0.0
    %1791 = vmatpush1.xpose.msra.mxu0 0.0
    %1792 = vmatprep.subr.mxu0 0.0
    %1793 = vmatpush1.xpose.msra.mxu0 0.0
    %1794 = vmatprep.subr.mxu0 0.0
    %1795 = vmatpush1.xpose.msra.mxu0 0.0
    %1796 = vmatprep.subr.mxu0 0.0
    %1797 = vmatpush1.xpose.msra.mxu0 0.0
    %1798 = vmatprep.subr.mxu0 0.0
    %1799 = vmatpush1.xpose.msra.mxu0 0.0
    %1800 = vmatprep.subr.mxu0 0.0
    %1801 = vmatpush1.xpose.msra.mxu0 0.0
    %1802 = vmatprep.subr.mxu0 0.0
    %1803 = vmatpush1.xpose.msra.mxu0 0.0
    %1804 = vmatprep.subr.mxu0 0.0
    %1805 = vmatpush1.xpose.msra.mxu0 0.0
    %1806 = vmatprep.subr.mxu0 0.0
    %1807 = vmatpush1.xpose.msra.mxu0 0.0
    %1808 = vmatprep.subr.mxu0 0.0
    %1809 = vmatpush1.xpose.msra.mxu0 0.0
    %1810 = vmatprep.subr.mxu0 0.0
    %1811 = vmatpush1.xpose.msra.mxu0 0.0
    %1812 = vmatprep.subr.mxu0 0.0
    %1813 = vmatpush1.xpose.msra.mxu0 0.0
    %1814 = vmatprep.subr.mxu0 0.0
    %1815 = vmatpush1.xpose.msra.mxu0 0.0
    %1816 = vmatprep.subr.mxu0 0.0
    %1817 = vmatpush1.xpose.msra.mxu0 0.0
    %1818 = vmatprep.subr.mxu0 0.0
    %1819 = vmatpush1.xpose.msra.mxu0 0.0
    %1820 = vmatprep.mubr.f32.mxu0 0.0
    %1821 = vmatmul.mubr.f32.gmra.mrb[0].mxu0 %v1751
    %v1822 = vpop.f32.mrb[0].mxu0
    %v1823 = vadd.f32 0.0, %v1822
    %v1824 = vpop.f32.mrb[0].mxu0
    %1825 = vdwg.mxu0
    %vm1826 = vcmask 63488
    %v1827 = vsel %vm1826, %v1823, -inf
    %1828 = vmax.xlane.f32.xlu0 %v1827
    %v1829 = vpop.xlane.xlu0 %1828
    %v1830 = vsub.f32 %v1823, %v1829
    %v1831 = vmul.f32 %v1830, 1.442695
    %v1832 = vpow.pop %v1831
    %v1833 = vsel %vm1826, %v1832, 0.0
    %1834 = vadd.xlane.f32.xlu0 %v1833
    %v1835 = vpop.xlane.xlu0 %1834
    %v1836 = vrcp.pop %v1835
    %v1837 = vmul.f32 %v1832, %v1836
    %vm1838 = vcmask 64512
    %v1840 = vsel %vm1838, %v1837, 0
    %1842 = vmatprep.subr.mxu0 0.0
    %1843 = vmatpush1.msra.mxu0 %v1749
    %1844 = vmatprep.subr.mxu0 0.0
    %1845 = vmatpush1.msra.mxu0 0.0
    %1846 = vmatprep.subr.mxu0 0.0
    %1847 = vmatpush1.msra.mxu0 0.0
    %1848 = vmatprep.subr.mxu0 0.0
    %1849 = vmatpush1.msra.mxu0 0.0
    %1850 = vmatprep.subr.mxu0 0.0
    %1851 = vmatpush1.msra.mxu0 0.0
    %1852 = vmatprep.subr.mxu0 0.0
    %1853 = vmatpush1.msra.mxu0 0.0
    %1854 = vmatprep.subr.mxu0 0.0
    %1855 = vmatpush1.msra.mxu0 0.0
    %1856 = vmatprep.subr.mxu0 0.0
    %1857 = vmatpush1.msra.mxu0 0.0
    %1858 = vmatprep.subr.mxu0 0.0
    %1859 = vmatpush1.msra.mxu0 0.0
    %1860 = vmatprep.subr.mxu0 0.0
    %1861 = vmatpush1.msra.mxu0 0.0
    %1862 = vmatprep.subr.mxu0 0.0
    %1863 = vmatpush1.msra.mxu0 0.0
    %1864 = vmatprep.subr.mxu0 0.0
    %1865 = vmatpush1.msra.mxu0 0.0
    %1866 = vmatprep.subr.mxu0 0.0
    %1867 = vmatpush1.msra.mxu0 0.0
    %1868 = vmatprep.subr.mxu0 0.0
    %1869 = vmatpush1.msra.mxu0 0.0
    %1870 = vmatprep.subr.mxu0 0.0
    %1871 = vmatpush1.msra.mxu0 0.0
    %1872 = vmatprep.subr.mxu0 0.0
    %1873 = vmatpush1.msra.mxu0 0.0
    %1874 = vmatprep.subr.mxu0 0.0
    %1875 = vmatpush1.msra.mxu0 0.0
    %1876 = vmatprep.subr.mxu0 0.0
    %1877 = vmatpush1.msra.mxu0 0.0
    %1878 = vmatprep.subr.mxu0 0.0
    %1879 = vmatpush1.msra.mxu0 0.0
    %1880 = vmatprep.subr.mxu0 0.0
    %1881 = vmatpush1.msra.mxu0 0.0
    %1882 = vmatprep.subr.mxu0 0.0
    %1883 = vmatpush1.msra.mxu0 0.0
    %1884 = vmatprep.subr.mxu0 0.0
    %1885 = vmatpush1.msra.mxu0 0.0
    %1886 = vmatprep.subr.mxu0 0.0
    %1887 = vmatpush1.msra.mxu0 0.0
    %1888 = vmatprep.subr.mxu0 0.0
    %1889 = vmatpush1.msra.mxu0 0.0
    %1890 = vmatprep.subr.mxu0 0.0
    %1891 = vmatpush1.msra.mxu0 0.0
    %1892 = vmatprep.subr.mxu0 0.0
    %1893 = vmatpush1.msra.mxu0 0.0
    %1894 = vmatprep.subr.mxu0 0.0
    %1895 = vmatpush1.msra.mxu0 0.0
    %1896 = vmatprep.subr.mxu0 0.0
    %1897 = vmatpush1.msra.mxu0 0.0
    %1898 = vmatprep.subr.mxu0 0.0
    %1899 = vmatpush1.msra.mxu0 0.0
    %1900 = vmatprep.subr.mxu0 0.0
    %1901 = vmatpush1.msra.mxu0 0.0
    %1902 = vmatprep.subr.mxu0 0.0
    %1903 = vmatpush1.msra.mxu0 0.0
    %1904 = vmatprep.subr.mxu0 0.0
    %1905 = vmatpush1.msra.mxu0 0.0
    %1906 = vmatprep.mubr.f32.mxu0 0.0
    %1907 = vmatmul.mubr.f32.gmra.mrb[0].mxu0 %v1840
    %v1908 = vpop.f32.mrb[0].mxu0
    %v1909 = vadd.f32 0.0, %v1908
    %v1910 = vpop.f32.mrb[0].mxu0
    %1911 = vdwg.mxu0
    %1912 = vmatprep.subr.mxu0 0.0
    %1913 = vmatpush1.msra.mxu0 %v1743
    %1914 = vmatprep.subr.mxu0 0.0
    %1915 = vmatpush1.msra.mxu0 %v1744
    %1916 = vmatprep.subr.mxu0 0.0
    %1917 = vmatpush1.msra.mxu0 %v1745
    %1918 = vmatprep.subr.mxu0 0.0
    %1919 = vmatpush1.msra.mxu0 %v1746
    %1920 = vmatprep.subr.mxu0 0.0
    %1921 = vmatpush1.msra.mxu0 0.0
    %1922 = vmatprep.subr.mxu0 0.0
    %1923 = vmatpush1.msra.mxu0 0.0
    %1924 = vmatprep.subr.mxu0 0.0
    %1925 = vmatpush1.msra.mxu0 0.0
    %1926 = vmatprep.subr.mxu0 0.0
    %1927 = vmatpush1.msra.mxu0 0.0
    %1928 = vmatprep.subr.mxu0 0.0
    %1929 = vmatpush1.msra.mxu0 0.0
    %1930 = vmatprep.subr.mxu0 0.0
    %1931 = vmatpush1.msra.mxu0 0.0
    %1932 = vmatprep.subr.mxu0 0.0
    %1933 = vmatpush1.msra.mxu0 0.0
    %1934 = vmatprep.subr.mxu0 0.0
    %1935 = vmatpush1.msra.mxu0 0.0
    %1936 = vmatprep.subr.mxu0 0.0
    %1937 = vmatpush1.msra.mxu0 0.0
    %1938 = vmatprep.subr.mxu0 0.0
    %1939 = vmatpush1.msra.mxu0 0.0
    %1940 = vmatprep.subr.mxu0 0.0
    %1941 = vmatpush1.msra.mxu0 0.0
    %1942 = vmatprep.subr.mxu0 0.0
    %1943 = vmatpush1.msra.mxu0 0.0
    %1944 = vmatprep.subr.mxu0 0.0
    %1945 = vmatpush1.msra.mxu0 0.0
    %1946 = vmatprep.subr.mxu0 0.0
    %1947 = vmatpush1.msra.mxu0 0.0
    %1948 = vmatprep.subr.mxu0 0.0
    %1949 = vmatpush1.msra.mxu0 0.0
    %1950 = vmatprep.subr.mxu0 0.0
    %1951 = vmatpush1.msra.mxu0 0.0
    %1952 = vmatprep.subr.mxu0 0.0
    %1953 = vmatpush1.msra.mxu0 0.0
    %1954 = vmatprep.subr.mxu0 0.0
    %1955 = vmatpush1.msra.mxu0 0.0
    %1956 = vmatprep.subr.mxu0 0.0
    %1957 = vmatpush1.msra.mxu0 0.0
    %1958 = vmatprep.subr.mxu0 0.0
    %1959 = vmatpush1.msra.mxu0 0.0
    %1960 = vmatprep.subr.mxu0 0.0
    %1961 = vmatpush1.msra.mxu0 0.0
    %1962 = vmatprep.subr.mxu0 0.0
    %1963 = vmatpush1.msra.mxu0 0.0
    %1964 = vmatprep.subr.mxu0 0.0
    %1965 = vmatpush1.msra.mxu0 0.0
    %1966 = vmatprep.subr.mxu0 0.0
    %1967 = vmatpush1.msra.mxu0 0.0
    %1968 = vmatprep.subr.mxu0 0.0
    %1969 = vmatpush1.msra.mxu0 0.0
    %1970 = vmatprep.subr.mxu0 0.0
    %1971 = vmatpush1.msra.mxu0 0.0
    %1972 = vmatprep.subr.mxu0 0.0
    %1973 = vmatpush1.msra.mxu0 0.0
    %1974 = vmatprep.subr.mxu0 0.0
    %1975 = vmatpush1.msra.mxu0 0.0
    %1976 = vmatprep.mubr.f32.mxu0 0.0
    %1977 = vmatmul.mubr.f32.gmra.mrb[0].mxu0 %v1751
    %v1978 = vpop.f32.mrb[0].mxu0
    %v1979 = vadd.f32 0.0, %v1978
    %v1980 = vpop.f32.mrb[0].mxu0
    %1981 = vdwg.mxu0
    %v1983 = vsel %vm353, %v1909, 0
    %1985 = vmatprep.subr.mxu0 0.0
    %1986 = vmatpush1.msra.mxu0 %v1739
    %1987 = vmatprep.subr.mxu0 0.0
    %1988 = vmatpush1.msra.mxu0 %v1740
    %1989 = vmatprep.subr.mxu0 0.0
    %1990 = vmatpush1.msra.mxu0 %v1741
    %1991 = vmatprep.subr.mxu0 0.0
    %1992 = vmatpush1.msra.mxu0 %v1742
    %1993 = vmatprep.subr.mxu0 0.0
    %1994 = vmatpush1.msra.mxu0 0.0
    %1995 = vmatprep.subr.mxu0 0.0
    %1996 = vmatpush1.msra.mxu0 0.0
    %1997 = vmatprep.subr.mxu0 0.0
    %1998 = vmatpush1.msra.mxu0 0.0
    %1999 = vmatprep.subr.mxu0 0.0
    %2000 = vmatpush1.msra.mxu0 0.0
    %2001 = vmatprep.subr.mxu0 0.0
    %2002 = vmatpush1.msra.mxu0 0.0
    %2003 = vmatprep.subr.mxu0 0.0
    %2004 = vmatpush1.msra.mxu0 0.0
    %2005 = vmatprep.subr.mxu0 0.0
    %2006 = vmatpush1.msra.mxu0 0.0
    %2007 = vmatprep.subr.mxu0 0.0
    %2008 = vmatpush1.msra.mxu0 0.0
    %2009 = vmatprep.subr.mxu0 0.0
    %2010 = vmatpush1.msra.mxu0 0.0
    %2011 = vmatprep.subr.mxu0 0.0
    %2012 = vmatpush1.msra.mxu0 0.0
    %2013 = vmatprep.subr.mxu0 0.0
    %2014 = vmatpush1.msra.mxu0 0.0
    %2015 = vmatprep.subr.mxu0 0.0
    %2016 = vmatpush1.msra.mxu0 0.0
    %2017 = vmatprep.subr.mxu0 0.0
    %2018 = vmatpush1.msra.mxu0 0.0
    %2019 = vmatprep.subr.mxu0 0.0
    %2020 = vmatpush1.msra.mxu0 0.0
    %2021 = vmatprep.subr.mxu0 0.0
    %2022 = vmatpush1.msra.mxu0 0.0
    %2023 = vmatprep.subr.mxu0 0.0
    %2024 = vmatpush1.msra.mxu0 0.0
    %2025 = vmatprep.subr.mxu0 0.0
    %2026 = vmatpush1.msra.mxu0 0.0
    %2027 = vmatprep.subr.mxu0 0.0
    %2028 = vmatpush1.msra.mxu0 0.0
    %2029 = vmatprep.subr.mxu0 0.0
    %2030 = vmatpush1.msra.mxu0 0.0
    %2031 = vmatprep.subr.mxu0 0.0
    %2032 = vmatpush1.msra.mxu0 0.0
    %2033 = vmatprep.subr.mxu0 0.0
    %2034 = vmatpush1.msra.mxu0 0.0
    %2035 = vmatprep.subr.mxu0 0.0
    %2036 = vmatpush1.msra.mxu0 0.0
    %2037 = vmatprep.subr.mxu0 0.0
    %2038 = vmatpush1.msra.mxu0 0.0
    %2039 = vmatprep.subr.mxu0 0.0
    %2040 = vmatpush1.msra.mxu0 0.0
    %2041 = vmatprep.subr.mxu0 0.0
    %2042 = vmatpush1.msra.mxu0 0.0
    %2043 = vmatprep.subr.mxu0 0.0
    %2044 = vmatpush1.msra.mxu0 0.0
    %2045 = vmatprep.subr.mxu0 0.0
    %2046 = vmatpush1.msra.mxu0 0.0
    %2047 = vmatprep.subr.mxu0 0.0
    %2048 = vmatpush1.msra.mxu0 0.0
    %2049 = vmatprep.mubr.f32.mxu0 0.0
    %2050 = vmatmul.mubr.f32.gmra.mrb[0].mxu0 %v1983
    %v2051 = vpop.f32.mrb[0].mxu0
    %v2052 = vadd.f32 %v1979, %v2051
    %v2053 = vpop.f32.mrb[0].mxu0
    %2054 = vdwg.mxu0
    %v2056 = vlaneseq
    %v2057 = vshrl.u32 %v2056, 7
    %v2058 = vsub.s32 0, %v2057
    %v2059 = vrot.slane %v1747, %v2058
    %v2061 = vadd.f32 %v2052, %v2059
    %v2062 = vtanh.pop %v2061
    %2063 = vst.msk [vmem:[%s17] sm:$0x7f] %vm1826, %v1837
    %vm2064 = vcmask 260096
    %2065 = vst.msk [vmem:[#allocation19] sm:$0x7f] %vm2064, %v2062
    %v2066 = vld [vmem:[#allocation3 + $0x7] sm:$0x7f]
    %v2067 = vld [vmem:[#allocation2 + $0x8] sm:$0xff]
    %v2069 = vsel %vm353, %v2066, 0
    %v2072 = vsel %vm353, %v2067, 0
    %2074 = vmatprep.subr.mxu0 0.0
    %2075 = vmatpush1.xpose.msra.mxu0 %v2072
    %2076 = vmatprep.subr.mxu0 0.0
    %2077 = vmatpush1.xpose.msra.mxu0 0.0
    %2078 = vmatprep.subr.mxu0 0.0
    %2079 = vmatpush1.xpose.msra.mxu0 0.0
    %2080 = vmatprep.subr.mxu0 0.0
    %2081 = vmatpush1.xpose.msra.mxu0 0.0
    %2082 = vmatprep.subr.mxu0 0.0
    %2083 = vmatpush1.xpose.msra.mxu0 0.0
    %2084 = vmatprep.subr.mxu0 0.0
    %2085 = vmatpush1.xpose.msra.mxu0 0.0
    %2086 = vmatprep.subr.mxu0 0.0
    %2087 = vmatpush1.xpose.msra.mxu0 0.0
    %2088 = vmatprep.subr.mxu0 0.0
    %2089 = vmatpush1.xpose.msra.mxu0 0.0
    %2090 = vmatprep.subr.mxu0 0.0
    %2091 = vmatpush1.xpose.msra.mxu0 0.0
    %2092 = vmatprep.subr.mxu0 0.0
    %2093 = vmatpush1.xpose.msra.mxu0 0.0
    %2094 = vmatprep.subr.mxu0 0.0
    %2095 = vmatpush1.xpose.msra.mxu0 0.0
    %2096 = vmatprep.subr.mxu0 0.0
    %2097 = vmatpush1.xpose.msra.mxu0 0.0
    %2098 = vmatprep.subr.mxu0 0.0
    %2099 = vmatpush1.xpose.msra.mxu0 0.0
    %2100 = vmatprep.subr.mxu0 0.0
    %2101 = vmatpush1.xpose.msra.mxu0 0.0
    %2102 = vmatprep.subr.mxu0 0.0
    %2103 = vmatpush1.xpose.msra.mxu0 0.0
    %2104 = vmatprep.subr.mxu0 0.0
    %2105 = vmatpush1.xpose.msra.mxu0 0.0
    %2106 = vmatprep.subr.mxu0 0.0
    %2107 = vmatpush1.xpose.msra.mxu0 0.0
    %2108 = vmatprep.subr.mxu0 0.0
    %2109 = vmatpush1.xpose.msra.mxu0 0.0
    %2110 = vmatprep.subr.mxu0 0.0
    %2111 = vmatpush1.xpose.msra.mxu0 0.0
    %2112 = vmatprep.subr.mxu0 0.0
    %2113 = vmatpush1.xpose.msra.mxu0 0.0
    %2114 = vmatprep.subr.mxu0 0.0
    %2115 = vmatpush1.xpose.msra.mxu0 0.0
    %2116 = vmatprep.subr.mxu0 0.0
    %2117 = vmatpush1.xpose.msra.mxu0 0.0
    %2118 = vmatprep.subr.mxu0 0.0
    %2119 = vmatpush1.xpose.msra.mxu0 0.0
    %2120 = vmatprep.subr.mxu0 0.0
    %2121 = vmatpush1.xpose.msra.mxu0 0.0
    %2122 = vmatprep.subr.mxu0 0.0
    %2123 = vmatpush1.xpose.msra.mxu0 0.0
    %2124 = vmatprep.subr.mxu0 0.0
    %2125 = vmatpush1.xpose.msra.mxu0 0.0
    %2126 = vmatprep.subr.mxu0 0.0
    %2127 = vmatpush1.xpose.msra.mxu0 0.0
    %2128 = vmatprep.subr.mxu0 0.0
    %2129 = vmatpush1.xpose.msra.mxu0 0.0
    %2130 = vmatprep.subr.mxu0 0.0
    %2131 = vmatpush1.xpose.msra.mxu0 0.0
    %2132 = vmatprep.subr.mxu0 0.0
    %2133 = vmatpush1.xpose.msra.mxu0 0.0
    %2134 = vmatprep.subr.mxu0 0.0
    %2135 = vmatpush1.xpose.msra.mxu0 0.0
    %2136 = vmatprep.subr.mxu0 0.0
    %2137 = vmatpush1.xpose.msra.mxu0 0.0
    %2138 = vmatprep.mubr.f32.mxu0 0.0
    %2139 = vmatmul.mubr.f32.gmra.mrb[0].mxu0 %v2069
    %v2140 = vpop.f32.mrb[0].mxu0
    %v2141 = vadd.f32 0.0, %v2140
    %v2142 = vpop.f32.mrb[0].mxu0
    %2143 = vdwg.mxu0
    %v2144 = vsel %vm1826, %v2141, -inf
    %2145 = vmax.xlane.f32.xlu0 %v2144
    %v2146 = vpop.xlane.xlu0 %2145
    %v2147 = vsub.f32 %v2141, %v2146
    %v2148 = vmul.f32 %v2147, 1.442695
    %v2149 = vpow.pop %v2148
    %v2150 = vsel %vm1826, %v2149, 0.0
    %2151 = vadd.xlane.f32.xlu0 %v2150
    %v2152 = vpop.xlane.xlu0 %2151
    %v2153 = vrcp.pop %v2152
    %v2154 = vmul.f32 %v2149, %v2153
    %v2156 = vsel %vm1838, %v2154, 0
    %2158 = vmatprep.subr.mxu0 0.0
    %2159 = vmatpush1.msra.mxu0 %v2067
    %2160 = vmatprep.subr.mxu0 0.0
    %2161 = vmatpush1.msra.mxu0 0.0
    %2162 = vmatprep.subr.mxu0 0.0
    %2163 = vmatpush1.msra.mxu0 0.0
    %2164 = vmatprep.subr.mxu0 0.0
    %2165 = vmatpush1.msra.mxu0 0.0
    %2166 = vmatprep.subr.mxu0 0.0
    %2167 = vmatpush1.msra.mxu0 0.0
    %2168 = vmatprep.subr.mxu0 0.0
    %2169 = vmatpush1.msra.mxu0 0.0
    %2170 = vmatprep.subr.mxu0 0.0
    %2171 = vmatpush1.msra.mxu0 0.0
    %2172 = vmatprep.subr.mxu0 0.0
    %2173 = vmatpush1.msra.mxu0 0.0
    %2174 = vmatprep.subr.mxu0 0.0
    %2175 = vmatpush1.msra.mxu0 0.0
    %2176 = vmatprep.subr.mxu0 0.0
    %2177 = vmatpush1.msra.mxu0 0.0
    %2178 = vmatprep.subr.mxu0 0.0
    %2179 = vmatpush1.msra.mxu0 0.0
    %2180 = vmatprep.subr.mxu0 0.0
    %2181 = vmatpush1.msra.mxu0 0.0
    %2182 = vmatprep.subr.mxu0 0.0
    %2183 = vmatpush1.msra.mxu0 0.0
    %2184 = vmatprep.subr.mxu0 0.0
    %2185 = vmatpush1.msra.mxu0 0.0
    %2186 = vmatprep.subr.mxu0 0.0
    %2187 = vmatpush1.msra.mxu0 0.0
    %2188 = vmatprep.subr.mxu0 0.0
    %2189 = vmatpush1.msra.mxu0 0.0
    %2190 = vmatprep.subr.mxu0 0.0
    %2191 = vmatpush1.msra.mxu0 0.0
    %2192 = vmatprep.subr.mxu0 0.0
    %2193 = vmatpush1.msra.mxu0 0.0
    %2194 = vmatprep.subr.mxu0 0.0
    %2195 = vmatpush1.msra.mxu0 0.0
    %2196 = vmatprep.subr.mxu0 0.0
    %2197 = vmatpush1.msra.mxu0 0.0
    %2198 = vmatprep.subr.mxu0 0.0
    %2199 = vmatpush1.msra.mxu0 0.0
    %2200 = vmatprep.subr.mxu0 0.0
    %2201 = vmatpush1.msra.mxu0 0.0
    %2202 = vmatprep.subr.mxu0 0.0
    %2203 = vmatpush1.msra.mxu0 0.0
    %2204 = vmatprep.subr.mxu0 0.0
    %2205 = vmatpush1.msra.mxu0 0.0
    %2206 = vmatprep.subr.mxu0 0.0
    %2207 = vmatpush1.msra.mxu0 0.0
    %2208 = vmatprep.subr.mxu0 0.0
    %2209 = vmatpush1.msra.mxu0 0.0
    %2210 = vmatprep.subr.mxu0 0.0
    %2211 = vmatpush1.msra.mxu0 0.0
    %2212 = vmatprep.subr.mxu0 0.0
    %2213 = vmatpush1.msra.mxu0 0.0
    %2214 = vmatprep.subr.mxu0 0.0
    %2215 = vmatpush1.msra.mxu0 0.0
    %2216 = vmatprep.subr.mxu0 0.0
    %2217 = vmatpush1.msra.mxu0 0.0
    %2218 = vmatprep.subr.mxu0 0.0
    %2219 = vmatpush1.msra.mxu0 0.0
    %2220 = vmatprep.subr.mxu0 0.0
    %2221 = vmatpush1.msra.mxu0 0.0
    %2222 = vmatprep.mubr.f32.mxu0 0.0
    %2223 = vmatmul.mubr.f32.gmra.mrb[0].mxu0 %v2156
    %v2224 = vpop.f32.mrb[0].mxu0
    %v2225 = vadd.f32 0.0, %v2224
    %v2226 = vpop.f32.mrb[0].mxu0
    %2227 = vdwg.mxu0
    %2228 = vmatprep.subr.mxu0 0.0
    %2229 = vmatpush1.msra.mxu0 %v1743
    %2230 = vmatprep.subr.mxu0 0.0
    %2231 = vmatpush1.msra.mxu0 %v1744
    %2232 = vmatprep.subr.mxu0 0.0
    %2233 = vmatpush1.msra.mxu0 %v1745
    %2234 = vmatprep.subr.mxu0 0.0
    %2235 = vmatpush1.msra.mxu0 %v1746
    %2236 = vmatprep.subr.mxu0 0.0
    %2237 = vmatpush1.msra.mxu0 0.0
    %2238 = vmatprep.subr.mxu0 0.0
    %2239 = vmatpush1.msra.mxu0 0.0
    %2240 = vmatprep.subr.mxu0 0.0
    %2241 = vmatpush1.msra.mxu0 0.0
    %2242 = vmatprep.subr.mxu0 0.0
    %2243 = vmatpush1.msra.mxu0 0.0
    %2244 = vmatprep.subr.mxu0 0.0
    %2245 = vmatpush1.msra.mxu0 0.0
    %2246 = vmatprep.subr.mxu0 0.0
    %2247 = vmatpush1.msra.mxu0 0.0
    %2248 = vmatprep.subr.mxu0 0.0
    %2249 = vmatpush1.msra.mxu0 0.0
    %2250 = vmatprep.subr.mxu0 0.0
    %2251 = vmatpush1.msra.mxu0 0.0
    %2252 = vmatprep.subr.mxu0 0.0
    %2253 = vmatpush1.msra.mxu0 0.0
    %2254 = vmatprep.subr.mxu0 0.0
    %2255 = vmatpush1.msra.mxu0 0.0
    %2256 = vmatprep.subr.mxu0 0.0
    %2257 = vmatpush1.msra.mxu0 0.0
    %2258 = vmatprep.subr.mxu0 0.0
    %2259 = vmatpush1.msra.mxu0 0.0
    %2260 = vmatprep.subr.mxu0 0.0
    %2261 = vmatpush1.msra.mxu0 0.0
    %2262 = vmatprep.subr.mxu0 0.0
    %2263 = vmatpush1.msra.mxu0 0.0
    %2264 = vmatprep.subr.mxu0 0.0
    %2265 = vmatpush1.msra.mxu0 0.0
    %2266 = vmatprep.subr.mxu0 0.0
    %2267 = vmatpush1.msra.mxu0 0.0
    %2268 = vmatprep.subr.mxu0 0.0
    %2269 = vmatpush1.msra.mxu0 0.0
    %2270 = vmatprep.subr.mxu0 0.0
    %2271 = vmatpush1.msra.mxu0 0.0
    %2272 = vmatprep.subr.mxu0 0.0
    %2273 = vmatpush1.msra.mxu0 0.0
    %2274 = vmatprep.subr.mxu0 0.0
    %2275 = vmatpush1.msra.mxu0 0.0
    %2276 = vmatprep.subr.mxu0 0.0
    %2277 = vmatpush1.msra.mxu0 0.0
    %2278 = vmatprep.subr.mxu0 0.0
    %2279 = vmatpush1.msra.mxu0 0.0
    %2280 = vmatprep.subr.mxu0 0.0
    %2281 = vmatpush1.msra.mxu0 0.0
    %2282 = vmatprep.subr.mxu0 0.0
    %2283 = vmatpush1.msra.mxu0 0.0
    %2284 = vmatprep.subr.mxu0 0.0
    %2285 = vmatpush1.msra.mxu0 0.0
    %2286 = vmatprep.subr.mxu0 0.0
    %2287 = vmatpush1.msra.mxu0 0.0
    %2288 = vmatprep.subr.mxu0 0.0
    %2289 = vmatpush1.msra.mxu0 0.0
    %2290 = vmatprep.subr.mxu0 0.0
    %2291 = vmatpush1.msra.mxu0 0.0
    %2292 = vmatprep.mubr.f32.mxu0 0.0
    %2293 = vmatmul.mubr.f32.gmra.mrb[0].mxu0 %v2069
    %v2294 = vpop.f32.mrb[0].mxu0
    %v2295 = vadd.f32 0.0, %v2294
    %v2296 = vpop.f32.mrb[0].mxu0
    %2297 = vdwg.mxu0
    %v2299 = vsel %vm353, %v2225, 0
    %2301 = vmatprep.subr.mxu0 0.0
    %2302 = vmatpush1.msra.mxu0 %v1739
    %2303 = vmatprep.subr.mxu0 0.0
    %2304 = vmatpush1.msra.mxu0 %v1740
    %2305 = vmatprep.subr.mxu0 0.0
    %2306 = vmatpush1.msra.mxu0 %v1741
    %2307 = vmatprep.subr.mxu0 0.0
    %2308 = vmatpush1.msra.mxu0 %v1742
    %2309 = vmatprep.subr.mxu0 0.0
    %2310 = vmatpush1.msra.mxu0 0.0
    %2311 = vmatprep.subr.mxu0 0.0
    %2312 = vmatpush1.msra.mxu0 0.0
    %2313 = vmatprep.subr.mxu0 0.0
    %2314 = vmatpush1.msra.mxu0 0.0
    %2315 = vmatprep.subr.mxu0 0.0
    %2316 = vmatpush1.msra.mxu0 0.0
    %2317 = vmatprep.subr.mxu0 0.0
    %2318 = vmatpush1.msra.mxu0 0.0
    %2319 = vmatprep.subr.mxu0 0.0
    %2320 = vmatpush1.msra.mxu0 0.0
    %2321 = vmatprep.subr.mxu0 0.0
    %2322 = vmatpush1.msra.mxu0 0.0
    %2323 = vmatprep.subr.mxu0 0.0
    %2324 = vmatpush1.msra.mxu0 0.0
    %2325 = vmatprep.subr.mxu0 0.0
    %2326 = vmatpush1.msra.mxu0 0.0
    %2327 = vmatprep.subr.mxu0 0.0
    %2328 = vmatpush1.msra.mxu0 0.0
    %2329 = vmatprep.subr.mxu0 0.0
    %2330 = vmatpush1.msra.mxu0 0.0
    %2331 = vmatprep.subr.mxu0 0.0
    %2332 = vmatpush1.msra.mxu0 0.0
    %2333 = vmatprep.subr.mxu0 0.0
    %2334 = vmatpush1.msra.mxu0 0.0
    %2335 = vmatprep.subr.mxu0 0.0
    %2336 = vmatpush1.msra.mxu0 0.0
    %2337 = vmatprep.subr.mxu0 0.0
    %2338 = vmatpush1.msra.mxu0 0.0
    %2339 = vmatprep.subr.mxu0 0.0
    %2340 = vmatpush1.msra.mxu0 0.0
    %2341 = vmatprep.subr.mxu0 0.0
    %2342 = vmatpush1.msra.mxu0 0.0
    %2343 = vmatprep.subr.mxu0 0.0
    %2344 = vmatpush1.msra.mxu0 0.0
    %2345 = vmatprep.subr.mxu0 0.0
    %2346 = vmatpush1.msra.mxu0 0.0
    %2347 = vmatprep.subr.mxu0 0.0
    %2348 = vmatpush1.msra.mxu0 0.0
    %2349 = vmatprep.subr.mxu0 0.0
    %2350 = vmatpush1.msra.mxu0 0.0
    %2351 = vmatprep.subr.mxu0 0.0
    %2352 = vmatpush1.msra.mxu0 0.0
    %2353 = vmatprep.subr.mxu0 0.0
    %2354 = vmatpush1.msra.mxu0 0.0
    %2355 = vmatprep.subr.mxu0 0.0
    %2356 = vmatpush1.msra.mxu0 0.0
    %2357 = vmatprep.subr.mxu0 0.0
    %2358 = vmatpush1.msra.mxu0 0.0
    %2359 = vmatprep.subr.mxu0 0.0
    %2360 = vmatpush1.msra.mxu0 0.0
    %2361 = vmatprep.subr.mxu0 0.0
    %2362 = vmatpush1.msra.mxu0 0.0
    %2363 = vmatprep.subr.mxu0 0.0
    %2364 = vmatpush1.msra.mxu0 0.0
    %2365 = vmatprep.mubr.f32.mxu0 0.0
    %2366 = vmatmul.mubr.f32.gmra.mrb[0].mxu0 %v2299
    %v2367 = vpop.f32.mrb[0].mxu0
    %v2368 = vadd.f32 %v2295, %v2367
    %v2369 = vpop.f32.mrb[0].mxu0
    %2370 = vdwg.mxu0
    %v2371 = vadd.f32 %v2368, %v2059
    %v2372 = vtanh.pop %v2371
    %2373 = vst.msk [vmem:[%s17 + $0x7] sm:$0x7f] %vm1826, %v2154
    %2374 = vst.msk [vmem:[#allocation19 + $0x7] sm:$0x7f] %vm2064, %v2372
    // Predicated region
    $region102: #{tpu_custom_call.1} parent=1 // pred_check
      _
    $region103: #{tpu_custom_call.1} parent=1 // pred_check_branch
      %2376 = sbr.rel (0) target = $region105
    $region104: #{tpu_custom_call.1} parent=1 // pred_region
      %s2378 = ssub.s32 256, 256
      %2379 = vsyncadd [#allocation6], %s2378
      %s2380 = sshll.u32 [#allocation19], 4
      %s2381 = int_to_ptr.vmem [resolvable:$true] %s2380
      %2386 = dma.vmem_to_hbm [thread:$0]  %s2381, 256, %s16, [#allocation6], 128, 128, 8
    $region105: #{tpu_custom_call.1} parent=1 // pred_fallthru
      _
    // Predicated region
    $region106: #{tpu_custom_call.1} parent=1 // pred_check
      _
    $region107: #{tpu_custom_call.1} parent=1 // pred_check_branch
      %2388 = sbr.rel (0) target = $region109
    $region108: #{tpu_custom_call.1} parent=1 // pred_region
      _
    $region109: #{tpu_custom_call.1} parent=1 // pred_fallthru
      _
    // Predicated region
    $region110: #{tpu_custom_call.1} parent=1 // pred_check
      _
    $region111: #{tpu_custom_call.1} parent=1 // pred_check_branch
      %2390 = sbr.rel (0) target = $region113
    $region112: #{tpu_custom_call.1} parent=1 // pred_region
      %s2392 = ssub.s32 32, 32
      %2393 = vsyncadd [#allocation21], %s2392
      %s2395 = sshll.u32 [#allocation20], 4
      %s2396 = int_to_ptr.vmem [resolvable:$true] %s2395
      %2398 = dma.vmem_to_hbm [thread:$0]  %s2396, 32, %s18, [#allocation21]
    $region113: #{tpu_custom_call.1} parent=1 // pred_fallthru
      _
    // Predicated region
    $region114: #{tpu_custom_call.1} parent=1 // pred_check
      _
    $region115: #{tpu_custom_call.1} parent=1 // pred_check_branch
      %2400 = sbr.rel (0) target = $region117
    $region116: #{tpu_custom_call.1} parent=1 // pred_region
      %2401 = dma.done [#allocation6], 256
    $region117: #{tpu_custom_call.1} parent=1 // pred_fallthru
      _
    // Predicated region
    $region118: #{tpu_custom_call.1} parent=1 // pred_check
      _
    $region119: #{tpu_custom_call.1} parent=1 // pred_check_branch
      %2403 = sbr.rel (0) target = $region121
    $region120: #{tpu_custom_call.1} parent=1 // pred_region
      _
    $region121: #{tpu_custom_call.1} parent=1 // pred_fallthru
      _
    // Predicated region
    $region122: #{tpu_custom_call.1} parent=1 // pred_check
      _
    $region123: #{tpu_custom_call.1} parent=1 // pred_check_branch
      %2405 = sbr.rel (0) target = $region125
    $region124: #{tpu_custom_call.1} parent=1 // pred_region
      %2406 = dma.done [#allocation21], 32
    $region125: #{tpu_custom_call.1} parent=1 // pred_fallthru
      _
    %2407 = vsyncpa [#allocation5], 1
    %2408 = vsyncpa [#allocation8], 1
    %2409 = vsyncpa [#allocation11], 1
    %2410 = vsyncpa [#allocation14], 1
    %2411 = vsyncpa [#allocation17], 1
    %2412 = vsyncpa [#allocation6], 1
    %2413 = vsyncpa [#allocation21], 1

</llo_original>
